<compile_context>
chip_gen: v7x
topology: tpu7x:2x2x1
jax: 0.10.0
libtpu: 0.0.40
codegen_flags: <defaults>
</compile_context>

<pallas_src>
import functools

import jax
import jax.numpy as jnp
from jax import lax
from jax.experimental import pallas as pl
from jax.experimental.pallas import tpu as pltpu

# ----------------------------- configuration --------------------------------
VOCAB = 50            # token vocabulary size
VOCAB_PAD = 64        # embedding table padded rows (for the one-hot matmul)
T_TEXT = 8            # number of text tokens (1, T_text)
HID = 32              # text-encoder hidden size
INTER_C = 16          # VITS inter_channels (flow / prior channels)
HALF_C = INTER_C // 2
FLOW_H = 16           # flow coupling hidden size
T_FEAT = 128          # static max number of acoustic frames (padded to 128)
UP_FACTORS = (2, 2)   # decoder upsampling (hard-coded x2 stages below)
DEC_CH = (32, 16, 8)  # decoder channel schedule
KPRE, KUP, KPOST = 7, 5, 7
T_WAV = T_FEAT * UP_FACTORS[0] * UP_FACTORS[1]

SLAB_LANES = 256      # widest packed weight is dup1_w: (16, 5*32=160)


# --------------------------- weight-slab layout --------------------------------
def _pad8(n):
    return -(-n // 8) * 8


_SLAB_ENTRIES = (
    ("emb", (VOCAB_PAD, HID)),
    ("enc_w1", (HID, HID)), ("enc_b1", (1, HID)),
    ("wqkv", (HID, 3 * HID)),
    ("enc_w2", (HID, HID)), ("enc_b2", (1, HID)),
    ("projdur_w", (HID, 2 * INTER_C + 1)), ("projdur_b", (1, 2 * INTER_C + 1)),
    ("fa_v1", (FLOW_H, HALF_C)), ("fa_c1", (FLOW_H, 1)),
    ("fa_v2", (HALF_C, FLOW_H)), ("fa_c2", (HALF_C, 1)),
    ("fb_v1", (FLOW_H, HALF_C)), ("fb_c1", (FLOW_H, 1)),
    ("fb_v2", (HALF_C, FLOW_H)), ("fb_c2", (HALF_C, 1)),
    ("dpre_w", (DEC_CH[0], KPRE * INTER_C)), ("dpre_b", (DEC_CH[0], 1)),
    ("dup1_w", (DEC_CH[1], KUP * DEC_CH[0])), ("dup1_b", (DEC_CH[1], 1)),
    ("dup2_w", (DEC_CH[2], KUP * DEC_CH[1])), ("dup2_b", (DEC_CH[2], 1)),
    ("dpost_w", (KPOST * DEC_CH[2], 1)), ("dpost_b", (1, 1)),
)


def _slab_layout():
    off, r = {}, 0
    for name, (rows, cols) in _SLAB_ENTRIES:
        assert cols <= SLAB_LANES
        off[name] = (r, rows, cols)
        r += _pad8(rows)
    return off, r


_SLAB_OFF, _SLAB_ROWS = _slab_layout()


# --------------------------- in-kernel helpers --------------------------------
def _shift_cols(x, off):
    """out[:, t] = x[:, t + off] with zero 'same' padding, via XLU roll + edge mask."""
    if off == 0:
        return x
    _, t = x.shape
    rolled = pltpu.roll(x, shift=(-off) % t, axis=1)
    lane = lax.broadcasted_iota(jnp.int32, (1, t), 1)
    if off > 0:
        mask = (lane < (t - off)).astype(x.dtype)
    else:
        mask = (lane >= (-off)).astype(x.dtype)
    return rolled * mask


def _im2col(x, k):
    """Stack the k tap-shifted copies of x (Cin, T) into one (k*Cin, T) block."""
    pad = (k - 1) // 2
    return jnp.concatenate([_shift_cols(x, d - pad) for d in range(k)], axis=0)


def _conv1d(x, w_flat, b, k):
    """'same' conv1d, channel-major, as ONE contraction: (Cout,k*Cin)@(k*Cin,T)."""
    xb = _im2col(x, k)
    return jnp.dot(w_flat, xb, preferred_element_type=jnp.float32) + b


def _upsample2(x):
    """Nearest-neighbour x2 upsample along time (lanes) via an expansion matmul."""
    _, t = x.shape
    row = lax.broadcasted_iota(jnp.int32, (t, 2 * t), 0)
    col = lax.broadcasted_iota(jnp.int32, (t, 2 * t), 1)
    d = col - 2 * row
    e = jnp.logical_and(d >= 0, d <= 1).astype(jnp.float32)
    return jnp.dot(x, e, preferred_element_type=jnp.float32)


# ------------------------------ fused kernel ----------------------------------
def _vits_kernel(tok_ref, lens_ref, noise_ref, slab_ref, audio_ref,
                 *, noise_scale, alpha, noise_scale_dur):
    f32 = jnp.float32

    def w(name):
        off, rows, cols = _SLAB_OFF[name]
        return slab_ref[off:off + rows, 0:cols]

    # ---------------- masks --------------------------------------------------
    L = lens_ref[0, 0]                                                  # i32 scalar
    x_mask_c = (lax.broadcasted_iota(jnp.int32, (T_TEXT, 1), 0) < L).astype(f32)
    x_mask_r = (lax.broadcasted_iota(jnp.int32, (1, T_TEXT), 1) < L).astype(f32)

    # ---------------- text encoder -------------------------------------------
    # embedding lookup as a one-hot matmul (no XLA gather / HBM round trip)
    onehot = (lax.broadcasted_iota(jnp.int32, (T_TEXT, VOCAB_PAD), 1)
              == tok_ref[...]).astype(f32)                              # (T_text, V)
    h = jnp.dot(onehot, w("emb"), preferred_element_type=f32)
    h = h * (HID ** 0.5) * x_mask_c

    h = jnp.maximum(jnp.dot(h, w("enc_w1"), preferred_element_type=f32)
                    + w("enc_b1"), 0.0) * x_mask_c

    # single-head self attention; q|k|v from one fused projection
    qkv = jnp.dot(h, w("wqkv"), preferred_element_type=f32)            # (T_text, 96)
    q = qkv[:, 0:HID]
    k = qkv[:, HID:2 * HID]
    v = qkv[:, 2 * HID:3 * HID]
    scores = lax.dot_general(q, k, (((1,), (1,)), ((), ())),
                             preferred_element_type=f32) * (1.0 / HID ** 0.5)
    scores = scores + jnp.where(x_mask_r > 0.0, 0.0, -1e9)
    scores = scores - jnp.max(scores, axis=-1, keepdims=True)
    p = jnp.exp(scores)
    # NOTE: approx reciprocal (~1e-3 rel err) is a deliberate inference trade-off.
    p = p * pl.reciprocal(jnp.sum(p, axis=-1, keepdims=True), approx=True)
    h = (h + jnp.dot(p, v, preferred_element_type=f32)) * x_mask_c

    h = jnp.maximum(jnp.dot(h, w("enc_w2"), preferred_element_type=f32)
                    + w("enc_b2"), 0.0) * x_mask_c

    # prior stats + duration logits from one fused projection
    sd = (jnp.dot(h, w("projdur_w"), preferred_element_type=f32)
          + w("projdur_b"))                                             # (T_text, 33)
    stats = sd[:, 0:2 * INTER_C] * x_mask_c
    stats_t = stats.T                                                   # (2C, T_text)
    m_p_t = stats_t[0:INTER_C, :]
    logs_p_t = stats_t[INTER_C:2 * INTER_C, :]

    # ---------------- duration predictor (simplified) ------------------------
    # TODO(synk): real VITS uses a stochastic flow-based duration predictor.
    noise_d = noise_ref[INTER_C:INTER_C + T_TEXT, 0:1]                  # (T_text, 1)
    logw = sd[:, 2 * INTER_C:2 * INTER_C + 1] + noise_d * noise_scale_dur
    w_dur = jnp.exp(logw) * alpha * x_mask_c
    dur = jnp.ceil(w_dur) * x_mask_c

    # TODO(synk): output length is capped at the static T_FEAT frames.
    y_len = jnp.clip(jnp.sum(dur, axis=0, keepdims=True), 1.0, float(T_FEAT))
    y_mask_r = (lax.broadcasted_iota(jnp.int32, (1, T_FEAT), 1).astype(f32)
                < y_len).astype(f32)                                    # (1, T_feat)

    # cumulative durations via a lower-triangular matmul (no in-kernel cumsum)
    li = lax.broadcasted_iota(jnp.int32, (T_TEXT, T_TEXT), 0)
    lj = lax.broadcasted_iota(jnp.int32, (T_TEXT, T_TEXT), 1)
    cum = jnp.dot((lj <= li).astype(f32), dur, preferred_element_type=f32)

    # monotonic alignment path, built directly transposed: (T_text, T_feat)
    fr = lax.broadcasted_iota(jnp.int32, (T_TEXT, T_FEAT), 1).astype(f32)
    attn_t = jnp.logical_and(fr < cum, fr >= cum - dur).astype(f32) * y_mask_r

    # ---------------- expand prior + sample z_p (channel-major) --------------
    m_f = jnp.dot(m_p_t, attn_t, preferred_element_type=f32)            # (C, T_feat)
    logs_f = jnp.dot(logs_p_t, attn_t, preferred_element_type=f32)
    eps = noise_ref[0:INTER_C, :]
    z_p = (m_f + jnp.exp(logs_f) * eps * noise_scale) * y_mask_r

    # ---------------- flow reverse (2 mean-only couplings, flips absorbed) ---
    a0 = z_p[0:HALF_C, :]
    b0 = z_p[HALF_C:INTER_C, :]
    h1 = jnp.maximum(jnp.dot(w("fa_v1"), b0, preferred_element_type=f32)
                     + w("fa_c1"), 0.0)
    u = (a0 - (jnp.dot(w("fa_v2"), h1, preferred_element_type=f32)
               + w("fa_c2"))) * y_mask_r
    h2 = jnp.maximum(jnp.dot(w("fb_v1"), u, preferred_element_type=f32)
                     + w("fb_c1"), 0.0)
    vv = (b0 - (jnp.dot(w("fb_v2"), h2, preferred_element_type=f32)
                + w("fb_c2"))) * y_mask_r
    z = jnp.concatenate([u, vv], axis=0)                                # (C, T_feat)

    # ---------------- decoder (channel-major: time on lanes) -----------------
    # TODO(synk): HiFi-GAN transposed convs + MRF resblocks simplified to
    #             nearest-repeat upsample + conv1d.
    x = _conv1d(z, w("dpre_w"), w("dpre_b"), KPRE)                      # (32, 128)

    x = _upsample2(x)                                                   # (32, 256)
    x = _conv1d(x, w("dup1_w"), w("dup1_b"), KUP)                       # (16, 256)
    x = jnp.where(x > 0.0, x, 0.1 * x)

    x = _upsample2(x)                                                   # (16, 512)
    x = _conv1d(x, w("dup2_w"), w("dup2_b"), KUP)                       # (8, 512)
    x = jnp.where(x > 0.0, x, 0.1 * x)

    # post conv (Cout == 1): broadcast-multiply + sublane reduce keeps the
    # (1, T_wav) result lane-dense without an M=1 matmul.
    xb = _im2col(x, KPOST)                                              # (56, 512)
    out = jnp.sum(xb * w("dpost_w"), axis=0, keepdims=True) + w("dpost_b")
    audio_ref[...] = jnp.tanh(out)


# ------------------------------- wrapper ---------------------------------------
def vits_forward(slab, tokens, tokens_lens, noise, noise_d,
                 noise_scale=0.667, alpha=1.0, noise_scale_dur=0.8):
    """Fused VITS inference: the entire pipeline is a single pallas_call."""
    tokens_col = tokens.reshape(T_TEXT, 1).astype(jnp.int32)
    lens = tokens_lens.reshape(1, 1).astype(jnp.int32)

    # pack prior noise (INTER_C, T_FEAT) + duration noise (T_TEXT, 1) into one tile
    noise_all = jnp.zeros((INTER_C + T_TEXT, T_FEAT), jnp.float32)
    noise_all = noise_all.at[:INTER_C, :].set(noise.T.astype(jnp.float32))
    noise_all = noise_all.at[INTER_C:, 0:1].set(noise_d.astype(jnp.float32))

    kernel = functools.partial(
        _vits_kernel, noise_scale=float(noise_scale), alpha=float(alpha),
        noise_scale_dur=float(noise_scale_dur))

    return pl.pallas_call(
        kernel,
        out_shape=jax.ShapeDtypeStruct((1, T_WAV), jnp.float32),
        in_specs=[
            pl.BlockSpec(memory_space=pltpu.MemorySpace.VMEM),   # tokens
            pl.BlockSpec(memory_space=pltpu.MemorySpace.SMEM),   # lens (scalar)
            pl.BlockSpec(memory_space=pltpu.MemorySpace.VMEM),   # noise (+noise_d)
            pl.BlockSpec(memory_space=pltpu.MemorySpace.VMEM),   # weight slab
        ],
        out_specs=pl.BlockSpec(memory_space=pltpu.MemorySpace.VMEM),
        cost_estimate=pl.CostEstimate(flops=12_000_000, transcendentals=8192,
                                      bytes_accessed=700_000),
    )(tokens_col, lens, noise_all, slab)


# --------------------------- parameter creation --------------------------------
def make_params(key):
    def nrm(k, shape, scale=0.1):
        return scale * jax.random.normal(k, shape, dtype=jnp.float32)

    ks = iter(jax.random.split(key, 40))

    def nk():
        return next(ks)

    flow = []
    for _ in range(2):
        flow.append((nrm(nk(), (HALF_C, FLOW_H)), nrm(nk(), (1, FLOW_H)),
                     nrm(nk(), (FLOW_H, HALF_C)), nrm(nk(), (1, HALF_C))))
    return {
        "emb": nrm(nk(), (VOCAB, HID)),
        "enc_w1": nrm(nk(), (HID, HID)), "enc_b1": nrm(nk(), (1, HID)),
        "wq": nrm(nk(), (HID, HID)), "wk": nrm(nk(), (HID, HID)),
        "wv": nrm(nk(), (HID, HID)),
        "enc_w2": nrm(nk(), (HID, HID)), "enc_b2": nrm(nk(), (1, HID)),
        "proj_w": nrm(nk(), (HID, 2 * INTER_C)),
        "proj_b": nrm(nk(), (1, 2 * INTER_C)),
        "dur_w": nrm(nk(), (HID, 1)), "dur_b": nrm(nk(), (1, 1)),
        "flow": flow,
        "dec_pre_w": nrm(nk(), (KPRE * INTER_C, DEC_CH[0])),
        "dec_pre_b": nrm(nk(), (1, DEC_CH[0])),
        "dec_ups": [
            (nrm(nk(), (KUP * DEC_CH[0], DEC_CH[1])), nrm(nk(), (1, DEC_CH[1]))),
            (nrm(nk(), (KUP * DEC_CH[1], DEC_CH[2])), nrm(nk(), (1, DEC_CH[2]))),
        ],
        "dec_post_w": nrm(nk(), (KPOST * DEC_CH[2], 1)),
        "dec_post_b": nrm(nk(), (1, 1)),
    }


def prepare_params(p):
    """One-time host-side weight prep: fuse / transpose / pre-flip weights and pack
    everything into ONE contiguous (rows, 256) f32 slab (single kernel input DMA)."""
    # flow layer processed FIRST in reverse order (= layer index 1) has the
    # channel Flip absorbed by reversing the matching weight rows/cols.
    w1a, b1a, w2a, b2a = p["flow"][1]
    w1b, b1b, w2b, b2b = p["flow"][0]

    emb_pad = jnp.zeros((VOCAB_PAD, HID), jnp.float32).at[:VOCAB].set(p["emb"])

    tensors = {
        "emb": emb_pad,
        "enc_w1": p["enc_w1"], "enc_b1": p["enc_b1"],
        "wqkv": jnp.concatenate([p["wq"], p["wk"], p["wv"]], axis=1),
        "enc_w2": p["enc_w2"], "enc_b2": p["enc_b2"],
        "projdur_w": jnp.concatenate([p["proj_w"], p["dur_w"]], axis=1),
        "projdur_b": jnp.concatenate([p["proj_b"], p["dur_b"]], axis=1),
        "fa_v1": w1a[::-1, :].T, "fa_c1": b1a.T,
        "fa_v2": w2a[:, ::-1].T, "fa_c2": b2a[:, ::-1].T,
        "fb_v1": w1b.T, "fb_c1": b1b.T,
        "fb_v2": w2b.T, "fb_c2": b2b.T,
        # decoder conv weights kept flat in (Cout, k*Cin) layout matching the
        # in-kernel im2col row order (tap-major, then Cin).
        "dpre_w": p["dec_pre_w"].T, "dpre_b": p["dec_pre_b"].T,
        "dup1_w": p["dec_ups"][0][0].T, "dup1_b": p["dec_ups"][0][1].T,
        "dup2_w": p["dec_ups"][1][0].T, "dup2_b": p["dec_ups"][1][1].T,
        "dpost_w": p["dec_post_w"], "dpost_b": p["dec_post_b"],
    }

    slab = jnp.zeros((_SLAB_ROWS, SLAB_LANES), jnp.float32)
    for name, (off, rows, cols) in _SLAB_OFF.items():
        a = jnp.asarray(tensors[name], jnp.float32)
        assert a.shape == (rows, cols), (name, a.shape, (rows, cols))
        slab = slab.at[off:off + rows, :cols].set(a)
    return slab


# ----------------------------------- main --------------------------------------
if __name__ == "__main__":
    key = jax.random.PRNGKey(0)
    k_tok, k_noise, k_noise_d = jax.random.split(key, 3)

    tokens = jax.random.randint(k_tok, (1, T_TEXT), 1, VOCAB, dtype=jnp.int32)
    tokens_lens = jnp.array([6], dtype=jnp.int32)
    noise = jax.random.normal(k_noise, (T_FEAT, INTER_C), dtype=jnp.float32)
    noise_d = jax.random.normal(k_noise_d, (T_TEXT, 1), dtype=jnp.float32)

    params = make_params(jax.random.PRNGKey(1))
    slab = prepare_params(params)             # one-time host-side weight packing

    run = jax.jit(vits_forward)
    audio = run(slab, tokens, tokens_lens, noise, noise_d)
    audio = jax.block_until_ready(audio)

    assert audio.shape == (1, T_WAV), audio.shape
    assert bool(jnp.all(jnp.isfinite(audio)))
    print("KERNEL_OK")
</pallas_src>

<mosaic_0001>
module attributes {stable_mosaic.version = 11 : i64} {
  func.func @_vits_kernel(%arg0: memref<8x1xi32, #tpu.memory_space<vmem>>, %arg1: memref<1x1xi32, #tpu.memory_space<smem>>, %arg2: memref<24x128xf32, #tpu.memory_space<vmem>>, %arg3: memref<488x256xf32, #tpu.memory_space<vmem>>, %arg4: memref<1x512xf32, #tpu.memory_space<vmem>>) attributes {dimension_semantics = [], scalar_prefetch = 0 : i64, scratch_operands = 0 : i64, tpu.core_type = #tpu.core_type<tc>} {
    %c0 = arith.constant 0 : index
    %c0_0 = arith.constant 0 : index
    %0 = memref.load %arg1[%c0, %c0_0] : memref<1x1xi32, #tpu.memory_space<smem>>
    %1 = tpu.iota {dimensions = array<i32: 0>} : vector<8x1xi32>
    %2 = vector.broadcast %0 : i32 to vector<8x1xi32>
    %3 = arith.cmpi slt, %1, %2 : vector<8x1xi32>
    %4 = arith.extui %3 : vector<8x1xi1> to vector<8x1xi32>
    %5 = arith.sitofp %4 : vector<8x1xi32> to vector<8x1xf32>
    %6 = tpu.iota {dimensions = array<i32: 1>} : vector<1x8xi32>
    %7 = vector.broadcast %0 : i32 to vector<1x8xi32>
    %8 = arith.cmpi slt, %6, %7 : vector<1x8xi32>
    %9 = arith.extui %8 : vector<1x8xi1> to vector<1x8xi32>
    %10 = arith.sitofp %9 : vector<1x8xi32> to vector<1x8xf32>
    %11 = tpu.iota {dimensions = array<i32: 1>} : vector<8x64xi32>
    %c0_1 = arith.constant 0 : index
    %c0_2 = arith.constant 0 : index
    %12 = vector.load %arg0[%c0_1, %c0_2] : memref<8x1xi32, #tpu.memory_space<vmem>>, vector<8x1xi32>
    %13 = vector.broadcast %12 : vector<8x1xi32> to vector<8x64xi32>
    %14 = arith.cmpi eq, %11, %13 : vector<8x64xi32>
    %15 = arith.extui %14 : vector<8x64xi1> to vector<8x64xi32>
    %16 = arith.sitofp %15 : vector<8x64xi32> to vector<8x64xf32>
    %c0_3 = arith.constant 0 : index
    %c0_4 = arith.constant 0 : index
    %17 = vector.load %arg3[%c0_3, %c0_4] : memref<488x256xf32, #tpu.memory_space<vmem>>, vector<64x32xf32>
    %cst = arith.constant dense<0.000000e+00> : vector<8x32xf32>
    %18 = tpu.matmul %16, %17, %cst {dimension_numbers = #tpu.dot_dimension_numbers<[1], [0], [0], [1], [0, 0, 1, 1], [], []>} : vector<8x64xf32>, vector<64x32xf32>, vector<8x32xf32> -> vector<8x32xf32>
    %cst_5 = arith.constant 5.65685415 : f32
    %19 = vector.broadcast %cst_5 : f32 to vector<8x32xf32>
    %20 = arith.mulf %18, %19 : vector<8x32xf32>
    %21 = vector.broadcast %5 : vector<8x1xf32> to vector<8x32xf32>
    %22 = arith.mulf %20, %21 : vector<8x32xf32>
    %c64 = arith.constant 64 : index
    %c0_6 = arith.constant 0 : index
    %23 = vector.load %arg3[%c64, %c0_6] : memref<488x256xf32, #tpu.memory_space<vmem>>, vector<32x32xf32>
    %cst_7 = arith.constant dense<0.000000e+00> : vector<8x32xf32>
    %24 = tpu.matmul %22, %23, %cst_7 {dimension_numbers = #tpu.dot_dimension_numbers<[1], [0], [0], [1], [0, 0, 1, 1], [], []>} : vector<8x32xf32>, vector<32x32xf32>, vector<8x32xf32> -> vector<8x32xf32>
    %c96 = arith.constant 96 : index
    %c0_8 = arith.constant 0 : index
    %25 = vector.load %arg3[%c96, %c0_8] : memref<488x256xf32, #tpu.memory_space<vmem>>, vector<1x32xf32>
    %26 = vector.broadcast %25 : vector<1x32xf32> to vector<8x32xf32>
    %27 = arith.addf %24, %26 : vector<8x32xf32>
    %cst_9 = arith.constant 0.000000e+00 : f32
    %28 = vector.broadcast %cst_9 : f32 to vector<8x32xf32>
    %29 = arith.maximumf %27, %28 : vector<8x32xf32>
    %30 = vector.broadcast %5 : vector<8x1xf32> to vector<8x32xf32>
    %31 = arith.mulf %29, %30 : vector<8x32xf32>
    %c104 = arith.constant 104 : index
    %c0_10 = arith.constant 0 : index
    %32 = vector.load %arg3[%c104, %c0_10] : memref<488x256xf32, #tpu.memory_space<vmem>>, vector<32x96xf32>
    %cst_11 = arith.constant dense<0.000000e+00> : vector<8x96xf32>
    %33 = tpu.matmul %31, %32, %cst_11 {dimension_numbers = #tpu.dot_dimension_numbers<[1], [0], [0], [1], [0, 0, 1, 1], [], []>} : vector<8x32xf32>, vector<32x96xf32>, vector<8x96xf32> -> vector<8x96xf32>
    %34 = vector.extract_strided_slice %33 {offsets = [0, 0], sizes = [8, 32], strides = [1, 1]} : vector<8x96xf32> to vector<8x32xf32>
    %35 = vector.extract_strided_slice %33 {offsets = [0, 32], sizes = [8, 32], strides = [1, 1]} : vector<8x96xf32> to vector<8x32xf32>
    %36 = vector.extract_strided_slice %33 {offsets = [0, 64], sizes = [8, 32], strides = [1, 1]} : vector<8x96xf32> to vector<8x32xf32>
    %cst_12 = arith.constant dense<0.000000e+00> : vector<8x8xf32>
    %37 = tpu.matmul %34, %35, %cst_12 {dimension_numbers = #tpu.dot_dimension_numbers<[1], [1], [0], [0], [0, 0, 1, 0], [], []>} : vector<8x32xf32>, vector<8x32xf32>, vector<8x8xf32> -> vector<8x8xf32>
    %cst_13 = arith.constant 0.176776692 : f32
    %38 = vector.broadcast %cst_13 : f32 to vector<8x8xf32>
    %39 = arith.mulf %37, %38 : vector<8x8xf32>
    %cst_14 = arith.constant 0.000000e+00 : f32
    %40 = vector.broadcast %cst_14 : f32 to vector<1x8xf32>
    %41 = arith.cmpf ogt, %10, %40 : vector<1x8xf32>
    %cst_15 = arith.constant 0.000000e+00 : f32
    %cst_16 = arith.constant -1.000000e+09 : f32
    %42 = vector.broadcast %cst_15 : f32 to vector<1x8xf32>
    %43 = vector.broadcast %cst_16 : f32 to vector<1x8xf32>
    %44 = arith.select %41, %42, %43 : vector<1x8xi1>, vector<1x8xf32>
    %45 = vector.broadcast %44 : vector<1x8xf32> to vector<8x8xf32>
    %46 = arith.addf %39, %45 : vector<8x8xf32>
    %cst_17 = arith.constant dense<0xFF800000> : vector<8xf32>
    %47 = vector.multi_reduction <maximumf>, %46, %cst_17 [1] : vector<8x8xf32> to vector<8xf32>
    %48 = vector.shape_cast %47 : vector<8xf32> to vector<8x1xf32>
    %49 = vector.broadcast %48 : vector<8x1xf32> to vector<8x8xf32>
    %50 = arith.subf %46, %49 : vector<8x8xf32>
    %51 = math.exp %50 : vector<8x8xf32>
    %cst_18 = arith.constant dense<0.000000e+00> : vector<8xf32>
    %52 = vector.multi_reduction <add>, %51, %cst_18 [1] : vector<8x8xf32> to vector<8xf32>
    %53 = vector.shape_cast %52 : vector<8xf32> to vector<8x1xf32>
    %54 = tpu.reciprocal %53 {approx = true} : vector<8x1xf32> -> vector<8x1xf32>
    %55 = vector.broadcast %54 : vector<8x1xf32> to vector<8x8xf32>
    %56 = arith.mulf %51, %55 : vector<8x8xf32>
    %cst_19 = arith.constant dense<0.000000e+00> : vector<8x32xf32>
    %57 = tpu.matmul %56, %36, %cst_19 {dimension_numbers = #tpu.dot_dimension_numbers<[1], [0], [0], [1], [0, 0, 1, 1], [], []>} : vector<8x8xf32>, vector<8x32xf32>, vector<8x32xf32> -> vector<8x32xf32>
    %58 = arith.addf %31, %57 : vector<8x32xf32>
    %59 = vector.broadcast %5 : vector<8x1xf32> to vector<8x32xf32>
    %60 = arith.mulf %58, %59 : vector<8x32xf32>
    %c136 = arith.constant 136 : index
    %c0_20 = arith.constant 0 : index
    %61 = vector.load %arg3[%c136, %c0_20] : memref<488x256xf32, #tpu.memory_space<vmem>>, vector<32x32xf32>
    %cst_21 = arith.constant dense<0.000000e+00> : vector<8x32xf32>
    %62 = tpu.matmul %60, %61, %cst_21 {dimension_numbers = #tpu.dot_dimension_numbers<[1], [0], [0], [1], [0, 0, 1, 1], [], []>} : vector<8x32xf32>, vector<32x32xf32>, vector<8x32xf32> -> vector<8x32xf32>
    %c168 = arith.constant 168 : index
    %c0_22 = arith.constant 0 : index
    %63 = vector.load %arg3[%c168, %c0_22] : memref<488x256xf32, #tpu.memory_space<vmem>>, vector<1x32xf32>
    %64 = vector.broadcast %63 : vector<1x32xf32> to vector<8x32xf32>
    %65 = arith.addf %62, %64 : vector<8x32xf32>
    %cst_23 = arith.constant 0.000000e+00 : f32
    %66 = vector.broadcast %cst_23 : f32 to vector<8x32xf32>
    %67 = arith.maximumf %65, %66 : vector<8x32xf32>
    %68 = vector.broadcast %5 : vector<8x1xf32> to vector<8x32xf32>
    %69 = arith.mulf %67, %68 : vector<8x32xf32>
    %c176 = arith.constant 176 : index
    %c0_24 = arith.constant 0 : index
    %70 = vector.load %arg3[%c176, %c0_24] : memref<488x256xf32, #tpu.memory_space<vmem>>, vector<32x33xf32>
    %cst_25 = arith.constant dense<0.000000e+00> : vector<8x33xf32>
    %71 = tpu.matmul %69, %70, %cst_25 {dimension_numbers = #tpu.dot_dimension_numbers<[1], [0], [0], [1], [0, 0, 1, 1], [], []>} : vector<8x32xf32>, vector<32x33xf32>, vector<8x33xf32> -> vector<8x33xf32>
    %c208 = arith.constant 208 : index
    %c0_26 = arith.constant 0 : index
    %72 = vector.load %arg3[%c208, %c0_26] : memref<488x256xf32, #tpu.memory_space<vmem>>, vector<1x33xf32>
    %73 = vector.broadcast %72 : vector<1x33xf32> to vector<8x33xf32>
    %74 = arith.addf %71, %73 : vector<8x33xf32>
    %75 = vector.extract_strided_slice %74 {offsets = [0, 0], sizes = [8, 32], strides = [1, 1]} : vector<8x33xf32> to vector<8x32xf32>
    %76 = vector.broadcast %5 : vector<8x1xf32> to vector<8x32xf32>
    %77 = arith.mulf %75, %76 : vector<8x32xf32>
    %78 = tpu.transpose %77, [1, 0] : vector<8x32xf32> -> vector<32x8xf32>
    %79 = vector.extract_strided_slice %78 {offsets = [0, 0], sizes = [16, 8], strides = [1, 1]} : vector<32x8xf32> to vector<16x8xf32>
    %80 = vector.extract_strided_slice %78 {offsets = [16, 0], sizes = [16, 8], strides = [1, 1]} : vector<32x8xf32> to vector<16x8xf32>
    %c16 = arith.constant 16 : index
    %c0_27 = arith.constant 0 : index
    %81 = vector.load %arg2[%c16, %c0_27] : memref<24x128xf32, #tpu.memory_space<vmem>>, vector<8x1xf32>
    %82 = vector.extract_strided_slice %74 {offsets = [0, 32], sizes = [8, 1], strides = [1, 1]} : vector<8x33xf32> to vector<8x1xf32>
    %cst_28 = arith.constant 8.000000e-01 : f32
    %83 = vector.broadcast %cst_28 : f32 to vector<8x1xf32>
    %84 = arith.mulf %81, %83 : vector<8x1xf32>
    %85 = arith.addf %82, %84 : vector<8x1xf32>
    %86 = math.exp %85 : vector<8x1xf32>
    %cst_29 = arith.constant 1.000000e+00 : f32
    %87 = vector.broadcast %cst_29 : f32 to vector<8x1xf32>
    %88 = arith.mulf %86, %87 : vector<8x1xf32>
    %89 = arith.mulf %88, %5 : vector<8x1xf32>
    %90 = math.ceil %89 : vector<8x1xf32>
    %91 = arith.mulf %90, %5 : vector<8x1xf32>
    %cst_30 = arith.constant dense<0.000000e+00> : vector<1xf32>
    %92 = vector.multi_reduction <add>, %91, %cst_30 [0] : vector<8x1xf32> to vector<1xf32>
    %93 = vector.shape_cast %92 : vector<1xf32> to vector<1x1xf32>
    %cst_31 = arith.constant 1.000000e+00 : f32
    %cst_32 = arith.constant 1.280000e+02 : f32
    %94 = vector.broadcast %cst_31 : f32 to vector<1x1xf32>
    %95 = arith.maximumf %94, %93 : vector<1x1xf32>
    %96 = vector.broadcast %cst_32 : f32 to vector<1x1xf32>
    %97 = arith.minimumf %96, %95 : vector<1x1xf32>
    %98 = tpu.iota {dimensions = array<i32: 1>} : vector<1x128xi32>
    %99 = arith.sitofp %98 : vector<1x128xi32> to vector<1x128xf32>
    %100 = vector.broadcast %97 : vector<1x1xf32> to vector<1x128xf32>
    %101 = arith.cmpf olt, %99, %100 : vector<1x128xf32>
    %102 = arith.extui %101 : vector<1x128xi1> to vector<1x128xi32>
    %103 = arith.sitofp %102 : vector<1x128xi32> to vector<1x128xf32>
    %104 = tpu.iota {dimensions = array<i32: 0>} : vector<8x8xi32>
    %105 = tpu.iota {dimensions = array<i32: 1>} : vector<8x8xi32>
    %106 = arith.cmpi sle, %105, %104 : vector<8x8xi32>
    %107 = arith.extui %106 : vector<8x8xi1> to vector<8x8xi32>
    %108 = arith.sitofp %107 : vector<8x8xi32> to vector<8x8xf32>
    %cst_33 = arith.constant dense<0.000000e+00> : vector<8x1xf32>
    %109 = tpu.matmul %108, %91, %cst_33 {dimension_numbers = #tpu.dot_dimension_numbers<[1], [0], [0], [1], [0, 0, 1, 1], [], []>} : vector<8x8xf32>, vector<8x1xf32>, vector<8x1xf32> -> vector<8x1xf32>
    %110 = tpu.iota {dimensions = array<i32: 1>} : vector<8x128xi32>
    %111 = arith.sitofp %110 : vector<8x128xi32> to vector<8x128xf32>
    %112 = vector.broadcast %109 : vector<8x1xf32> to vector<8x128xf32>
    %113 = arith.cmpf olt, %111, %112 : vector<8x128xf32>
    %114 = arith.subf %109, %91 : vector<8x1xf32>
    %115 = vector.broadcast %114 : vector<8x1xf32> to vector<8x128xf32>
    %116 = arith.cmpf oge, %111, %115 : vector<8x128xf32>
    %117 = arith.andi %113, %116 : vector<8x128xi1>
    %118 = arith.extui %117 : vector<8x128xi1> to vector<8x128xi32>
    %119 = arith.sitofp %118 : vector<8x128xi32> to vector<8x128xf32>
    %120 = vector.broadcast %103 : vector<1x128xf32> to vector<8x128xf32>
    %121 = arith.mulf %119, %120 : vector<8x128xf32>
    %cst_34 = arith.constant dense<0.000000e+00> : vector<16x128xf32>
    %122 = tpu.matmul %79, %121, %cst_34 {dimension_numbers = #tpu.dot_dimension_numbers<[1], [0], [0], [1], [0, 0, 1, 1], [], []>} : vector<16x8xf32>, vector<8x128xf32>, vector<16x128xf32> -> vector<16x128xf32>
    %cst_35 = arith.constant dense<0.000000e+00> : vector<16x128xf32>
    %123 = tpu.matmul %80, %121, %cst_35 {dimension_numbers = #tpu.dot_dimension_numbers<[1], [0], [0], [1], [0, 0, 1, 1], [], []>} : vector<16x8xf32>, vector<8x128xf32>, vector<16x128xf32> -> vector<16x128xf32>
    %c0_36 = arith.constant 0 : index
    %c0_37 = arith.constant 0 : index
    %124 = vector.load %arg2[%c0_36, %c0_37] : memref<24x128xf32, #tpu.memory_space<vmem>>, vector<16x128xf32>
    %125 = math.exp %123 : vector<16x128xf32>
    %126 = arith.mulf %125, %124 : vector<16x128xf32>
    %cst_38 = arith.constant 0.666999995 : f32
    %127 = vector.broadcast %cst_38 : f32 to vector<16x128xf32>
    %128 = arith.mulf %126, %127 : vector<16x128xf32>
    %129 = arith.addf %122, %128 : vector<16x128xf32>
    %130 = vector.broadcast %103 : vector<1x128xf32> to vector<16x128xf32>
    %131 = arith.mulf %129, %130 : vector<16x128xf32>
    %132 = vector.extract_strided_slice %131 {offsets = [0, 0], sizes = [8, 128], strides = [1, 1]} : vector<16x128xf32> to vector<8x128xf32>
    %133 = vector.extract_strided_slice %131 {offsets = [8, 0], sizes = [8, 128], strides = [1, 1]} : vector<16x128xf32> to vector<8x128xf32>
    %c216 = arith.constant 216 : index
    %c0_39 = arith.constant 0 : index
    %134 = vector.load %arg3[%c216, %c0_39] : memref<488x256xf32, #tpu.memory_space<vmem>>, vector<16x8xf32>
    %cst_40 = arith.constant dense<0.000000e+00> : vector<16x128xf32>
    %135 = tpu.matmul %134, %133, %cst_40 {dimension_numbers = #tpu.dot_dimension_numbers<[1], [0], [0], [1], [0, 0, 1, 1], [], []>} : vector<16x8xf32>, vector<8x128xf32>, vector<16x128xf32> -> vector<16x128xf32>
    %c232 = arith.constant 232 : index
    %c0_41 = arith.constant 0 : index
    %136 = vector.load %arg3[%c232, %c0_41] : memref<488x256xf32, #tpu.memory_space<vmem>>, vector<16x1xf32>
    %137 = vector.broadcast %136 : vector<16x1xf32> to vector<16x128xf32>
    %138 = arith.addf %135, %137 : vector<16x128xf32>
    %cst_42 = arith.constant 0.000000e+00 : f32
    %139 = vector.broadcast %cst_42 : f32 to vector<16x128xf32>
    %140 = arith.maximumf %138, %139 : vector<16x128xf32>
    %c248 = arith.constant 248 : index
    %c0_43 = arith.constant 0 : index
    %141 = vector.load %arg3[%c248, %c0_43] : memref<488x256xf32, #tpu.memory_space<vmem>>, vector<8x16xf32>
    %cst_44 = arith.constant dense<0.000000e+00> : vector<8x128xf32>
    %142 = tpu.matmul %141, %140, %cst_44 {dimension_numbers = #tpu.dot_dimension_numbers<[1], [0], [0], [1], [0, 0, 1, 1], [], []>} : vector<8x16xf32>, vector<16x128xf32>, vector<8x128xf32> -> vector<8x128xf32>
    %c256 = arith.constant 256 : index
    %c0_45 = arith.constant 0 : index
    %143 = vector.load %arg3[%c256, %c0_45] : memref<488x256xf32, #tpu.memory_space<vmem>>, vector<8x1xf32>
    %144 = vector.broadcast %143 : vector<8x1xf32> to vector<8x128xf32>
    %145 = arith.addf %142, %144 : vector<8x128xf32>
    %146 = arith.subf %132, %145 : vector<8x128xf32>
    %147 = vector.broadcast %103 : vector<1x128xf32> to vector<8x128xf32>
    %148 = arith.mulf %146, %147 : vector<8x128xf32>
    %c264 = arith.constant 264 : index
    %c0_46 = arith.constant 0 : index
    %149 = vector.load %arg3[%c264, %c0_46] : memref<488x256xf32, #tpu.memory_space<vmem>>, vector<16x8xf32>
    %cst_47 = arith.constant dense<0.000000e+00> : vector<16x128xf32>
    %150 = tpu.matmul %149, %148, %cst_47 {dimension_numbers = #tpu.dot_dimension_numbers<[1], [0], [0], [1], [0, 0, 1, 1], [], []>} : vector<16x8xf32>, vector<8x128xf32>, vector<16x128xf32> -> vector<16x128xf32>
    %c280 = arith.constant 280 : index
    %c0_48 = arith.constant 0 : index
    %151 = vector.load %arg3[%c280, %c0_48] : memref<488x256xf32, #tpu.memory_space<vmem>>, vector<16x1xf32>
    %152 = vector.broadcast %151 : vector<16x1xf32> to vector<16x128xf32>
    %153 = arith.addf %150, %152 : vector<16x128xf32>
    %cst_49 = arith.constant 0.000000e+00 : f32
    %154 = vector.broadcast %cst_49 : f32 to vector<16x128xf32>
    %155 = arith.maximumf %153, %154 : vector<16x128xf32>
    %c296 = arith.constant 296 : index
    %c0_50 = arith.constant 0 : index
    %156 = vector.load %arg3[%c296, %c0_50] : memref<488x256xf32, #tpu.memory_space<vmem>>, vector<8x16xf32>
    %cst_51 = arith.constant dense<0.000000e+00> : vector<8x128xf32>
    %157 = tpu.matmul %156, %155, %cst_51 {dimension_numbers = #tpu.dot_dimension_numbers<[1], [0], [0], [1], [0, 0, 1, 1], [], []>} : vector<8x16xf32>, vector<16x128xf32>, vector<8x128xf32> -> vector<8x128xf32>
    %c304 = arith.constant 304 : index
    %c0_52 = arith.constant 0 : index
    %158 = vector.load %arg3[%c304, %c0_52] : memref<488x256xf32, #tpu.memory_space<vmem>>, vector<8x1xf32>
    %159 = vector.broadcast %158 : vector<8x1xf32> to vector<8x128xf32>
    %160 = arith.addf %157, %159 : vector<8x128xf32>
    %161 = arith.subf %133, %160 : vector<8x128xf32>
    %162 = vector.broadcast %103 : vector<1x128xf32> to vector<8x128xf32>
    %163 = arith.mulf %161, %162 : vector<8x128xf32>
    %164 = tpu.concatenate %148, %163 in 0 : vector<8x128xf32>, vector<8x128xf32> -> vector<16x128xf32>
    %c312 = arith.constant 312 : index
    %c0_53 = arith.constant 0 : index
    %165 = vector.load %arg3[%c312, %c0_53] : memref<488x256xf32, #tpu.memory_space<vmem>>, vector<32x112xf32>
    %c344 = arith.constant 344 : index
    %c0_54 = arith.constant 0 : index
    %166 = vector.load %arg3[%c344, %c0_54] : memref<488x256xf32, #tpu.memory_space<vmem>>, vector<32x1xf32>
    %c3_i32 = arith.constant 3 : i32
    %167 = tpu.dynamic_rotate %164 by %c3_i32 dim 1 : vector<16x128xf32>, i32 -> vector<16x128xf32>
    %168 = tpu.iota {dimensions = array<i32: 1>} : vector<1x128xi32>
    %c3_i32_55 = arith.constant 3 : i32
    %169 = vector.broadcast %c3_i32_55 : i32 to vector<1x128xi32>
    %170 = arith.cmpi sge, %168, %169 : vector<1x128xi32>
    %171 = arith.extui %170 : vector<1x128xi1> to vector<1x128xi32>
    %172 = arith.sitofp %171 : vector<1x128xi32> to vector<1x128xf32>
    %173 = vector.broadcast %172 : vector<1x128xf32> to vector<16x128xf32>
    %174 = arith.mulf %167, %173 : vector<16x128xf32>
    %c2_i32 = arith.constant 2 : i32
    %175 = tpu.dynamic_rotate %164 by %c2_i32 dim 1 : vector<16x128xf32>, i32 -> vector<16x128xf32>
    %176 = tpu.iota {dimensions = array<i32: 1>} : vector<1x128xi32>
    %c2_i32_56 = arith.constant 2 : i32
    %177 = vector.broadcast %c2_i32_56 : i32 to vector<1x128xi32>
    %178 = arith.cmpi sge, %176, %177 : vector<1x128xi32>
    %179 = arith.extui %178 : vector<1x128xi1> to vector<1x128xi32>
    %180 = arith.sitofp %179 : vector<1x128xi32> to vector<1x128xf32>
    %181 = vector.broadcast %180 : vector<1x128xf32> to vector<16x128xf32>
    %182 = arith.mulf %175, %181 : vector<16x128xf32>
    %c1_i32 = arith.constant 1 : i32
    %183 = tpu.dynamic_rotate %164 by %c1_i32 dim 1 : vector<16x128xf32>, i32 -> vector<16x128xf32>
    %184 = tpu.iota {dimensions = array<i32: 1>} : vector<1x128xi32>
    %c1_i32_57 = arith.constant 1 : i32
    %185 = vector.broadcast %c1_i32_57 : i32 to vector<1x128xi32>
    %186 = arith.cmpi sge, %184, %185 : vector<1x128xi32>
    %187 = arith.extui %186 : vector<1x128xi1> to vector<1x128xi32>
    %188 = arith.sitofp %187 : vector<1x128xi32> to vector<1x128xf32>
    %189 = vector.broadcast %188 : vector<1x128xf32> to vector<16x128xf32>
    %190 = arith.mulf %183, %189 : vector<16x128xf32>
    %c127_i32 = arith.constant 127 : i32
    %191 = tpu.dynamic_rotate %164 by %c127_i32 dim 1 : vector<16x128xf32>, i32 -> vector<16x128xf32>
    %192 = tpu.iota {dimensions = array<i32: 1>} : vector<1x128xi32>
    %c127_i32_58 = arith.constant 127 : i32
    %193 = vector.broadcast %c127_i32_58 : i32 to vector<1x128xi32>
    %194 = arith.cmpi slt, %192, %193 : vector<1x128xi32>
    %195 = arith.extui %194 : vector<1x128xi1> to vector<1x128xi32>
    %196 = arith.sitofp %195 : vector<1x128xi32> to vector<1x128xf32>
    %197 = vector.broadcast %196 : vector<1x128xf32> to vector<16x128xf32>
    %198 = arith.mulf %191, %197 : vector<16x128xf32>
    %c126_i32 = arith.constant 126 : i32
    %199 = tpu.dynamic_rotate %164 by %c126_i32 dim 1 : vector<16x128xf32>, i32 -> vector<16x128xf32>
    %200 = tpu.iota {dimensions = array<i32: 1>} : vector<1x128xi32>
    %c126_i32_59 = arith.constant 126 : i32
    %201 = vector.broadcast %c126_i32_59 : i32 to vector<1x128xi32>
    %202 = arith.cmpi slt, %200, %201 : vector<1x128xi32>
    %203 = arith.extui %202 : vector<1x128xi1> to vector<1x128xi32>
    %204 = arith.sitofp %203 : vector<1x128xi32> to vector<1x128xf32>
    %205 = vector.broadcast %204 : vector<1x128xf32> to vector<16x128xf32>
    %206 = arith.mulf %199, %205 : vector<16x128xf32>
    %c125_i32 = arith.constant 125 : i32
    %207 = tpu.dynamic_rotate %164 by %c125_i32 dim 1 : vector<16x128xf32>, i32 -> vector<16x128xf32>
    %208 = tpu.iota {dimensions = array<i32: 1>} : vector<1x128xi32>
    %c125_i32_60 = arith.constant 125 : i32
    %209 = vector.broadcast %c125_i32_60 : i32 to vector<1x128xi32>
    %210 = arith.cmpi slt, %208, %209 : vector<1x128xi32>
    %211 = arith.extui %210 : vector<1x128xi1> to vector<1x128xi32>
    %212 = arith.sitofp %211 : vector<1x128xi32> to vector<1x128xf32>
    %213 = vector.broadcast %212 : vector<1x128xf32> to vector<16x128xf32>
    %214 = arith.mulf %207, %213 : vector<16x128xf32>
    %215 = tpu.concatenate %174, %182, %190, %164, %198, %206, %214 in 0 : vector<16x128xf32>, vector<16x128xf32>, vector<16x128xf32>, vector<16x128xf32>, vector<16x128xf32>, vector<16x128xf32>, vector<16x128xf32> -> vector<112x128xf32>
    %cst_61 = arith.constant dense<0.000000e+00> : vector<32x128xf32>
    %216 = tpu.matmul %165, %215, %cst_61 {dimension_numbers = #tpu.dot_dimension_numbers<[1], [0], [0], [1], [0, 0, 1, 1], [], []>} : vector<32x112xf32>, vector<112x128xf32>, vector<32x128xf32> -> vector<32x128xf32>
    %217 = vector.broadcast %166 : vector<32x1xf32> to vector<32x128xf32>
    %218 = arith.addf %216, %217 : vector<32x128xf32>
    %219 = tpu.iota {dimensions = array<i32: 0>} : vector<128x256xi32>
    %220 = tpu.iota {dimensions = array<i32: 1>} : vector<128x256xi32>
    %c2_i32_62 = arith.constant 2 : i32
    %221 = vector.broadcast %c2_i32_62 : i32 to vector<128x256xi32>
    %222 = arith.muli %221, %219 : vector<128x256xi32>
    %223 = arith.subi %220, %222 : vector<128x256xi32>
    %c0_i32 = arith.constant 0 : i32
    %224 = vector.broadcast %c0_i32 : i32 to vector<128x256xi32>
    %225 = arith.cmpi sge, %223, %224 : vector<128x256xi32>
    %c1_i32_63 = arith.constant 1 : i32
    %226 = vector.broadcast %c1_i32_63 : i32 to vector<128x256xi32>
    %227 = arith.cmpi sle, %223, %226 : vector<128x256xi32>
    %228 = arith.andi %225, %227 : vector<128x256xi1>
    %229 = arith.extui %228 : vector<128x256xi1> to vector<128x256xi32>
    %230 = arith.sitofp %229 : vector<128x256xi32> to vector<128x256xf32>
    %cst_64 = arith.constant dense<0.000000e+00> : vector<32x256xf32>
    %231 = tpu.matmul %218, %230, %cst_64 {dimension_numbers = #tpu.dot_dimension_numbers<[1], [0], [0], [1], [0, 0, 1, 1], [], []>} : vector<32x128xf32>, vector<128x256xf32>, vector<32x256xf32> -> vector<32x256xf32>
    %c376 = arith.constant 376 : index
    %c0_65 = arith.constant 0 : index
    %232 = vector.load %arg3[%c376, %c0_65] : memref<488x256xf32, #tpu.memory_space<vmem>>, vector<16x160xf32>
    %c392 = arith.constant 392 : index
    %c0_66 = arith.constant 0 : index
    %233 = vector.load %arg3[%c392, %c0_66] : memref<488x256xf32, #tpu.memory_space<vmem>>, vector<16x1xf32>
    %c2_i32_67 = arith.constant 2 : i32
    %234 = tpu.dynamic_rotate %231 by %c2_i32_67 dim 1 : vector<32x256xf32>, i32 -> vector<32x256xf32>
    %235 = tpu.iota {dimensions = array<i32: 1>} : vector<1x256xi32>
    %c2_i32_68 = arith.constant 2 : i32
    %236 = vector.broadcast %c2_i32_68 : i32 to vector<1x256xi32>
    %237 = arith.cmpi sge, %235, %236 : vector<1x256xi32>
    %238 = arith.extui %237 : vector<1x256xi1> to vector<1x256xi32>
    %239 = arith.sitofp %238 : vector<1x256xi32> to vector<1x256xf32>
    %240 = vector.broadcast %239 : vector<1x256xf32> to vector<32x256xf32>
    %241 = arith.mulf %234, %240 : vector<32x256xf32>
    %c1_i32_69 = arith.constant 1 : i32
    %242 = tpu.dynamic_rotate %231 by %c1_i32_69 dim 1 : vector<32x256xf32>, i32 -> vector<32x256xf32>
    %243 = tpu.iota {dimensions = array<i32: 1>} : vector<1x256xi32>
    %c1_i32_70 = arith.constant 1 : i32
    %244 = vector.broadcast %c1_i32_70 : i32 to vector<1x256xi32>
    %245 = arith.cmpi sge, %243, %244 : vector<1x256xi32>
    %246 = arith.extui %245 : vector<1x256xi1> to vector<1x256xi32>
    %247 = arith.sitofp %246 : vector<1x256xi32> to vector<1x256xf32>
    %248 = vector.broadcast %247 : vector<1x256xf32> to vector<32x256xf32>
    %249 = arith.mulf %242, %248 : vector<32x256xf32>
    %c255_i32 = arith.constant 255 : i32
    %250 = tpu.dynamic_rotate %231 by %c255_i32 dim 1 : vector<32x256xf32>, i32 -> vector<32x256xf32>
    %251 = tpu.iota {dimensions = array<i32: 1>} : vector<1x256xi32>
    %c255_i32_71 = arith.constant 255 : i32
    %252 = vector.broadcast %c255_i32_71 : i32 to vector<1x256xi32>
    %253 = arith.cmpi slt, %251, %252 : vector<1x256xi32>
    %254 = arith.extui %253 : vector<1x256xi1> to vector<1x256xi32>
    %255 = arith.sitofp %254 : vector<1x256xi32> to vector<1x256xf32>
    %256 = vector.broadcast %255 : vector<1x256xf32> to vector<32x256xf32>
    %257 = arith.mulf %250, %256 : vector<32x256xf32>
    %c254_i32 = arith.constant 254 : i32
    %258 = tpu.dynamic_rotate %231 by %c254_i32 dim 1 : vector<32x256xf32>, i32 -> vector<32x256xf32>
    %259 = tpu.iota {dimensions = array<i32: 1>} : vector<1x256xi32>
    %c254_i32_72 = arith.constant 254 : i32
    %260 = vector.broadcast %c254_i32_72 : i32 to vector<1x256xi32>
    %261 = arith.cmpi slt, %259, %260 : vector<1x256xi32>
    %262 = arith.extui %261 : vector<1x256xi1> to vector<1x256xi32>
    %263 = arith.sitofp %262 : vector<1x256xi32> to vector<1x256xf32>
    %264 = vector.broadcast %263 : vector<1x256xf32> to vector<32x256xf32>
    %265 = arith.mulf %258, %264 : vector<32x256xf32>
    %266 = tpu.concatenate %241, %249, %231, %257, %265 in 0 : vector<32x256xf32>, vector<32x256xf32>, vector<32x256xf32>, vector<32x256xf32>, vector<32x256xf32> -> vector<160x256xf32>
    %cst_73 = arith.constant dense<0.000000e+00> : vector<16x256xf32>
    %267 = tpu.matmul %232, %266, %cst_73 {dimension_numbers = #tpu.dot_dimension_numbers<[1], [0], [0], [1], [0, 0, 1, 1], [], []>} : vector<16x160xf32>, vector<160x256xf32>, vector<16x256xf32> -> vector<16x256xf32>
    %268 = vector.broadcast %233 : vector<16x1xf32> to vector<16x256xf32>
    %269 = arith.addf %267, %268 : vector<16x256xf32>
    %cst_74 = arith.constant 0.000000e+00 : f32
    %270 = vector.broadcast %cst_74 : f32 to vector<16x256xf32>
    %271 = arith.cmpf ogt, %269, %270 : vector<16x256xf32>
    %cst_75 = arith.constant 1.000000e-01 : f32
    %272 = vector.broadcast %cst_75 : f32 to vector<16x256xf32>
    %273 = arith.mulf %272, %269 : vector<16x256xf32>
    %274 = arith.select %271, %269, %273 : vector<16x256xi1>, vector<16x256xf32>
    %275 = tpu.iota {dimensions = array<i32: 0>} : vector<256x512xi32>
    %276 = tpu.iota {dimensions = array<i32: 1>} : vector<256x512xi32>
    %c2_i32_76 = arith.constant 2 : i32
    %277 = vector.broadcast %c2_i32_76 : i32 to vector<256x512xi32>
    %278 = arith.muli %277, %275 : vector<256x512xi32>
    %279 = arith.subi %276, %278 : vector<256x512xi32>
    %c0_i32_77 = arith.constant 0 : i32
    %280 = vector.broadcast %c0_i32_77 : i32 to vector<256x512xi32>
    %281 = arith.cmpi sge, %279, %280 : vector<256x512xi32>
    %c1_i32_78 = arith.constant 1 : i32
    %282 = vector.broadcast %c1_i32_78 : i32 to vector<256x512xi32>
    %283 = arith.cmpi sle, %279, %282 : vector<256x512xi32>
    %284 = arith.andi %281, %283 : vector<256x512xi1>
    %285 = arith.extui %284 : vector<256x512xi1> to vector<256x512xi32>
    %286 = arith.sitofp %285 : vector<256x512xi32> to vector<256x512xf32>
    %cst_79 = arith.constant dense<0.000000e+00> : vector<16x512xf32>
    %287 = tpu.matmul %274, %286, %cst_79 {dimension_numbers = #tpu.dot_dimension_numbers<[1], [0], [0], [1], [0, 0, 1, 1], [], []>} : vector<16x256xf32>, vector<256x512xf32>, vector<16x512xf32> -> vector<16x512xf32>
    %c408 = arith.constant 408 : index
    %c0_80 = arith.constant 0 : index
    %288 = vector.load %arg3[%c408, %c0_80] : memref<488x256xf32, #tpu.memory_space<vmem>>, vector<8x80xf32>
    %c416 = arith.constant 416 : index
    %c0_81 = arith.constant 0 : index
    %289 = vector.load %arg3[%c416, %c0_81] : memref<488x256xf32, #tpu.memory_space<vmem>>, vector<8x1xf32>
    %c2_i32_82 = arith.constant 2 : i32
    %290 = tpu.dynamic_rotate %287 by %c2_i32_82 dim 1 : vector<16x512xf32>, i32 -> vector<16x512xf32>
    %291 = tpu.iota {dimensions = array<i32: 1>} : vector<1x512xi32>
    %c2_i32_83 = arith.constant 2 : i32
    %292 = vector.broadcast %c2_i32_83 : i32 to vector<1x512xi32>
    %293 = arith.cmpi sge, %291, %292 : vector<1x512xi32>
    %294 = arith.extui %293 : vector<1x512xi1> to vector<1x512xi32>
    %295 = arith.sitofp %294 : vector<1x512xi32> to vector<1x512xf32>
    %296 = vector.broadcast %295 : vector<1x512xf32> to vector<16x512xf32>
    %297 = arith.mulf %290, %296 : vector<16x512xf32>
    %c1_i32_84 = arith.constant 1 : i32
    %298 = tpu.dynamic_rotate %287 by %c1_i32_84 dim 1 : vector<16x512xf32>, i32 -> vector<16x512xf32>
    %299 = tpu.iota {dimensions = array<i32: 1>} : vector<1x512xi32>
    %c1_i32_85 = arith.constant 1 : i32
    %300 = vector.broadcast %c1_i32_85 : i32 to vector<1x512xi32>
    %301 = arith.cmpi sge, %299, %300 : vector<1x512xi32>
    %302 = arith.extui %301 : vector<1x512xi1> to vector<1x512xi32>
    %303 = arith.sitofp %302 : vector<1x512xi32> to vector<1x512xf32>
    %304 = vector.broadcast %303 : vector<1x512xf32> to vector<16x512xf32>
    %305 = arith.mulf %298, %304 : vector<16x512xf32>
    %c511_i32 = arith.constant 511 : i32
    %306 = tpu.dynamic_rotate %287 by %c511_i32 dim 1 : vector<16x512xf32>, i32 -> vector<16x512xf32>
    %307 = tpu.iota {dimensions = array<i32: 1>} : vector<1x512xi32>
    %c511_i32_86 = arith.constant 511 : i32
    %308 = vector.broadcast %c511_i32_86 : i32 to vector<1x512xi32>
    %309 = arith.cmpi slt, %307, %308 : vector<1x512xi32>
    %310 = arith.extui %309 : vector<1x512xi1> to vector<1x512xi32>
    %311 = arith.sitofp %310 : vector<1x512xi32> to vector<1x512xf32>
    %312 = vector.broadcast %311 : vector<1x512xf32> to vector<16x512xf32>
    %313 = arith.mulf %306, %312 : vector<16x512xf32>
    %c510_i32 = arith.constant 510 : i32
    %314 = tpu.dynamic_rotate %287 by %c510_i32 dim 1 : vector<16x512xf32>, i32 -> vector<16x512xf32>
    %315 = tpu.iota {dimensions = array<i32: 1>} : vector<1x512xi32>
    %c510_i32_87 = arith.constant 510 : i32
    %316 = vector.broadcast %c510_i32_87 : i32 to vector<1x512xi32>
    %317 = arith.cmpi slt, %315, %316 : vector<1x512xi32>
    %318 = arith.extui %317 : vector<1x512xi1> to vector<1x512xi32>
    %319 = arith.sitofp %318 : vector<1x512xi32> to vector<1x512xf32>
    %320 = vector.broadcast %319 : vector<1x512xf32> to vector<16x512xf32>
    %321 = arith.mulf %314, %320 : vector<16x512xf32>
    %322 = tpu.concatenate %297, %305, %287, %313, %321 in 0 : vector<16x512xf32>, vector<16x512xf32>, vector<16x512xf32>, vector<16x512xf32>, vector<16x512xf32> -> vector<80x512xf32>
    %cst_88 = arith.constant dense<0.000000e+00> : vector<8x512xf32>
    %323 = tpu.matmul %288, %322, %cst_88 {dimension_numbers = #tpu.dot_dimension_numbers<[1], [0], [0], [1], [0, 0, 1, 1], [], []>} : vector<8x80xf32>, vector<80x512xf32>, vector<8x512xf32> -> vector<8x512xf32>
    %324 = vector.broadcast %289 : vector<8x1xf32> to vector<8x512xf32>
    %325 = arith.addf %323, %324 : vector<8x512xf32>
    %cst_89 = arith.constant 0.000000e+00 : f32
    %326 = vector.broadcast %cst_89 : f32 to vector<8x512xf32>
    %327 = arith.cmpf ogt, %325, %326 : vector<8x512xf32>
    %cst_90 = arith.constant 1.000000e-01 : f32
    %328 = vector.broadcast %cst_90 : f32 to vector<8x512xf32>
    %329 = arith.mulf %328, %325 : vector<8x512xf32>
    %330 = arith.select %327, %325, %329 : vector<8x512xi1>, vector<8x512xf32>
    %c3_i32_91 = arith.constant 3 : i32
    %331 = tpu.dynamic_rotate %330 by %c3_i32_91 dim 1 : vector<8x512xf32>, i32 -> vector<8x512xf32>
    %332 = tpu.iota {dimensions = array<i32: 1>} : vector<1x512xi32>
    %c3_i32_92 = arith.constant 3 : i32
    %333 = vector.broadcast %c3_i32_92 : i32 to vector<1x512xi32>
    %334 = arith.cmpi sge, %332, %333 : vector<1x512xi32>
    %335 = arith.extui %334 : vector<1x512xi1> to vector<1x512xi32>
    %336 = arith.sitofp %335 : vector<1x512xi32> to vector<1x512xf32>
    %337 = vector.broadcast %336 : vector<1x512xf32> to vector<8x512xf32>
    %338 = arith.mulf %331, %337 : vector<8x512xf32>
    %c2_i32_93 = arith.constant 2 : i32
    %339 = tpu.dynamic_rotate %330 by %c2_i32_93 dim 1 : vector<8x512xf32>, i32 -> vector<8x512xf32>
    %340 = tpu.iota {dimensions = array<i32: 1>} : vector<1x512xi32>
    %c2_i32_94 = arith.constant 2 : i32
    %341 = vector.broadcast %c2_i32_94 : i32 to vector<1x512xi32>
    %342 = arith.cmpi sge, %340, %341 : vector<1x512xi32>
    %343 = arith.extui %342 : vector<1x512xi1> to vector<1x512xi32>
    %344 = arith.sitofp %343 : vector<1x512xi32> to vector<1x512xf32>
    %345 = vector.broadcast %344 : vector<1x512xf32> to vector<8x512xf32>
    %346 = arith.mulf %339, %345 : vector<8x512xf32>
    %c1_i32_95 = arith.constant 1 : i32
    %347 = tpu.dynamic_rotate %330 by %c1_i32_95 dim 1 : vector<8x512xf32>, i32 -> vector<8x512xf32>
    %348 = tpu.iota {dimensions = array<i32: 1>} : vector<1x512xi32>
    %c1_i32_96 = arith.constant 1 : i32
    %349 = vector.broadcast %c1_i32_96 : i32 to vector<1x512xi32>
    %350 = arith.cmpi sge, %348, %349 : vector<1x512xi32>
    %351 = arith.extui %350 : vector<1x512xi1> to vector<1x512xi32>
    %352 = arith.sitofp %351 : vector<1x512xi32> to vector<1x512xf32>
    %353 = vector.broadcast %352 : vector<1x512xf32> to vector<8x512xf32>
    %354 = arith.mulf %347, %353 : vector<8x512xf32>
    %c511_i32_97 = arith.constant 511 : i32
    %355 = tpu.dynamic_rotate %330 by %c511_i32_97 dim 1 : vector<8x512xf32>, i32 -> vector<8x512xf32>
    %356 = tpu.iota {dimensions = array<i32: 1>} : vector<1x512xi32>
    %c511_i32_98 = arith.constant 511 : i32
    %357 = vector.broadcast %c511_i32_98 : i32 to vector<1x512xi32>
    %358 = arith.cmpi slt, %356, %357 : vector<1x512xi32>
    %359 = arith.extui %358 : vector<1x512xi1> to vector<1x512xi32>
    %360 = arith.sitofp %359 : vector<1x512xi32> to vector<1x512xf32>
    %361 = vector.broadcast %360 : vector<1x512xf32> to vector<8x512xf32>
    %362 = arith.mulf %355, %361 : vector<8x512xf32>
    %c510_i32_99 = arith.constant 510 : i32
    %363 = tpu.dynamic_rotate %330 by %c510_i32_99 dim 1 : vector<8x512xf32>, i32 -> vector<8x512xf32>
    %364 = tpu.iota {dimensions = array<i32: 1>} : vector<1x512xi32>
    %c510_i32_100 = arith.constant 510 : i32
    %365 = vector.broadcast %c510_i32_100 : i32 to vector<1x512xi32>
    %366 = arith.cmpi slt, %364, %365 : vector<1x512xi32>
    %367 = arith.extui %366 : vector<1x512xi1> to vector<1x512xi32>
    %368 = arith.sitofp %367 : vector<1x512xi32> to vector<1x512xf32>
    %369 = vector.broadcast %368 : vector<1x512xf32> to vector<8x512xf32>
    %370 = arith.mulf %363, %369 : vector<8x512xf32>
    %c509_i32 = arith.constant 509 : i32
    %371 = tpu.dynamic_rotate %330 by %c509_i32 dim 1 : vector<8x512xf32>, i32 -> vector<8x512xf32>
    %372 = tpu.iota {dimensions = array<i32: 1>} : vector<1x512xi32>
    %c509_i32_101 = arith.constant 509 : i32
    %373 = vector.broadcast %c509_i32_101 : i32 to vector<1x512xi32>
    %374 = arith.cmpi slt, %372, %373 : vector<1x512xi32>
    %375 = arith.extui %374 : vector<1x512xi1> to vector<1x512xi32>
    %376 = arith.sitofp %375 : vector<1x512xi32> to vector<1x512xf32>
    %377 = vector.broadcast %376 : vector<1x512xf32> to vector<8x512xf32>
    %378 = arith.mulf %371, %377 : vector<8x512xf32>
    %379 = tpu.concatenate %338, %346, %354, %330, %362, %370, %378 in 0 : vector<8x512xf32>, vector<8x512xf32>, vector<8x512xf32>, vector<8x512xf32>, vector<8x512xf32>, vector<8x512xf32>, vector<8x512xf32> -> vector<56x512xf32>
    %c424 = arith.constant 424 : index
    %c0_102 = arith.constant 0 : index
    %380 = vector.load %arg3[%c424, %c0_102] : memref<488x256xf32, #tpu.memory_space<vmem>>, vector<56x1xf32>
    %381 = vector.broadcast %380 : vector<56x1xf32> to vector<56x512xf32>
    %382 = arith.mulf %379, %381 : vector<56x512xf32>
    %cst_103 = arith.constant dense<0.000000e+00> : vector<512xf32>
    %383 = vector.multi_reduction <add>, %382, %cst_103 [0] : vector<56x512xf32> to vector<512xf32>
    %384 = vector.shape_cast %383 : vector<512xf32> to vector<1x512xf32>
    %c480 = arith.constant 480 : index
    %c0_104 = arith.constant 0 : index
    %385 = vector.load %arg3[%c480, %c0_104] : memref<488x256xf32, #tpu.memory_space<vmem>>, vector<1x1xf32>
    %386 = vector.broadcast %385 : vector<1x1xf32> to vector<1x512xf32>
    %387 = arith.addf %384, %386 : vector<1x512xf32>
    %388 = math.tanh %387 : vector<1x512xf32>
    %c0_105 = arith.constant 0 : index
    %c0_106 = arith.constant 0 : index
    %389 = vector.load %arg4[%c0_105, %c0_106] : memref<1x512xf32, #tpu.memory_space<vmem>>, vector<1x512xf32>
    tpu.vector_store %arg4[%c0_105, %c0_106], %388 {strides = array<i32>} : memref<1x512xf32, #tpu.memory_space<vmem>>, vector<1x512xf32>,
    return
  }
}

</mosaic_0001>

<llo_original>
// kernel: vits_forward.1
$region0: #{vits_forward.1}
  #allocation0 [shape = 'u32[]', space=smem, size = 0x4, offset = 0x4, fixed_abs, tag = 'smem constant byte address 0x4 - core index']
  #allocation1 [shape = 'u32[144,128]{1,0:T(1,128)}', space=vmem, size = 0x12000, scoped, tag = 'internal scratch']
  #allocation2 [shape = 's32[1,1]{1,0:T(1,128)S(6)}', space=smem, size = 0x200, scoped, tag = 'scoped memory for vits_forward.1']
  %s0 = inlined_call_operand.vmem [shape: s32[8,1], index: 0, kind: input, shape index: {}]
  %s1 = inlined_call_operand.<no memory space> [shape: s32[1,1], index: 1, kind: input, shape index: {}]
  %s2 = inlined_call_operand.vmem [shape: f32[24,128], index: 2, kind: input, shape index: {}]
  %s3 = inlined_call_operand.hbm [shape: f32[488,256], index: 3, kind: input, shape index: {}]
  %s4 = inlined_call_operand.hbm [shape: f32[1,512], index: 4, kind: output, shape index: {}]
  %s5 = sld [smem:[#allocation0]]
  $region30: #{vits_forward.1} parent=0
    _
  %s7 = ssub.s32 1, %s5
  %s8 = scalar_select 0, %s7, %s5
  %9 = sst [smem:[#allocation2]] %s1
  $region1: #{vits_forward.1} parent=0
    #allocation3 [shape = 'u8[499712]{0}', space=vmem, size = 0x7a000, scoped, tag = 'input window, operand 3, single buffered']
    #allocation4 [shape = 's32[1]{0}', space=sflag, size = 0x4, scoped, tag = 'scoped memory for vits_forward.1']
    #allocation5 [shape = 's32[1]{0}', space=sflag, size = 0x4, scoped, tag = 'scoped memory for vits_forward.1']
    #allocation6 [shape = 'u8[2048]{0}', space=vmem, size = 0x800, scoped, tag = 'output window, operand 0, single buffered']
    %10 = vsyncpa [#allocation4], 0
    %11 = vsyncpa [#allocation5], 0
    // Predicated region
    $region2: #{vits_forward.1} parent=1 // pred_check
      _
    $region3: #{vits_forward.1} parent=1 // pred_check_branch
      %13 = sbr.rel (0) target = $region5
    $region4: #{vits_forward.1} parent=1 // pred_region
      _
    $region5: #{vits_forward.1} parent=1 // pred_fallthru
      _
    // Predicated region
    $region6: #{vits_forward.1} parent=1 // pred_check
      _
    $region7: #{vits_forward.1} parent=1 // pred_check_branch
      %15 = sbr.rel (0) target = $region9
    $region8: #{vits_forward.1} parent=1 // pred_region
      _
    $region9: #{vits_forward.1} parent=1 // pred_fallthru
      _
    // Predicated region
    $region10: #{vits_forward.1} parent=1 // pred_check
      _
    $region11: #{vits_forward.1} parent=1 // pred_check_branch
      %17 = sbr.rel (0) target = $region13
    $region12: #{vits_forward.1} parent=1 // pred_region
      _
    $region13: #{vits_forward.1} parent=1 // pred_fallthru
      _
    // Predicated region
    $region14: #{vits_forward.1} parent=1 // pred_check
      _
    $region15: #{vits_forward.1} parent=1 // pred_check_branch
      %19 = sbr.rel (0) target = $region17
    $region16: #{vits_forward.1} parent=1 // pred_region
      %s21 = ssub.s32 15616, 15616
      %22 = vsyncadd [#allocation4], %s21
      %s23 = sshll.u32 [#allocation3], 4
      %s24 = int_to_ptr.vmem [resolvable:$true] %s23
      %29 = dma.hbm_to_vmem [thread:$0]  %s3, 15616, %s24, [#allocation4], 256, 256, 16
    $region17: #{vits_forward.1} parent=1 // pred_fallthru
      _
    // Predicated region
    $region18: #{vits_forward.1} parent=1 // pred_check
      _
    $region19: #{vits_forward.1} parent=1 // pred_check_branch
      %31 = sbr.rel (0) target = $region21
    $region20: #{vits_forward.1} parent=1 // pred_region
      %32 = dma.done [#allocation4], 15616
    $region21: #{vits_forward.1} parent=1 // pred_fallthru
      _
    %s33 = sld [smem:[#allocation2]]
    %v34 = vlaneseq
    %v35 = vshrl.u32 %v34, 7
    %v36 = vstv %s33
    %vm37 = vcmp.lt.s32.totalorder %v35, %v36
    %v38 = vsel %vm37, 1, 0
    %v39 = vcvt.s32.f32 %v38
    %v40 = vlaneseq
    %v41 = vand.u32 %v40, 127
    %vm42 = vcmp.lt.s32.totalorder %v41, %v36
    %v43 = vsel %vm42, 1, 0
    %v44 = vcvt.s32.f32 %v43
    %v45 = vld [vmem:[%s0] sm:$0xff]
    %46 = vset.pattern.permute.xlu0 0
    %47 = vperm.xlu0 %46, %v45
    %v48 = vpop.permute.xlu0 %47
    %vm49 = vcmp.eq.s32.totalorder %v41, %v48
    %v50 = vsel %vm49, 1, 0
    %v51 = vcvt.s32.f32 %v50
    %v52 = vld [vmem:[#allocation3] sm:$0xff]
    %v53 = vld [vmem:[#allocation3 + $0x10] sm:$0xff]
    %v54 = vld [vmem:[#allocation3 + $0x20] sm:$0xff]
    %v55 = vld [vmem:[#allocation3 + $0x30] sm:$0xff]
    %v56 = vld [vmem:[#allocation3 + $0x40] sm:$0xff]
    %v57 = vld [vmem:[#allocation3 + $0x50] sm:$0xff]
    %v58 = vld [vmem:[#allocation3 + $0x60] sm:$0xff]
    %v59 = vld [vmem:[#allocation3 + $0x70] sm:$0xff]
    %vm60 = vcmask 523264
    %v62 = vsel %vm60, %v51, 0
    %64 = vmatprep.subr.mxu0 0.0
    %65 = vmatpush1.msra.mxu0 %v52
    %66 = vmatprep.subr.mxu0 0.0
    %67 = vmatpush1.msra.mxu0 %v53
    %68 = vmatprep.subr.mxu0 0.0
    %69 = vmatpush1.msra.mxu0 %v54
    %70 = vmatprep.subr.mxu0 0.0
    %71 = vmatpush1.msra.mxu0 %v55
    %72 = vmatprep.subr.mxu0 0.0
    %73 = vmatpush1.msra.mxu0 %v56
    %74 = vmatprep.subr.mxu0 0.0
    %75 = vmatpush1.msra.mxu0 %v57
    %76 = vmatprep.subr.mxu0 0.0
    %77 = vmatpush1.msra.mxu0 %v58
    %78 = vmatprep.subr.mxu0 0.0
    %79 = vmatpush1.msra.mxu0 %v59
    %80 = vmatprep.subr.mxu0 0.0
    %81 = vmatpush1.msra.mxu0 0.0
    %82 = vmatprep.subr.mxu0 0.0
    %83 = vmatpush1.msra.mxu0 0.0
    %84 = vmatprep.subr.mxu0 0.0
    %85 = vmatpush1.msra.mxu0 0.0
    %86 = vmatprep.subr.mxu0 0.0
    %87 = vmatpush1.msra.mxu0 0.0
    %88 = vmatprep.subr.mxu0 0.0
    %89 = vmatpush1.msra.mxu0 0.0
    %90 = vmatprep.subr.mxu0 0.0
    %91 = vmatpush1.msra.mxu0 0.0
    %92 = vmatprep.subr.mxu0 0.0
    %93 = vmatpush1.msra.mxu0 0.0
    %94 = vmatprep.subr.mxu0 0.0
    %95 = vmatpush1.msra.mxu0 0.0
    %96 = vmatprep.subr.mxu0 0.0
    %97 = vmatpush1.msra.mxu0 0.0
    %98 = vmatprep.subr.mxu0 0.0
    %99 = vmatpush1.msra.mxu0 0.0
    %100 = vmatprep.subr.mxu0 0.0
    %101 = vmatpush1.msra.mxu0 0.0
    %102 = vmatprep.subr.mxu0 0.0
    %103 = vmatpush1.msra.mxu0 0.0
    %104 = vmatprep.subr.mxu0 0.0
    %105 = vmatpush1.msra.mxu0 0.0
    %106 = vmatprep.subr.mxu0 0.0
    %107 = vmatpush1.msra.mxu0 0.0
    %108 = vmatprep.subr.mxu0 0.0
    %109 = vmatpush1.msra.mxu0 0.0
    %110 = vmatprep.subr.mxu0 0.0
    %111 = vmatpush1.msra.mxu0 0.0
    %112 = vmatprep.subr.mxu0 0.0
    %113 = vmatpush1.msra.mxu0 0.0
    %114 = vmatprep.subr.mxu0 0.0
    %115 = vmatpush1.msra.mxu0 0.0
    %116 = vmatprep.subr.mxu0 0.0
    %117 = vmatpush1.msra.mxu0 0.0
    %118 = vmatprep.subr.mxu0 0.0
    %119 = vmatpush1.msra.mxu0 0.0
    %120 = vmatprep.subr.mxu0 0.0
    %121 = vmatpush1.msra.mxu0 0.0
    %122 = vmatprep.subr.mxu0 0.0
    %123 = vmatpush1.msra.mxu0 0.0
    %124 = vmatprep.subr.mxu0 0.0
    %125 = vmatpush1.msra.mxu0 0.0
    %126 = vmatprep.subr.mxu0 0.0
    %127 = vmatpush1.msra.mxu0 0.0
    %128 = vmatprep.mubr.f32.mxu0 0.0
    %129 = vmatmul.mubr.f32.gmra.mrb[0].mxu0 %v62
    %v130 = vpop.f32.mrb[0].mxu0
    %v131 = vadd.f32 0.0, %v130
    %v132 = vpop.f32.mrb[0].mxu0
    %133 = vdwg.mxu0
    %v134 = vmul.f32 %v131, 5.656854
    %v135 = vmul.f32 %v134, %v39
    %v136 = vld [vmem:[#allocation3 + $0x80] sm:$0xff]
    %v137 = vld [vmem:[#allocation3 + $0x90] sm:$0xff]
    %v138 = vld [vmem:[#allocation3 + $0xa0] sm:$0xff]
    %v139 = vld [vmem:[#allocation3 + $0xb0] sm:$0xff]
    %v140 = vld [vmem:[#allocation3 + $0xc0] ss:$0 sm:$0xff]
    %vm141 = vcmask 261120
    %v143 = vsel %vm141, %v135, 0
    %145 = vmatprep.subr.mxu0 0.0
    %146 = vmatpush1.msra.mxu0 %v136
    %147 = vmatprep.subr.mxu0 0.0
    %148 = vmatpush1.msra.mxu0 %v137
    %149 = vmatprep.subr.mxu0 0.0
    %150 = vmatpush1.msra.mxu0 %v138
    %151 = vmatprep.subr.mxu0 0.0
    %152 = vmatpush1.msra.mxu0 %v139
    %153 = vmatprep.subr.mxu0 0.0
    %154 = vmatpush1.msra.mxu0 0.0
    %155 = vmatprep.subr.mxu0 0.0
    %156 = vmatpush1.msra.mxu0 0.0
    %157 = vmatprep.subr.mxu0 0.0
    %158 = vmatpush1.msra.mxu0 0.0
    %159 = vmatprep.subr.mxu0 0.0
    %160 = vmatpush1.msra.mxu0 0.0
    %161 = vmatprep.subr.mxu0 0.0
    %162 = vmatpush1.msra.mxu0 0.0
    %163 = vmatprep.subr.mxu0 0.0
    %164 = vmatpush1.msra.mxu0 0.0
    %165 = vmatprep.subr.mxu0 0.0
    %166 = vmatpush1.msra.mxu0 0.0
    %167 = vmatprep.subr.mxu0 0.0
    %168 = vmatpush1.msra.mxu0 0.0
    %169 = vmatprep.subr.mxu0 0.0
    %170 = vmatpush1.msra.mxu0 0.0
    %171 = vmatprep.subr.mxu0 0.0
    %172 = vmatpush1.msra.mxu0 0.0
    %173 = vmatprep.subr.mxu0 0.0
    %174 = vmatpush1.msra.mxu0 0.0
    %175 = vmatprep.subr.mxu0 0.0
    %176 = vmatpush1.msra.mxu0 0.0
    %177 = vmatprep.subr.mxu0 0.0
    %178 = vmatpush1.msra.mxu0 0.0
    %179 = vmatprep.subr.mxu0 0.0
    %180 = vmatpush1.msra.mxu0 0.0
    %181 = vmatprep.subr.mxu0 0.0
    %182 = vmatpush1.msra.mxu0 0.0
    %183 = vmatprep.subr.mxu0 0.0
    %184 = vmatpush1.msra.mxu0 0.0
    %185 = vmatprep.subr.mxu0 0.0
    %186 = vmatpush1.msra.mxu0 0.0
    %187 = vmatprep.subr.mxu0 0.0
    %188 = vmatpush1.msra.mxu0 0.0
    %189 = vmatprep.subr.mxu0 0.0
    %190 = vmatpush1.msra.mxu0 0.0
    %191 = vmatprep.subr.mxu0 0.0
    %192 = vmatpush1.msra.mxu0 0.0
    %193 = vmatprep.subr.mxu0 0.0
    %194 = vmatpush1.msra.mxu0 0.0
    %195 = vmatprep.subr.mxu0 0.0
    %196 = vmatpush1.msra.mxu0 0.0
    %197 = vmatprep.subr.mxu0 0.0
    %198 = vmatpush1.msra.mxu0 0.0
    %199 = vmatprep.subr.mxu0 0.0
    %200 = vmatpush1.msra.mxu0 0.0
    %201 = vmatprep.subr.mxu0 0.0
    %202 = vmatpush1.msra.mxu0 0.0
    %203 = vmatprep.subr.mxu0 0.0
    %204 = vmatpush1.msra.mxu0 0.0
    %205 = vmatprep.subr.mxu0 0.0
    %206 = vmatpush1.msra.mxu0 0.0
    %207 = vmatprep.subr.mxu0 0.0
    %208 = vmatpush1.msra.mxu0 0.0
    %209 = vmatprep.mubr.f32.mxu0 0.0
    %210 = vmatmul.mubr.f32.gmra.mrb[0].mxu0 %v143
    %v211 = vpop.f32.mrb[0].mxu0
    %v212 = vadd.f32 %v140, %v211
    %v213 = vpop.f32.mrb[0].mxu0
    %214 = vdwg.mxu0
    %v215 = vmax.f32 %v212, 0.0
    %v216 = vmul.f32 %v215, %v39
    %v217 = vld [vmem:[#allocation3 + $0xd0] sm:$0xff]
    %v218 = vld [vmem:[#allocation3 + $0xe0] sm:$0xff]
    %v219 = vld [vmem:[#allocation3 + $0xf0] sm:$0xff]
    %v220 = vld [vmem:[#allocation3 + $0x100] sm:$0xff]
    %v222 = vsel %vm141, %v216, 0
    %224 = vmatprep.subr.mxu0 0.0
    %225 = vmatpush1.msra.mxu0 %v217
    %226 = vmatprep.subr.mxu0 0.0
    %227 = vmatpush1.msra.mxu0 %v218
    %228 = vmatprep.subr.mxu0 0.0
    %229 = vmatpush1.msra.mxu0 %v219
    %230 = vmatprep.subr.mxu0 0.0
    %231 = vmatpush1.msra.mxu0 %v220
    %232 = vmatprep.subr.mxu0 0.0
    %233 = vmatpush1.msra.mxu0 0.0
    %234 = vmatprep.subr.mxu0 0.0
    %235 = vmatpush1.msra.mxu0 0.0
    %236 = vmatprep.subr.mxu0 0.0
    %237 = vmatpush1.msra.mxu0 0.0
    %238 = vmatprep.subr.mxu0 0.0
    %239 = vmatpush1.msra.mxu0 0.0
    %240 = vmatprep.subr.mxu0 0.0
    %241 = vmatpush1.msra.mxu0 0.0
    %242 = vmatprep.subr.mxu0 0.0
    %243 = vmatpush1.msra.mxu0 0.0
    %244 = vmatprep.subr.mxu0 0.0
    %245 = vmatpush1.msra.mxu0 0.0
    %246 = vmatprep.subr.mxu0 0.0
    %247 = vmatpush1.msra.mxu0 0.0
    %248 = vmatprep.subr.mxu0 0.0
    %249 = vmatpush1.msra.mxu0 0.0
    %250 = vmatprep.subr.mxu0 0.0
    %251 = vmatpush1.msra.mxu0 0.0
    %252 = vmatprep.subr.mxu0 0.0
    %253 = vmatpush1.msra.mxu0 0.0
    %254 = vmatprep.subr.mxu0 0.0
    %255 = vmatpush1.msra.mxu0 0.0
    %256 = vmatprep.subr.mxu0 0.0
    %257 = vmatpush1.msra.mxu0 0.0
    %258 = vmatprep.subr.mxu0 0.0
    %259 = vmatpush1.msra.mxu0 0.0
    %260 = vmatprep.subr.mxu0 0.0
    %261 = vmatpush1.msra.mxu0 0.0
    %262 = vmatprep.subr.mxu0 0.0
    %263 = vmatpush1.msra.mxu0 0.0
    %264 = vmatprep.subr.mxu0 0.0
    %265 = vmatpush1.msra.mxu0 0.0
    %266 = vmatprep.subr.mxu0 0.0
    %267 = vmatpush1.msra.mxu0 0.0
    %268 = vmatprep.subr.mxu0 0.0
    %269 = vmatpush1.msra.mxu0 0.0
    %270 = vmatprep.subr.mxu0 0.0
    %271 = vmatpush1.msra.mxu0 0.0
    %272 = vmatprep.subr.mxu0 0.0
    %273 = vmatpush1.msra.mxu0 0.0
    %274 = vmatprep.subr.mxu0 0.0
    %275 = vmatpush1.msra.mxu0 0.0
    %276 = vmatprep.subr.mxu0 0.0
    %277 = vmatpush1.msra.mxu0 0.0
    %278 = vmatprep.subr.mxu0 0.0
    %279 = vmatpush1.msra.mxu0 0.0
    %280 = vmatprep.subr.mxu0 0.0
    %281 = vmatpush1.msra.mxu0 0.0
    %282 = vmatprep.subr.mxu0 0.0
    %283 = vmatpush1.msra.mxu0 0.0
    %284 = vmatprep.subr.mxu0 0.0
    %285 = vmatpush1.msra.mxu0 0.0
    %286 = vmatprep.subr.mxu0 0.0
    %287 = vmatpush1.msra.mxu0 0.0
    %288 = vmatprep.mubr.f32.mxu0 0.0
    %289 = vmatmul.mubr.f32.gmra.mrb[0].mxu0 %v222
    %v290 = vpop.f32.mrb[0].mxu0
    %v291 = vadd.f32 0.0, %v290
    %v292 = vpop.f32.mrb[0].mxu0
    %293 = vdwg.mxu0
    %295 = vrot.lane.b32.xlu0 %v291, 96
    %v296 = vpop.permute.xlu0 %295
    %v297 = vsel %vm141, %v291, 0
    %v299 = vsel %vm141, %v296, 0
    %301 = vmatprep.subr.mxu0 0.0
    %302 = vmatpush1.xpose.msra.mxu0 %v299
    %303 = vmatprep.subr.mxu0 0.0
    %304 = vmatpush1.xpose.msra.mxu0 0.0
    %305 = vmatprep.subr.mxu0 0.0
    %306 = vmatpush1.xpose.msra.mxu0 0.0
    %307 = vmatprep.subr.mxu0 0.0
    %308 = vmatpush1.xpose.msra.mxu0 0.0
    %309 = vmatprep.subr.mxu0 0.0
    %310 = vmatpush1.xpose.msra.mxu0 0.0
    %311 = vmatprep.subr.mxu0 0.0
    %312 = vmatpush1.xpose.msra.mxu0 0.0
    %313 = vmatprep.subr.mxu0 0.0
    %314 = vmatpush1.xpose.msra.mxu0 0.0
    %315 = vmatprep.subr.mxu0 0.0
    %316 = vmatpush1.xpose.msra.mxu0 0.0
    %317 = vmatprep.subr.mxu0 0.0
    %318 = vmatpush1.xpose.msra.mxu0 0.0
    %319 = vmatprep.subr.mxu0 0.0
    %320 = vmatpush1.xpose.msra.mxu0 0.0
    %321 = vmatprep.subr.mxu0 0.0
    %322 = vmatpush1.xpose.msra.mxu0 0.0
    %323 = vmatprep.subr.mxu0 0.0
    %324 = vmatpush1.xpose.msra.mxu0 0.0
    %325 = vmatprep.subr.mxu0 0.0
    %326 = vmatpush1.xpose.msra.mxu0 0.0
    %327 = vmatprep.subr.mxu0 0.0
    %328 = vmatpush1.xpose.msra.mxu0 0.0
    %329 = vmatprep.subr.mxu0 0.0
    %330 = vmatpush1.xpose.msra.mxu0 0.0
    %331 = vmatprep.subr.mxu0 0.0
    %332 = vmatpush1.xpose.msra.mxu0 0.0
    %333 = vmatprep.subr.mxu0 0.0
    %334 = vmatpush1.xpose.msra.mxu0 0.0
    %335 = vmatprep.subr.mxu0 0.0
    %336 = vmatpush1.xpose.msra.mxu0 0.0
    %337 = vmatprep.subr.mxu0 0.0
    %338 = vmatpush1.xpose.msra.mxu0 0.0
    %339 = vmatprep.subr.mxu0 0.0
    %340 = vmatpush1.xpose.msra.mxu0 0.0
    %341 = vmatprep.subr.mxu0 0.0
    %342 = vmatpush1.xpose.msra.mxu0 0.0
    %343 = vmatprep.subr.mxu0 0.0
    %344 = vmatpush1.xpose.msra.mxu0 0.0
    %345 = vmatprep.subr.mxu0 0.0
    %346 = vmatpush1.xpose.msra.mxu0 0.0
    %347 = vmatprep.subr.mxu0 0.0
    %348 = vmatpush1.xpose.msra.mxu0 0.0
    %349 = vmatprep.subr.mxu0 0.0
    %350 = vmatpush1.xpose.msra.mxu0 0.0
    %351 = vmatprep.subr.mxu0 0.0
    %352 = vmatpush1.xpose.msra.mxu0 0.0
    %353 = vmatprep.subr.mxu0 0.0
    %354 = vmatpush1.xpose.msra.mxu0 0.0
    %355 = vmatprep.subr.mxu0 0.0
    %356 = vmatpush1.xpose.msra.mxu0 0.0
    %357 = vmatprep.subr.mxu0 0.0
    %358 = vmatpush1.xpose.msra.mxu0 0.0
    %359 = vmatprep.subr.mxu0 0.0
    %360 = vmatpush1.xpose.msra.mxu0 0.0
    %361 = vmatprep.subr.mxu0 0.0
    %362 = vmatpush1.xpose.msra.mxu0 0.0
    %363 = vmatprep.subr.mxu0 0.0
    %364 = vmatpush1.xpose.msra.mxu0 0.0
    %365 = vmatprep.mubr.f32.mxu0 0.0
    %366 = vmatmul.mubr.f32.gmra.mrb[0].mxu0 %v297
    %v367 = vpop.f32.mrb[0].mxu0
    %v368 = vadd.f32 0.0, %v367
    %v369 = vpop.f32.mrb[0].mxu0
    %370 = vdwg.mxu0
    %v371 = vmul.f32 %v368, 0.17677669
    %vm372 = vcmp.gt.f32.partialorder %v44, 0.0
    %v373 = vsel %vm372, 0.0, -1e+09
    %v374 = vadd.f32 %v371, %v373
    %vm375 = vcmask 64512
    %v376 = vsel %vm375, %v374, -inf
    %377 = vmax.xlane.f32.xlu0 %v376
    %v378 = vpop.xlane.xlu0 %377
    %v379 = vsub.f32 %v374, %v378
    %v380 = vmul.f32 %v379, 1.442695
    %v381 = vpow.pop %v380
    %v382 = vsel %vm375, %v381, 0.0
    %383 = vadd.xlane.f32.xlu0 %v382
    %v384 = vpop.xlane.xlu0 %383
    %v385 = vrcp.pop %v384
    %v386 = vmul.f32 %v381, %v385
    %387 = vrot.lane.b32.xlu0 %v291, 64
    %v388 = vpop.permute.xlu0 %387
    %v391 = vsel %vm375, %v386, 0
    %393 = vmatprep.subr.mxu0 0.0
    %394 = vmatpush1.msra.mxu0 %v388
    %395 = vmatprep.subr.mxu0 0.0
    %396 = vmatpush1.msra.mxu0 0.0
    %397 = vmatprep.subr.mxu0 0.0
    %398 = vmatpush1.msra.mxu0 0.0
    %399 = vmatprep.subr.mxu0 0.0
    %400 = vmatpush1.msra.mxu0 0.0
    %401 = vmatprep.subr.mxu0 0.0
    %402 = vmatpush1.msra.mxu0 0.0
    %403 = vmatprep.subr.mxu0 0.0
    %404 = vmatpush1.msra.mxu0 0.0
    %405 = vmatprep.subr.mxu0 0.0
    %406 = vmatpush1.msra.mxu0 0.0
    %407 = vmatprep.subr.mxu0 0.0
    %408 = vmatpush1.msra.mxu0 0.0
    %409 = vmatprep.subr.mxu0 0.0
    %410 = vmatpush1.msra.mxu0 0.0
    %411 = vmatprep.subr.mxu0 0.0
    %412 = vmatpush1.msra.mxu0 0.0
    %413 = vmatprep.subr.mxu0 0.0
    %414 = vmatpush1.msra.mxu0 0.0
    %415 = vmatprep.subr.mxu0 0.0
    %416 = vmatpush1.msra.mxu0 0.0
    %417 = vmatprep.subr.mxu0 0.0
    %418 = vmatpush1.msra.mxu0 0.0
    %419 = vmatprep.subr.mxu0 0.0
    %420 = vmatpush1.msra.mxu0 0.0
    %421 = vmatprep.subr.mxu0 0.0
    %422 = vmatpush1.msra.mxu0 0.0
    %423 = vmatprep.subr.mxu0 0.0
    %424 = vmatpush1.msra.mxu0 0.0
    %425 = vmatprep.subr.mxu0 0.0
    %426 = vmatpush1.msra.mxu0 0.0
    %427 = vmatprep.subr.mxu0 0.0
    %428 = vmatpush1.msra.mxu0 0.0
    %429 = vmatprep.subr.mxu0 0.0
    %430 = vmatpush1.msra.mxu0 0.0
    %431 = vmatprep.subr.mxu0 0.0
    %432 = vmatpush1.msra.mxu0 0.0
    %433 = vmatprep.subr.mxu0 0.0
    %434 = vmatpush1.msra.mxu0 0.0
    %435 = vmatprep.subr.mxu0 0.0
    %436 = vmatpush1.msra.mxu0 0.0
    %437 = vmatprep.subr.mxu0 0.0
    %438 = vmatpush1.msra.mxu0 0.0
    %439 = vmatprep.subr.mxu0 0.0
    %440 = vmatpush1.msra.mxu0 0.0
    %441 = vmatprep.subr.mxu0 0.0
    %442 = vmatpush1.msra.mxu0 0.0
    %443 = vmatprep.subr.mxu0 0.0
    %444 = vmatpush1.msra.mxu0 0.0
    %445 = vmatprep.subr.mxu0 0.0
    %446 = vmatpush1.msra.mxu0 0.0
    %447 = vmatprep.subr.mxu0 0.0
    %448 = vmatpush1.msra.mxu0 0.0
    %449 = vmatprep.subr.mxu0 0.0
    %450 = vmatpush1.msra.mxu0 0.0
    %451 = vmatprep.subr.mxu0 0.0
    %452 = vmatpush1.msra.mxu0 0.0
    %453 = vmatprep.subr.mxu0 0.0
    %454 = vmatpush1.msra.mxu0 0.0
    %455 = vmatprep.subr.mxu0 0.0
    %456 = vmatpush1.msra.mxu0 0.0
    %457 = vmatprep.mubr.f32.mxu0 0.0
    %458 = vmatmul.mubr.f32.gmra.mrb[0].mxu0 %v391
    %v459 = vpop.f32.mrb[0].mxu0
    %v460 = vadd.f32 0.0, %v459
    %v461 = vpop.f32.mrb[0].mxu0
    %462 = vdwg.mxu0
    %v463 = vadd.f32 %v216, %v460
    %v464 = vmul.f32 %v463, %v39
    %v465 = vld [vmem:[#allocation3 + $0x110] sm:$0xff]
    %v466 = vld [vmem:[#allocation3 + $0x120] sm:$0xff]
    %v467 = vld [vmem:[#allocation3 + $0x130] sm:$0xff]
    %v468 = vld [vmem:[#allocation3 + $0x140] sm:$0xff]
    %v469 = vld [vmem:[#allocation3 + $0x150] ss:$0 sm:$0xff]
    %v471 = vsel %vm141, %v464, 0
    %473 = vmatprep.subr.mxu0 0.0
    %474 = vmatpush1.msra.mxu0 %v465
    %475 = vmatprep.subr.mxu0 0.0
    %476 = vmatpush1.msra.mxu0 %v466
    %477 = vmatprep.subr.mxu0 0.0
    %478 = vmatpush1.msra.mxu0 %v467
    %479 = vmatprep.subr.mxu0 0.0
    %480 = vmatpush1.msra.mxu0 %v468
    %481 = vmatprep.subr.mxu0 0.0
    %482 = vmatpush1.msra.mxu0 0.0
    %483 = vmatprep.subr.mxu0 0.0
    %484 = vmatpush1.msra.mxu0 0.0
    %485 = vmatprep.subr.mxu0 0.0
    %486 = vmatpush1.msra.mxu0 0.0
    %487 = vmatprep.subr.mxu0 0.0
    %488 = vmatpush1.msra.mxu0 0.0
    %489 = vmatprep.subr.mxu0 0.0
    %490 = vmatpush1.msra.mxu0 0.0
    %491 = vmatprep.subr.mxu0 0.0
    %492 = vmatpush1.msra.mxu0 0.0
    %493 = vmatprep.subr.mxu0 0.0
    %494 = vmatpush1.msra.mxu0 0.0
    %495 = vmatprep.subr.mxu0 0.0
    %496 = vmatpush1.msra.mxu0 0.0
    %497 = vmatprep.subr.mxu0 0.0
    %498 = vmatpush1.msra.mxu0 0.0
    %499 = vmatprep.subr.mxu0 0.0
    %500 = vmatpush1.msra.mxu0 0.0
    %501 = vmatprep.subr.mxu0 0.0
    %502 = vmatpush1.msra.mxu0 0.0
    %503 = vmatprep.subr.mxu0 0.0
    %504 = vmatpush1.msra.mxu0 0.0
    %505 = vmatprep.subr.mxu0 0.0
    %506 = vmatpush1.msra.mxu0 0.0
    %507 = vmatprep.subr.mxu0 0.0
    %508 = vmatpush1.msra.mxu0 0.0
    %509 = vmatprep.subr.mxu0 0.0
    %510 = vmatpush1.msra.mxu0 0.0
    %511 = vmatprep.subr.mxu0 0.0
    %512 = vmatpush1.msra.mxu0 0.0
    %513 = vmatprep.subr.mxu0 0.0
    %514 = vmatpush1.msra.mxu0 0.0
    %515 = vmatprep.subr.mxu0 0.0
    %516 = vmatpush1.msra.mxu0 0.0
    %517 = vmatprep.subr.mxu0 0.0
    %518 = vmatpush1.msra.mxu0 0.0
    %519 = vmatprep.subr.mxu0 0.0
    %520 = vmatpush1.msra.mxu0 0.0
    %521 = vmatprep.subr.mxu0 0.0
    %522 = vmatpush1.msra.mxu0 0.0
    %523 = vmatprep.subr.mxu0 0.0
    %524 = vmatpush1.msra.mxu0 0.0
    %525 = vmatprep.subr.mxu0 0.0
    %526 = vmatpush1.msra.mxu0 0.0
    %527 = vmatprep.subr.mxu0 0.0
    %528 = vmatpush1.msra.mxu0 0.0
    %529 = vmatprep.subr.mxu0 0.0
    %530 = vmatpush1.msra.mxu0 0.0
    %531 = vmatprep.subr.mxu0 0.0
    %532 = vmatpush1.msra.mxu0 0.0
    %533 = vmatprep.subr.mxu0 0.0
    %534 = vmatpush1.msra.mxu0 0.0
    %535 = vmatprep.subr.mxu0 0.0
    %536 = vmatpush1.msra.mxu0 0.0
    %537 = vmatprep.mubr.f32.mxu0 0.0
    %538 = vmatmul.mubr.f32.gmra.mrb[0].mxu0 %v471
    %v539 = vpop.f32.mrb[0].mxu0
    %v540 = vadd.f32 %v469, %v539
    %v541 = vpop.f32.mrb[0].mxu0
    %542 = vdwg.mxu0
    %v543 = vmax.f32 %v540, 0.0
    %v544 = vmul.f32 %v543, %v39
    %v545 = vld [vmem:[#allocation3 + $0x160] sm:$0xff]
    %v546 = vld [vmem:[#allocation3 + $0x170] sm:$0xff]
    %v547 = vld [vmem:[#allocation3 + $0x180] sm:$0xff]
    %v548 = vld [vmem:[#allocation3 + $0x190] sm:$0xff]
    %v549 = vld [vmem:[#allocation3 + $0x1a0] ss:$0 sm:$0xff]
    %v551 = vsel %vm141, %v544, 0
    %553 = vmatprep.subr.mxu0 0.0
    %554 = vmatpush1.msra.mxu0 %v545
    %555 = vmatprep.subr.mxu0 0.0
    %556 = vmatpush1.msra.mxu0 %v546
    %557 = vmatprep.subr.mxu0 0.0
    %558 = vmatpush1.msra.mxu0 %v547
    %559 = vmatprep.subr.mxu0 0.0
    %560 = vmatpush1.msra.mxu0 %v548
    %561 = vmatprep.subr.mxu0 0.0
    %562 = vmatpush1.msra.mxu0 0.0
    %563 = vmatprep.subr.mxu0 0.0
    %564 = vmatpush1.msra.mxu0 0.0
    %565 = vmatprep.subr.mxu0 0.0
    %566 = vmatpush1.msra.mxu0 0.0
    %567 = vmatprep.subr.mxu0 0.0
    %568 = vmatpush1.msra.mxu0 0.0
    %569 = vmatprep.subr.mxu0 0.0
    %570 = vmatpush1.msra.mxu0 0.0
    %571 = vmatprep.subr.mxu0 0.0
    %572 = vmatpush1.msra.mxu0 0.0
    %573 = vmatprep.subr.mxu0 0.0
    %574 = vmatpush1.msra.mxu0 0.0
    %575 = vmatprep.subr.mxu0 0.0
    %576 = vmatpush1.msra.mxu0 0.0
    %577 = vmatprep.subr.mxu0 0.0
    %578 = vmatpush1.msra.mxu0 0.0
    %579 = vmatprep.subr.mxu0 0.0
    %580 = vmatpush1.msra.mxu0 0.0
    %581 = vmatprep.subr.mxu0 0.0
    %582 = vmatpush1.msra.mxu0 0.0
    %583 = vmatprep.subr.mxu0 0.0
    %584 = vmatpush1.msra.mxu0 0.0
    %585 = vmatprep.subr.mxu0 0.0
    %586 = vmatpush1.msra.mxu0 0.0
    %587 = vmatprep.subr.mxu0 0.0
    %588 = vmatpush1.msra.mxu0 0.0
    %589 = vmatprep.subr.mxu0 0.0
    %590 = vmatpush1.msra.mxu0 0.0
    %591 = vmatprep.subr.mxu0 0.0
    %592 = vmatpush1.msra.mxu0 0.0
    %593 = vmatprep.subr.mxu0 0.0
    %594 = vmatpush1.msra.mxu0 0.0
    %595 = vmatprep.subr.mxu0 0.0
    %596 = vmatpush1.msra.mxu0 0.0
    %597 = vmatprep.subr.mxu0 0.0
    %598 = vmatpush1.msra.mxu0 0.0
    %599 = vmatprep.subr.mxu0 0.0
    %600 = vmatpush1.msra.mxu0 0.0
    %601 = vmatprep.subr.mxu0 0.0
    %602 = vmatpush1.msra.mxu0 0.0
    %603 = vmatprep.subr.mxu0 0.0
    %604 = vmatpush1.msra.mxu0 0.0
    %605 = vmatprep.subr.mxu0 0.0
    %606 = vmatpush1.msra.mxu0 0.0
    %607 = vmatprep.subr.mxu0 0.0
    %608 = vmatpush1.msra.mxu0 0.0
    %609 = vmatprep.subr.mxu0 0.0
    %610 = vmatpush1.msra.mxu0 0.0
    %611 = vmatprep.subr.mxu0 0.0
    %612 = vmatpush1.msra.mxu0 0.0
    %613 = vmatprep.subr.mxu0 0.0
    %614 = vmatpush1.msra.mxu0 0.0
    %615 = vmatprep.subr.mxu0 0.0
    %616 = vmatpush1.msra.mxu0 0.0
    %617 = vmatprep.mubr.f32.mxu0 0.0
    %618 = vmatmul.mubr.f32.gmra.mrb[0].mxu0 %v551
    %v619 = vpop.f32.mrb[0].mxu0
    %v620 = vadd.f32 %v549, %v619
    %v621 = vpop.f32.mrb[0].mxu0
    %622 = vdwg.mxu0
    %v623 = vmul.f32 %v620, %v39
    %624 = vxpose.xlu0.b32.start [1/16] %v623, 128
    %625 = vxpose.xlu0.b32.cont [2/16] 0.0, 128
    %626 = vxpose.xlu0.b32.cont [3/16] 0.0, 128
    %627 = vxpose.xlu0.b32.cont [4/16] 0.0, 128
    %628 = vxpose.xlu0.b32.cont [5/16] 0.0, 128
    %629 = vxpose.xlu0.b32.cont [6/16] 0.0, 128
    %630 = vxpose.xlu0.b32.cont [7/16] 0.0, 128
    %631 = vxpose.xlu0.b32.cont [8/16] 0.0, 128
    %632 = vxpose.xlu0.b32.cont [9/16] 0.0, 128
    %633 = vxpose.xlu0.b32.cont [10/16] 0.0, 128
    %634 = vxpose.xlu0.b32.cont [11/16] 0.0, 128
    %635 = vxpose.xlu0.b32.cont [12/16] 0.0, 128
    %636 = vxpose.xlu0.b32.cont [13/16] 0.0, 128
    %637 = vxpose.xlu0.b32.cont [14/16] 0.0, 128
    %638 = vxpose.xlu0.b32.cont [15/16] 0.0, 128
    %639 = vxpose.xlu0.b32.end [16/16] 0.0, 128
    %v640 = vpop.trf.xlu0
    %v641 = vpop.trf.xlu0
    %v642 = vpop.trf.xlu0
    %v643 = vpop.trf.xlu0
    %v644 = vpop.trf.xlu0
    %v645 = vpop.trf.xlu0
    %v646 = vpop.trf.xlu0
    %v647 = vpop.trf.xlu0
    %v648 = vpop.trf.xlu0
    %v649 = vpop.trf.xlu0
    %v650 = vpop.trf.xlu0
    %v651 = vpop.trf.xlu0
    %v652 = vpop.trf.xlu0
    %v653 = vpop.trf.xlu0
    %v654 = vpop.trf.xlu0
    %v655 = vpop.trf.xlu0
    %v656 = vld [vmem:[%s2 + $0x10] sm:$0xff]
    %v657 = vmul.f32 %v656, 0.8
    %659 = vrot.lane.b32.xlu0 %v657, 32
    %v660 = vpop.permute.xlu0 %659
    %v662 = vadd.f32 %v620, %v660
    %v663 = vmul.f32 %v662, 1.442695
    %v664 = vpow.pop %v663
    %v665 = vmul.f32 %v664, %v39
    %v666 = vceil.f32 %v665
    %v667 = vmul.f32 %v666, %v39
    %vm668 = vcmask 269568
    %v669 = vsel %vm668, %v667, 0.0
    %v670 = vrot.slane %v669, 4
    %v671 = vadd.f32 %v669, %v670
    %v672 = vrot.slane %v671, 2
    %v673 = vadd.f32 %v671, %v672
    %v674 = vrot.slane %v673, 1
    %v675 = vadd.f32 %v673, %v674
    %v676 = vmax.f32 %v675, 1.0
    %v677 = vmin.f32 %v676, 128.0
    %v678 = vcvt.s32.f32 %v41
    %680 = vset.pattern.permute.xlu0 32
    %681 = vperm.xlu0 %680, %v677
    %v682 = vpop.permute.xlu0 %681
    %vm684 = vcmp.lt.f32.partialorder %v678, %v682
    %v685 = vsel %vm684, 1, 0
    %v686 = vcvt.s32.f32 %v685
    %vm687 = vcmp.le.s32.totalorder %v41, %v35
    %v688 = vsel %vm687, 1, 0
    %v689 = vcvt.s32.f32 %v688
    %691 = vrot.lane.b32.xlu0 %v667, 96
    %v692 = vpop.permute.xlu0 %691
    %v695 = vsel %vm375, %v689, 0
    %697 = vmatprep.subr.mxu0 0.0
    %698 = vmatpush1.msra.mxu0 %v692
    %699 = vmatprep.subr.mxu0 0.0
    %700 = vmatpush1.msra.mxu0 0.0
    %701 = vmatprep.subr.mxu0 0.0
    %702 = vmatpush1.msra.mxu0 0.0
    %703 = vmatprep.subr.mxu0 0.0
    %704 = vmatpush1.msra.mxu0 0.0
    %705 = vmatprep.subr.mxu0 0.0
    %706 = vmatpush1.msra.mxu0 0.0
    %707 = vmatprep.subr.mxu0 0.0
    %708 = vmatpush1.msra.mxu0 0.0
    %709 = vmatprep.subr.mxu0 0.0
    %710 = vmatpush1.msra.mxu0 0.0
    %711 = vmatprep.subr.mxu0 0.0
    %712 = vmatpush1.msra.mxu0 0.0
    %713 = vmatprep.subr.mxu0 0.0
    %714 = vmatpush1.msra.mxu0 0.0
    %715 = vmatprep.subr.mxu0 0.0
    %716 = vmatpush1.msra.mxu0 0.0
    %717 = vmatprep.subr.mxu0 0.0
    %718 = vmatpush1.msra.mxu0 0.0
    %719 = vmatprep.subr.mxu0 0.0
    %720 = vmatpush1.msra.mxu0 0.0
    %721 = vmatprep.subr.mxu0 0.0
    %722 = vmatpush1.msra.mxu0 0.0
    %723 = vmatprep.subr.mxu0 0.0
    %724 = vmatpush1.msra.mxu0 0.0
    %725 = vmatprep.subr.mxu0 0.0
    %726 = vmatpush1.msra.mxu0 0.0
    %727 = vmatprep.subr.mxu0 0.0
    %728 = vmatpush1.msra.mxu0 0.0
    %729 = vmatprep.subr.mxu0 0.0
    %730 = vmatpush1.msra.mxu0 0.0
    %731 = vmatprep.subr.mxu0 0.0
    %732 = vmatpush1.msra.mxu0 0.0
    %733 = vmatprep.subr.mxu0 0.0
    %734 = vmatpush1.msra.mxu0 0.0
    %735 = vmatprep.subr.mxu0 0.0
    %736 = vmatpush1.msra.mxu0 0.0
    %737 = vmatprep.subr.mxu0 0.0
    %738 = vmatpush1.msra.mxu0 0.0
    %739 = vmatprep.subr.mxu0 0.0
    %740 = vmatpush1.msra.mxu0 0.0
    %741 = vmatprep.subr.mxu0 0.0
    %742 = vmatpush1.msra.mxu0 0.0
    %743 = vmatprep.subr.mxu0 0.0
    %744 = vmatpush1.msra.mxu0 0.0
    %745 = vmatprep.subr.mxu0 0.0
    %746 = vmatpush1.msra.mxu0 0.0
    %747 = vmatprep.subr.mxu0 0.0
    %748 = vmatpush1.msra.mxu0 0.0
    %749 = vmatprep.subr.mxu0 0.0
    %750 = vmatpush1.msra.mxu0 0.0
    %751 = vmatprep.subr.mxu0 0.0
    %752 = vmatpush1.msra.mxu0 0.0
    %753 = vmatprep.subr.mxu0 0.0
    %754 = vmatpush1.msra.mxu0 0.0
    %755 = vmatprep.subr.mxu0 0.0
    %756 = vmatpush1.msra.mxu0 0.0
    %757 = vmatprep.subr.mxu0 0.0
    %758 = vmatpush1.msra.mxu0 0.0
    %759 = vmatprep.subr.mxu0 0.0
    %760 = vmatpush1.msra.mxu0 0.0
    %761 = vmatprep.mubr.f32.mxu0 0.0
    %762 = vmatmul.mubr.f32.gmra.mrb[0].mxu0 %v695
    %v763 = vpop.f32.mrb[0].mxu0
    %v764 = vadd.f32 0.0, %v763
    %v765 = vpop.f32.mrb[0].mxu0
    %766 = vdwg.mxu0
    %768 = vset.pattern.permute.xlu0 0
    %769 = vperm.xlu0 %768, %v764
    %v770 = vpop.permute.xlu0 %769
    %vm772 = vcmp.lt.f32.partialorder %v678, %v770
    %v773 = vsub.f32 %v764, %v692
    %775 = vset.pattern.permute.xlu0 0
    %776 = vperm.xlu0 %775, %v773
    %v777 = vpop.permute.xlu0 %776
    %vm779 = vcmp.ge.f32.partialorder %v678, %v777
    %vm780 = vmand %vm772, %vm779
    %v781 = vsel %vm780, 1, 0
    %v782 = vcvt.s32.f32 %v781
    %v783 = vmul.f32 %v782, %v686
    %v785 = vsel %vm375, %v642, 0
    %v788 = vsel %vm375, %v643, 0
    %790 = vmatprep.subr.mxu0 0.0
    %791 = vmatpush1.msra.mxu0 %v783
    %792 = vmatprep.subr.mxu0 0.0
    %793 = vmatpush1.msra.mxu0 0.0
    %794 = vmatprep.subr.mxu0 0.0
    %795 = vmatpush1.msra.mxu0 0.0
    %796 = vmatprep.subr.mxu0 0.0
    %797 = vmatpush1.msra.mxu0 0.0
    %798 = vmatprep.subr.mxu0 0.0
    %799 = vmatpush1.msra.mxu0 0.0
    %800 = vmatprep.subr.mxu0 0.0
    %801 = vmatpush1.msra.mxu0 0.0
    %802 = vmatprep.subr.mxu0 0.0
    %803 = vmatpush1.msra.mxu0 0.0
    %804 = vmatprep.subr.mxu0 0.0
    %805 = vmatpush1.msra.mxu0 0.0
    %806 = vmatprep.subr.mxu0 0.0
    %807 = vmatpush1.msra.mxu0 0.0
    %808 = vmatprep.subr.mxu0 0.0
    %809 = vmatpush1.msra.mxu0 0.0
    %810 = vmatprep.subr.mxu0 0.0
    %811 = vmatpush1.msra.mxu0 0.0
    %812 = vmatprep.subr.mxu0 0.0
    %813 = vmatpush1.msra.mxu0 0.0
    %814 = vmatprep.subr.mxu0 0.0
    %815 = vmatpush1.msra.mxu0 0.0
    %816 = vmatprep.subr.mxu0 0.0
    %817 = vmatpush1.msra.mxu0 0.0
    %818 = vmatprep.subr.mxu0 0.0
    %819 = vmatpush1.msra.mxu0 0.0
    %820 = vmatprep.subr.mxu0 0.0
    %821 = vmatpush1.msra.mxu0 0.0
    %822 = vmatprep.subr.mxu0 0.0
    %823 = vmatpush1.msra.mxu0 0.0
    %824 = vmatprep.subr.mxu0 0.0
    %825 = vmatpush1.msra.mxu0 0.0
    %826 = vmatprep.subr.mxu0 0.0
    %827 = vmatpush1.msra.mxu0 0.0
    %828 = vmatprep.subr.mxu0 0.0
    %829 = vmatpush1.msra.mxu0 0.0
    %830 = vmatprep.subr.mxu0 0.0
    %831 = vmatpush1.msra.mxu0 0.0
    %832 = vmatprep.subr.mxu0 0.0
    %833 = vmatpush1.msra.mxu0 0.0
    %834 = vmatprep.subr.mxu0 0.0
    %835 = vmatpush1.msra.mxu0 0.0
    %836 = vmatprep.subr.mxu0 0.0
    %837 = vmatpush1.msra.mxu0 0.0
    %838 = vmatprep.subr.mxu0 0.0
    %839 = vmatpush1.msra.mxu0 0.0
    %840 = vmatprep.subr.mxu0 0.0
    %841 = vmatpush1.msra.mxu0 0.0
    %842 = vmatprep.subr.mxu0 0.0
    %843 = vmatpush1.msra.mxu0 0.0
    %844 = vmatprep.subr.mxu0 0.0
    %845 = vmatpush1.msra.mxu0 0.0
    %846 = vmatprep.subr.mxu0 0.0
    %847 = vmatpush1.msra.mxu0 0.0
    %848 = vmatprep.subr.mxu0 0.0
    %849 = vmatpush1.msra.mxu0 0.0
    %850 = vmatprep.subr.mxu0 0.0
    %851 = vmatpush1.msra.mxu0 0.0
    %852 = vmatprep.subr.mxu0 0.0
    %853 = vmatpush1.msra.mxu0 0.0
    %854 = vmatprep.mubr.f32.mxu0 0.0
    %855 = vmatmul.mubr.f32.gmra.mrb[0].mxu0 %v785
    %v856 = vpop.f32.mrb[0].mxu0
    %v857 = vadd.f32 0.0, %v856
    %v858 = vpop.f32.mrb[0].mxu0
    %859 = vmatprep.mubr.f32.mxu0 0.0
    %860 = vmatmul.mubr.f32.gmra.mrb[0].mxu0 %v788
    %v861 = vpop.f32.mrb[0].mxu0
    %v862 = vadd.f32 0.0, %v861
    %v863 = vpop.f32.mrb[0].mxu0
    %864 = vdwg.mxu0
    %v865 = vld [vmem:[%s2] sm:$0xff]
    %v866 = vld [vmem:[%s2 + $0x8] sm:$0xff]
    %v867 = vmul.f32 %v857, 1.442695
    %v868 = vpow.pop %v867
    %v869 = vmul.f32 %v862, 1.442695
    %v870 = vpow.pop %v869
    %v871 = vmul.f32 %v868, %v865
    %v872 = vmul.f32 %v870, %v866
    %v873 = vmul.f32 %v871, 0.667
    %v874 = vmul.f32 %v872, 0.667
    %v876 = vsel %vm375, %v640, 0
    %v879 = vsel %vm375, %v641, 0
    %881 = vmatprep.subr.mxu0 0.0
    %882 = vmatpush1.msra.mxu0 %v783
    %883 = vmatprep.subr.mxu0 0.0
    %884 = vmatpush1.msra.mxu0 0.0
    %885 = vmatprep.subr.mxu0 0.0
    %886 = vmatpush1.msra.mxu0 0.0
    %887 = vmatprep.subr.mxu0 0.0
    %888 = vmatpush1.msra.mxu0 0.0
    %889 = vmatprep.subr.mxu0 0.0
    %890 = vmatpush1.msra.mxu0 0.0
    %891 = vmatprep.subr.mxu0 0.0
    %892 = vmatpush1.msra.mxu0 0.0
    %893 = vmatprep.subr.mxu0 0.0
    %894 = vmatpush1.msra.mxu0 0.0
    %895 = vmatprep.subr.mxu0 0.0
    %896 = vmatpush1.msra.mxu0 0.0
    %897 = vmatprep.subr.mxu0 0.0
    %898 = vmatpush1.msra.mxu0 0.0
    %899 = vmatprep.subr.mxu0 0.0
    %900 = vmatpush1.msra.mxu0 0.0
    %901 = vmatprep.subr.mxu0 0.0
    %902 = vmatpush1.msra.mxu0 0.0
    %903 = vmatprep.subr.mxu0 0.0
    %904 = vmatpush1.msra.mxu0 0.0
    %905 = vmatprep.subr.mxu0 0.0
    %906 = vmatpush1.msra.mxu0 0.0
    %907 = vmatprep.subr.mxu0 0.0
    %908 = vmatpush1.msra.mxu0 0.0
    %909 = vmatprep.subr.mxu0 0.0
    %910 = vmatpush1.msra.mxu0 0.0
    %911 = vmatprep.subr.mxu0 0.0
    %912 = vmatpush1.msra.mxu0 0.0
    %913 = vmatprep.subr.mxu0 0.0
    %914 = vmatpush1.msra.mxu0 0.0
    %915 = vmatprep.subr.mxu0 0.0
    %916 = vmatpush1.msra.mxu0 0.0
    %917 = vmatprep.subr.mxu0 0.0
    %918 = vmatpush1.msra.mxu0 0.0
    %919 = vmatprep.subr.mxu0 0.0
    %920 = vmatpush1.msra.mxu0 0.0
    %921 = vmatprep.subr.mxu0 0.0
    %922 = vmatpush1.msra.mxu0 0.0
    %923 = vmatprep.subr.mxu0 0.0
    %924 = vmatpush1.msra.mxu0 0.0
    %925 = vmatprep.subr.mxu0 0.0
    %926 = vmatpush1.msra.mxu0 0.0
    %927 = vmatprep.subr.mxu0 0.0
    %928 = vmatpush1.msra.mxu0 0.0
    %929 = vmatprep.subr.mxu0 0.0
    %930 = vmatpush1.msra.mxu0 0.0
    %931 = vmatprep.subr.mxu0 0.0
    %932 = vmatpush1.msra.mxu0 0.0
    %933 = vmatprep.subr.mxu0 0.0
    %934 = vmatpush1.msra.mxu0 0.0
    %935 = vmatprep.subr.mxu0 0.0
    %936 = vmatpush1.msra.mxu0 0.0
    %937 = vmatprep.subr.mxu0 0.0
    %938 = vmatpush1.msra.mxu0 0.0
    %939 = vmatprep.subr.mxu0 0.0
    %940 = vmatpush1.msra.mxu0 0.0
    %941 = vmatprep.subr.mxu0 0.0
    %942 = vmatpush1.msra.mxu0 0.0
    %943 = vmatprep.subr.mxu0 0.0
    %944 = vmatpush1.msra.mxu0 0.0
    %945 = vmatprep.mubr.f32.mxu0 0.0
    %946 = vmatmul.mubr.f32.gmra.mrb[0].mxu0 %v876
    %v947 = vpop.f32.mrb[0].mxu0
    %v948 = vadd.f32 %v873, %v947
    %v949 = vpop.f32.mrb[0].mxu0
    %950 = vmatprep.mubr.f32.mxu0 0.0
    %951 = vmatmul.mubr.f32.gmra.mrb[0].mxu0 %v879
    %v952 = vpop.f32.mrb[0].mxu0
    %v953 = vadd.f32 %v874, %v952
    %v954 = vpop.f32.mrb[0].mxu0
    %955 = vdwg.mxu0
    %v956 = vmul.f32 %v948, %v686
    %v957 = vmul.f32 %v953, %v686
    %v958 = vld [vmem:[#allocation3 + $0x1b0] sm:$0xff]
    %v959 = vld [vmem:[#allocation3 + $0x1c0] sm:$0xff]
    %v960 = vld [vmem:[#allocation3 + $0x1d0] sm:$0xff]
    %v961 = vld [vmem:[#allocation3 + $0x1e0] sm:$0xff]
    %963 = vset.pattern.permute.xlu0 0
    %964 = vperm.xlu0 %963, %v960
    %v965 = vpop.permute.xlu0 %964
    %968 = vset.pattern.permute.xlu0 0
    %969 = vperm.xlu0 %968, %v961
    %v970 = vpop.permute.xlu0 %969
    %v973 = vsel %vm375, %v958, 0
    %v976 = vsel %vm375, %v959, 0
    %978 = vmatprep.subr.mxu0 0.0
    %979 = vmatpush1.msra.mxu0 %v957
    %980 = vmatprep.subr.mxu0 0.0
    %981 = vmatpush1.msra.mxu0 0.0
    %982 = vmatprep.subr.mxu0 0.0
    %983 = vmatpush1.msra.mxu0 0.0
    %984 = vmatprep.subr.mxu0 0.0
    %985 = vmatpush1.msra.mxu0 0.0
    %986 = vmatprep.subr.mxu0 0.0
    %987 = vmatpush1.msra.mxu0 0.0
    %988 = vmatprep.subr.mxu0 0.0
    %989 = vmatpush1.msra.mxu0 0.0
    %990 = vmatprep.subr.mxu0 0.0
    %991 = vmatpush1.msra.mxu0 0.0
    %992 = vmatprep.subr.mxu0 0.0
    %993 = vmatpush1.msra.mxu0 0.0
    %994 = vmatprep.subr.mxu0 0.0
    %995 = vmatpush1.msra.mxu0 0.0
    %996 = vmatprep.subr.mxu0 0.0
    %997 = vmatpush1.msra.mxu0 0.0
    %998 = vmatprep.subr.mxu0 0.0
    %999 = vmatpush1.msra.mxu0 0.0
    %1000 = vmatprep.subr.mxu0 0.0
    %1001 = vmatpush1.msra.mxu0 0.0
    %1002 = vmatprep.subr.mxu0 0.0
    %1003 = vmatpush1.msra.mxu0 0.0
    %1004 = vmatprep.subr.mxu0 0.0
    %1005 = vmatpush1.msra.mxu0 0.0
    %1006 = vmatprep.subr.mxu0 0.0
    %1007 = vmatpush1.msra.mxu0 0.0
    %1008 = vmatprep.subr.mxu0 0.0
    %1009 = vmatpush1.msra.mxu0 0.0
    %1010 = vmatprep.subr.mxu0 0.0
    %1011 = vmatpush1.msra.mxu0 0.0
    %1012 = vmatprep.subr.mxu0 0.0
    %1013 = vmatpush1.msra.mxu0 0.0
    %1014 = vmatprep.subr.mxu0 0.0
    %1015 = vmatpush1.msra.mxu0 0.0
    %1016 = vmatprep.subr.mxu0 0.0
    %1017 = vmatpush1.msra.mxu0 0.0
    %1018 = vmatprep.subr.mxu0 0.0
    %1019 = vmatpush1.msra.mxu0 0.0
    %1020 = vmatprep.subr.mxu0 0.0
    %1021 = vmatpush1.msra.mxu0 0.0
    %1022 = vmatprep.subr.mxu0 0.0
    %1023 = vmatpush1.msra.mxu0 0.0
    %1024 = vmatprep.subr.mxu0 0.0
    %1025 = vmatpush1.msra.mxu0 0.0
    %1026 = vmatprep.subr.mxu0 0.0
    %1027 = vmatpush1.msra.mxu0 0.0
    %1028 = vmatprep.subr.mxu0 0.0
    %1029 = vmatpush1.msra.mxu0 0.0
    %1030 = vmatprep.subr.mxu0 0.0
    %1031 = vmatpush1.msra.mxu0 0.0
    %1032 = vmatprep.subr.mxu0 0.0
    %1033 = vmatpush1.msra.mxu0 0.0
    %1034 = vmatprep.subr.mxu0 0.0
    %1035 = vmatpush1.msra.mxu0 0.0
    %1036 = vmatprep.subr.mxu0 0.0
    %1037 = vmatpush1.msra.mxu0 0.0
    %1038 = vmatprep.subr.mxu0 0.0
    %1039 = vmatpush1.msra.mxu0 0.0
    %1040 = vmatprep.subr.mxu0 0.0
    %1041 = vmatpush1.msra.mxu0 0.0
    %1042 = vmatprep.mubr.f32.mxu0 0.0
    %1043 = vmatmul.mubr.f32.gmra.mrb[0].mxu0 %v973
    %v1044 = vpop.f32.mrb[0].mxu0
    %v1045 = vadd.f32 %v965, %v1044
    %v1046 = vpop.f32.mrb[0].mxu0
    %1047 = vmatprep.mubr.f32.mxu0 0.0
    %1048 = vmatmul.mubr.f32.gmra.mrb[0].mxu0 %v976
    %v1049 = vpop.f32.mrb[0].mxu0
    %v1050 = vadd.f32 %v970, %v1049
    %v1051 = vpop.f32.mrb[0].mxu0
    %1052 = vdwg.mxu0
    %v1053 = vmax.f32 %v1045, 0.0
    %v1054 = vmax.f32 %v1050, 0.0
    %v1055 = vld [vmem:[#allocation3 + $0x1f0] sm:$0xff]
    %v1056 = vld [vmem:[#allocation3 + $0x200] sm:$0xff]
    %1058 = vset.pattern.permute.xlu0 0
    %1059 = vperm.xlu0 %1058, %v1056
    %v1060 = vpop.permute.xlu0 %1059
    %vm1062 = vcmask 130048
    %v1064 = vsel %vm1062, %v1055, 0
    %1066 = vmatprep.subr.mxu0 0.0
    %1067 = vmatpush1.msra.mxu0 %v1053
    %1068 = vmatprep.subr.mxu0 0.0
    %1069 = vmatpush1.msra.mxu0 %v1054
    %1070 = vmatprep.subr.mxu0 0.0
    %1071 = vmatpush1.msra.mxu0 0.0
    %1072 = vmatprep.subr.mxu0 0.0
    %1073 = vmatpush1.msra.mxu0 0.0
    %1074 = vmatprep.subr.mxu0 0.0
    %1075 = vmatpush1.msra.mxu0 0.0
    %1076 = vmatprep.subr.mxu0 0.0
    %1077 = vmatpush1.msra.mxu0 0.0
    %1078 = vmatprep.subr.mxu0 0.0
    %1079 = vmatpush1.msra.mxu0 0.0
    %1080 = vmatprep.subr.mxu0 0.0
    %1081 = vmatpush1.msra.mxu0 0.0
    %1082 = vmatprep.subr.mxu0 0.0
    %1083 = vmatpush1.msra.mxu0 0.0
    %1084 = vmatprep.subr.mxu0 0.0
    %1085 = vmatpush1.msra.mxu0 0.0
    %1086 = vmatprep.subr.mxu0 0.0
    %1087 = vmatpush1.msra.mxu0 0.0
    %1088 = vmatprep.subr.mxu0 0.0
    %1089 = vmatpush1.msra.mxu0 0.0
    %1090 = vmatprep.subr.mxu0 0.0
    %1091 = vmatpush1.msra.mxu0 0.0
    %1092 = vmatprep.subr.mxu0 0.0
    %1093 = vmatpush1.msra.mxu0 0.0
    %1094 = vmatprep.subr.mxu0 0.0
    %1095 = vmatpush1.msra.mxu0 0.0
    %1096 = vmatprep.subr.mxu0 0.0
    %1097 = vmatpush1.msra.mxu0 0.0
    %1098 = vmatprep.subr.mxu0 0.0
    %1099 = vmatpush1.msra.mxu0 0.0
    %1100 = vmatprep.subr.mxu0 0.0
    %1101 = vmatpush1.msra.mxu0 0.0
    %1102 = vmatprep.subr.mxu0 0.0
    %1103 = vmatpush1.msra.mxu0 0.0
    %1104 = vmatprep.subr.mxu0 0.0
    %1105 = vmatpush1.msra.mxu0 0.0
    %1106 = vmatprep.subr.mxu0 0.0
    %1107 = vmatpush1.msra.mxu0 0.0
    %1108 = vmatprep.subr.mxu0 0.0
    %1109 = vmatpush1.msra.mxu0 0.0
    %1110 = vmatprep.subr.mxu0 0.0
    %1111 = vmatpush1.msra.mxu0 0.0
    %1112 = vmatprep.subr.mxu0 0.0
    %1113 = vmatpush1.msra.mxu0 0.0
    %1114 = vmatprep.subr.mxu0 0.0
    %1115 = vmatpush1.msra.mxu0 0.0
    %1116 = vmatprep.subr.mxu0 0.0
    %1117 = vmatpush1.msra.mxu0 0.0
    %1118 = vmatprep.subr.mxu0 0.0
    %1119 = vmatpush1.msra.mxu0 0.0
    %1120 = vmatprep.subr.mxu0 0.0
    %1121 = vmatpush1.msra.mxu0 0.0
    %1122 = vmatprep.subr.mxu0 0.0
    %1123 = vmatpush1.msra.mxu0 0.0
    %1124 = vmatprep.subr.mxu0 0.0
    %1125 = vmatpush1.msra.mxu0 0.0
    %1126 = vmatprep.subr.mxu0 0.0
    %1127 = vmatpush1.msra.mxu0 0.0
    %1128 = vmatprep.subr.mxu0 0.0
    %1129 = vmatpush1.msra.mxu0 0.0
    %1130 = vmatprep.mubr.f32.mxu0 0.0
    %1131 = vmatmul.mubr.f32.gmra.mrb[0].mxu0 %v1064
    %v1132 = vpop.f32.mrb[0].mxu0
    %v1133 = vadd.f32 %v1060, %v1132
    %v1134 = vpop.f32.mrb[0].mxu0
    %1135 = vdwg.mxu0
    %v1136 = vsub.f32 %v956, %v1133
    %v1137 = vmul.f32 %v1136, %v686
    %v1138 = vld [vmem:[#allocation3 + $0x210] sm:$0xff]
    %v1139 = vld [vmem:[#allocation3 + $0x220] sm:$0xff]
    %v1140 = vld [vmem:[#allocation3 + $0x230] sm:$0xff]
    %v1141 = vld [vmem:[#allocation3 + $0x240] sm:$0xff]
    %1143 = vset.pattern.permute.xlu0 0
    %1144 = vperm.xlu0 %1143, %v1140
    %v1145 = vpop.permute.xlu0 %1144
    %1148 = vset.pattern.permute.xlu0 0
    %1149 = vperm.xlu0 %1148, %v1141
    %v1150 = vpop.permute.xlu0 %1149
    %v1153 = vsel %vm375, %v1138, 0
    %v1156 = vsel %vm375, %v1139, 0
    %1158 = vmatprep.subr.mxu0 0.0
    %1159 = vmatpush1.msra.mxu0 %v1137
    %1160 = vmatprep.subr.mxu0 0.0
    %1161 = vmatpush1.msra.mxu0 0.0
    %1162 = vmatprep.subr.mxu0 0.0
    %1163 = vmatpush1.msra.mxu0 0.0
    %1164 = vmatprep.subr.mxu0 0.0
    %1165 = vmatpush1.msra.mxu0 0.0
    %1166 = vmatprep.subr.mxu0 0.0
    %1167 = vmatpush1.msra.mxu0 0.0
    %1168 = vmatprep.subr.mxu0 0.0
    %1169 = vmatpush1.msra.mxu0 0.0
    %1170 = vmatprep.subr.mxu0 0.0
    %1171 = vmatpush1.msra.mxu0 0.0
    %1172 = vmatprep.subr.mxu0 0.0
    %1173 = vmatpush1.msra.mxu0 0.0
    %1174 = vmatprep.subr.mxu0 0.0
    %1175 = vmatpush1.msra.mxu0 0.0
    %1176 = vmatprep.subr.mxu0 0.0
    %1177 = vmatpush1.msra.mxu0 0.0
    %1178 = vmatprep.subr.mxu0 0.0
    %1179 = vmatpush1.msra.mxu0 0.0
    %1180 = vmatprep.subr.mxu0 0.0
    %1181 = vmatpush1.msra.mxu0 0.0
    %1182 = vmatprep.subr.mxu0 0.0
    %1183 = vmatpush1.msra.mxu0 0.0
    %1184 = vmatprep.subr.mxu0 0.0
    %1185 = vmatpush1.msra.mxu0 0.0
    %1186 = vmatprep.subr.mxu0 0.0
    %1187 = vmatpush1.msra.mxu0 0.0
    %1188 = vmatprep.subr.mxu0 0.0
    %1189 = vmatpush1.msra.mxu0 0.0
    %1190 = vmatprep.subr.mxu0 0.0
    %1191 = vmatpush1.msra.mxu0 0.0
    %1192 = vmatprep.subr.mxu0 0.0
    %1193 = vmatpush1.msra.mxu0 0.0
    %1194 = vmatprep.subr.mxu0 0.0
    %1195 = vmatpush1.msra.mxu0 0.0
    %1196 = vmatprep.subr.mxu0 0.0
    %1197 = vmatpush1.msra.mxu0 0.0
    %1198 = vmatprep.subr.mxu0 0.0
    %1199 = vmatpush1.msra.mxu0 0.0
    %1200 = vmatprep.subr.mxu0 0.0
    %1201 = vmatpush1.msra.mxu0 0.0
    %1202 = vmatprep.subr.mxu0 0.0
    %1203 = vmatpush1.msra.mxu0 0.0
    %1204 = vmatprep.subr.mxu0 0.0
    %1205 = vmatpush1.msra.mxu0 0.0
    %1206 = vmatprep.subr.mxu0 0.0
    %1207 = vmatpush1.msra.mxu0 0.0
    %1208 = vmatprep.subr.mxu0 0.0
    %1209 = vmatpush1.msra.mxu0 0.0
    %1210 = vmatprep.subr.mxu0 0.0
    %1211 = vmatpush1.msra.mxu0 0.0
    %1212 = vmatprep.subr.mxu0 0.0
    %1213 = vmatpush1.msra.mxu0 0.0
    %1214 = vmatprep.subr.mxu0 0.0
    %1215 = vmatpush1.msra.mxu0 0.0
    %1216 = vmatprep.subr.mxu0 0.0
    %1217 = vmatpush1.msra.mxu0 0.0
    %1218 = vmatprep.subr.mxu0 0.0
    %1219 = vmatpush1.msra.mxu0 0.0
    %1220 = vmatprep.subr.mxu0 0.0
    %1221 = vmatpush1.msra.mxu0 0.0
    %1222 = vmatprep.mubr.f32.mxu0 0.0
    %1223 = vmatmul.mubr.f32.gmra.mrb[0].mxu0 %v1153
    %v1224 = vpop.f32.mrb[0].mxu0
    %v1225 = vadd.f32 %v1145, %v1224
    %v1226 = vpop.f32.mrb[0].mxu0
    %1227 = vmatprep.mubr.f32.mxu0 0.0
    %1228 = vmatmul.mubr.f32.gmra.mrb[0].mxu0 %v1156
    %v1229 = vpop.f32.mrb[0].mxu0
    %v1230 = vadd.f32 %v1150, %v1229
    %v1231 = vpop.f32.mrb[0].mxu0
    %1232 = vdwg.mxu0
    %v1233 = vmax.f32 %v1225, 0.0
    %v1234 = vmax.f32 %v1230, 0.0
    %v1235 = vld [vmem:[#allocation3 + $0x250] sm:$0xff]
    %v1236 = vld [vmem:[#allocation3 + $0x260] sm:$0xff]
    %1238 = vset.pattern.permute.xlu0 0
    %1239 = vperm.xlu0 %1238, %v1236
    %v1240 = vpop.permute.xlu0 %1239
    %v1243 = vsel %vm1062, %v1235, 0
    %1245 = vmatprep.subr.mxu0 0.0
    %1246 = vmatpush1.msra.mxu0 %v1233
    %1247 = vmatprep.subr.mxu0 0.0
    %1248 = vmatpush1.msra.mxu0 %v1234
    %1249 = vmatprep.subr.mxu0 0.0
    %1250 = vmatpush1.msra.mxu0 0.0
    %1251 = vmatprep.subr.mxu0 0.0
    %1252 = vmatpush1.msra.mxu0 0.0
    %1253 = vmatprep.subr.mxu0 0.0
    %1254 = vmatpush1.msra.mxu0 0.0
    %1255 = vmatprep.subr.mxu0 0.0
    %1256 = vmatpush1.msra.mxu0 0.0
    %1257 = vmatprep.subr.mxu0 0.0
    %1258 = vmatpush1.msra.mxu0 0.0
    %1259 = vmatprep.subr.mxu0 0.0
    %1260 = vmatpush1.msra.mxu0 0.0
    %1261 = vmatprep.subr.mxu0 0.0
    %1262 = vmatpush1.msra.mxu0 0.0
    %1263 = vmatprep.subr.mxu0 0.0
    %1264 = vmatpush1.msra.mxu0 0.0
    %1265 = vmatprep.subr.mxu0 0.0
    %1266 = vmatpush1.msra.mxu0 0.0
    %1267 = vmatprep.subr.mxu0 0.0
    %1268 = vmatpush1.msra.mxu0 0.0
    %1269 = vmatprep.subr.mxu0 0.0
    %1270 = vmatpush1.msra.mxu0 0.0
    %1271 = vmatprep.subr.mxu0 0.0
    %1272 = vmatpush1.msra.mxu0 0.0
    %1273 = vmatprep.subr.mxu0 0.0
    %1274 = vmatpush1.msra.mxu0 0.0
    %1275 = vmatprep.subr.mxu0 0.0
    %1276 = vmatpush1.msra.mxu0 0.0
    %1277 = vmatprep.subr.mxu0 0.0
    %1278 = vmatpush1.msra.mxu0 0.0
    %1279 = vmatprep.subr.mxu0 0.0
    %1280 = vmatpush1.msra.mxu0 0.0
    %1281 = vmatprep.subr.mxu0 0.0
    %1282 = vmatpush1.msra.mxu0 0.0
    %1283 = vmatprep.subr.mxu0 0.0
    %1284 = vmatpush1.msra.mxu0 0.0
    %1285 = vmatprep.subr.mxu0 0.0
    %1286 = vmatpush1.msra.mxu0 0.0
    %1287 = vmatprep.subr.mxu0 0.0
    %1288 = vmatpush1.msra.mxu0 0.0
    %1289 = vmatprep.subr.mxu0 0.0
    %1290 = vmatpush1.msra.mxu0 0.0
    %1291 = vmatprep.subr.mxu0 0.0
    %1292 = vmatpush1.msra.mxu0 0.0
    %1293 = vmatprep.subr.mxu0 0.0
    %1294 = vmatpush1.msra.mxu0 0.0
    %1295 = vmatprep.subr.mxu0 0.0
    %1296 = vmatpush1.msra.mxu0 0.0
    %1297 = vmatprep.subr.mxu0 0.0
    %1298 = vmatpush1.msra.mxu0 0.0
    %1299 = vmatprep.subr.mxu0 0.0
    %1300 = vmatpush1.msra.mxu0 0.0
    %1301 = vmatprep.subr.mxu0 0.0
    %1302 = vmatpush1.msra.mxu0 0.0
    %1303 = vmatprep.subr.mxu0 0.0
    %1304 = vmatpush1.msra.mxu0 0.0
    %1305 = vmatprep.subr.mxu0 0.0
    %1306 = vmatpush1.msra.mxu0 0.0
    %1307 = vmatprep.subr.mxu0 0.0
    %1308 = vmatpush1.msra.mxu0 0.0
    %1309 = vmatprep.mubr.f32.mxu0 0.0
    %1310 = vmatmul.mubr.f32.gmra.mrb[0].mxu0 %v1243
    %v1311 = vpop.f32.mrb[0].mxu0
    %v1312 = vadd.f32 %v1240, %v1311
    %v1313 = vpop.f32.mrb[0].mxu0
    %1314 = vdwg.mxu0
    %v1315 = vsub.f32 %v957, %v1312
    %v1316 = vmul.f32 %v1315, %v686
    %v1317 = vld [vmem:[#allocation3 + $0x270] sm:$0xff]
    %v1318 = vld [vmem:[#allocation3 + $0x280] sm:$0xff]
    %v1319 = vld [vmem:[#allocation3 + $0x290] sm:$0xff]
    %v1320 = vld [vmem:[#allocation3 + $0x2a0] sm:$0xff]
    %v1321 = vld [vmem:[#allocation3 + $0x2b0] sm:$0xff]
    %v1322 = vld [vmem:[#allocation3 + $0x2c0] sm:$0xff]
    %v1323 = vld [vmem:[#allocation3 + $0x2d0] sm:$0xff]
    %v1324 = vld [vmem:[#allocation3 + $0x2e0] sm:$0xff]
    %1325 = vrot.lane.b32.xlu0 %v1137, 3
    %v1326 = vpop.permute.xlu0 %1325
    %1327 = vrot.lane.b32.xlu0 %v1316, 3
    %v1328 = vpop.permute.xlu0 %1327
    %vm1329 = vcmp.ge.s32.totalorder %v41, 3
    %v1330 = vsel %vm1329, 1, 0
    %v1331 = vcvt.s32.f32 %v1330
    %v1332 = vmul.f32 %v1326, %v1331
    %v1333 = vmul.f32 %v1328, %v1331
    %1334 = vrot.lane.b32.xlu0 %v1137, 2
    %v1335 = vpop.permute.xlu0 %1334
    %1336 = vrot.lane.b32.xlu0 %v1316, 2
    %v1337 = vpop.permute.xlu0 %1336
    %vm1338 = vcmp.ge.s32.totalorder %v41, 2
    %v1339 = vsel %vm1338, 1, 0
    %v1340 = vcvt.s32.f32 %v1339
    %v1341 = vmul.f32 %v1335, %v1340
    %v1342 = vmul.f32 %v1337, %v1340
    %1343 = vrot.lane.b32.xlu0 %v1137, 1
    %v1344 = vpop.permute.xlu0 %1343
    %1345 = vrot.lane.b32.xlu0 %v1316, 1
    %v1346 = vpop.permute.xlu0 %1345
    %vm1347 = vcmp.ge.s32.totalorder %v41, 1
    %v1348 = vsel %vm1347, 1, 0
    %v1349 = vcvt.s32.f32 %v1348
    %v1350 = vmul.f32 %v1344, %v1349
    %v1351 = vmul.f32 %v1346, %v1349
    %1352 = vrot.lane.b32.xlu0 %v1137, 127
    %v1353 = vpop.permute.xlu0 %1352
    %1354 = vrot.lane.b32.xlu0 %v1316, 127
    %v1355 = vpop.permute.xlu0 %1354
    %vm1356 = vcmp.lt.s32.totalorder %v41, 127
    %v1357 = vsel %vm1356, 1, 0
    %v1358 = vcvt.s32.f32 %v1357
    %v1359 = vmul.f32 %v1353, %v1358
    %v1360 = vmul.f32 %v1355, %v1358
    %1361 = vrot.lane.b32.xlu0 %v1137, 126
    %v1362 = vpop.permute.xlu0 %1361
    %1363 = vrot.lane.b32.xlu0 %v1316, 126
    %v1364 = vpop.permute.xlu0 %1363
    %vm1365 = vcmp.lt.s32.totalorder %v41, 126
    %v1366 = vsel %vm1365, 1, 0
    %v1367 = vcvt.s32.f32 %v1366
    %v1368 = vmul.f32 %v1362, %v1367
    %v1369 = vmul.f32 %v1364, %v1367
    %1370 = vrot.lane.b32.xlu0 %v1137, 125
    %v1371 = vpop.permute.xlu0 %1370
    %1372 = vrot.lane.b32.xlu0 %v1316, 125
    %v1373 = vpop.permute.xlu0 %1372
    %vm1374 = vcmp.lt.s32.totalorder %v41, 125
    %v1375 = vsel %vm1374, 1, 0
    %v1376 = vcvt.s32.f32 %v1375
    %v1377 = vmul.f32 %v1371, %v1376
    %v1378 = vmul.f32 %v1373, %v1376
    %1380 = vset.pattern.permute.xlu0 0
    %1381 = vperm.xlu0 %1380, %v1321
    %v1382 = vpop.permute.xlu0 %1381
    %1385 = vset.pattern.permute.xlu0 0
    %1386 = vperm.xlu0 %1385, %v1322
    %v1387 = vpop.permute.xlu0 %1386
    %1390 = vset.pattern.permute.xlu0 0
    %1391 = vperm.xlu0 %1390, %v1323
    %v1392 = vpop.permute.xlu0 %1391
    %1395 = vset.pattern.permute.xlu0 0
    %1396 = vperm.xlu0 %1395, %v1324
    %v1397 = vpop.permute.xlu0 %1396
    %vm1399 = vcmask 916480
    %v1401 = vsel %vm1399, %v1317, 0
    %v1404 = vsel %vm1399, %v1318, 0
    %v1407 = vsel %vm1399, %v1319, 0
    %v1410 = vsel %vm1399, %v1320, 0
    %1412 = vmatprep.subr.mxu0 0.0
    %1413 = vmatpush1.msra.mxu0 %v1332
    %1414 = vmatprep.subr.mxu0 0.0
    %1415 = vmatpush1.msra.mxu0 %v1333
    %1416 = vmatprep.subr.mxu0 0.0
    %1417 = vmatpush1.msra.mxu0 %v1341
    %1418 = vmatprep.subr.mxu0 0.0
    %1419 = vmatpush1.msra.mxu0 %v1342
    %1420 = vmatprep.subr.mxu0 0.0
    %1421 = vmatpush1.msra.mxu0 %v1350
    %1422 = vmatprep.subr.mxu0 0.0
    %1423 = vmatpush1.msra.mxu0 %v1351
    %1424 = vmatprep.subr.mxu0 0.0
    %1425 = vmatpush1.msra.mxu0 %v1137
    %1426 = vmatprep.subr.mxu0 0.0
    %1427 = vmatpush1.msra.mxu0 %v1316
    %1428 = vmatprep.subr.mxu0 0.0
    %1429 = vmatpush1.msra.mxu0 %v1359
    %1430 = vmatprep.subr.mxu0 0.0
    %1431 = vmatpush1.msra.mxu0 %v1360
    %1432 = vmatprep.subr.mxu0 0.0
    %1433 = vmatpush1.msra.mxu0 %v1368
    %1434 = vmatprep.subr.mxu0 0.0
    %1435 = vmatpush1.msra.mxu0 %v1369
    %1436 = vmatprep.subr.mxu0 0.0
    %1437 = vmatpush1.msra.mxu0 %v1377
    %1438 = vmatprep.subr.mxu0 0.0
    %1439 = vmatpush1.msra.mxu0 %v1378
    %1440 = vmatprep.subr.mxu0 0.0
    %1441 = vmatpush1.msra.mxu0 0.0
    %1442 = vmatprep.subr.mxu0 0.0
    %1443 = vmatpush1.msra.mxu0 0.0
    %1444 = vmatprep.subr.mxu0 0.0
    %1445 = vmatpush1.msra.mxu0 0.0
    %1446 = vmatprep.subr.mxu0 0.0
    %1447 = vmatpush1.msra.mxu0 0.0
    %1448 = vmatprep.subr.mxu0 0.0
    %1449 = vmatpush1.msra.mxu0 0.0
    %1450 = vmatprep.subr.mxu0 0.0
    %1451 = vmatpush1.msra.mxu0 0.0
    %1452 = vmatprep.subr.mxu0 0.0
    %1453 = vmatpush1.msra.mxu0 0.0
    %1454 = vmatprep.subr.mxu0 0.0
    %1455 = vmatpush1.msra.mxu0 0.0
    %1456 = vmatprep.subr.mxu0 0.0
    %1457 = vmatpush1.msra.mxu0 0.0
    %1458 = vmatprep.subr.mxu0 0.0
    %1459 = vmatpush1.msra.mxu0 0.0
    %1460 = vmatprep.subr.mxu0 0.0
    %1461 = vmatpush1.msra.mxu0 0.0
    %1462 = vmatprep.subr.mxu0 0.0
    %1463 = vmatpush1.msra.mxu0 0.0
    %1464 = vmatprep.subr.mxu0 0.0
    %1465 = vmatpush1.msra.mxu0 0.0
    %1466 = vmatprep.subr.mxu0 0.0
    %1467 = vmatpush1.msra.mxu0 0.0
    %1468 = vmatprep.subr.mxu0 0.0
    %1469 = vmatpush1.msra.mxu0 0.0
    %1470 = vmatprep.subr.mxu0 0.0
    %1471 = vmatpush1.msra.mxu0 0.0
    %1472 = vmatprep.subr.mxu0 0.0
    %1473 = vmatpush1.msra.mxu0 0.0
    %1474 = vmatprep.subr.mxu0 0.0
    %1475 = vmatpush1.msra.mxu0 0.0
    %1476 = vmatprep.mubr.f32.mxu0 0.0
    %1477 = vmatmul.mubr.f32.gmra.mrb[0].mxu0 %v1401
    %v1478 = vpop.f32.mrb[0].mxu0
    %v1479 = vadd.f32 %v1382, %v1478
    %v1480 = vpop.f32.mrb[0].mxu0
    %1481 = vmatprep.mubr.f32.mxu0 0.0
    %1482 = vmatmul.mubr.f32.gmra.mrb[0].mxu0 %v1404
    %v1483 = vpop.f32.mrb[0].mxu0
    %v1484 = vadd.f32 %v1387, %v1483
    %v1485 = vpop.f32.mrb[0].mxu0
    %1486 = vmatprep.mubr.f32.mxu0 0.0
    %1487 = vmatmul.mubr.f32.gmra.mrb[0].mxu0 %v1407
    %v1488 = vpop.f32.mrb[0].mxu0
    %v1489 = vadd.f32 %v1392, %v1488
    %v1490 = vpop.f32.mrb[0].mxu0
    %1491 = vmatprep.mubr.f32.mxu0 0.0
    %1492 = vmatmul.mubr.f32.gmra.mrb[0].mxu0 %v1410
    %v1493 = vpop.f32.mrb[0].mxu0
    %v1494 = vadd.f32 %v1397, %v1493
    %v1495 = vpop.f32.mrb[0].mxu0
    %1496 = vdwg.mxu0
    %v1497 = vadd.s32 %v35, 8
    %v1498 = vadd.s32 %v35, 16
    %v1499 = vadd.s32 %v35, 24
    %v1500 = vadd.s32 %v35, 32
    %v1501 = vadd.s32 %v35, 40
    %v1502 = vadd.s32 %v35, 48
    %v1503 = vadd.s32 %v35, 56
    %v1504 = vadd.s32 %v35, 64
    %v1505 = vadd.s32 %v35, 72
    %v1506 = vadd.s32 %v35, 80
    %v1507 = vadd.s32 %v35, 88
    %v1508 = vadd.s32 %v35, 96
    %v1509 = vadd.s32 %v35, 104
    %v1510 = vadd.s32 %v35, 112
    %v1511 = vadd.s32 %v35, 120
    %v1512 = vadd.s32 %v41, 128
    %v1513 = vmul.u32 %v35, 2
    %v1514 = vmul.u32 %v1497, 2
    %v1515 = vmul.u32 %v1498, 2
    %v1516 = vmul.u32 %v1499, 2
    %v1517 = vmul.u32 %v1500, 2
    %v1518 = vmul.u32 %v1501, 2
    %v1519 = vmul.u32 %v1502, 2
    %v1520 = vmul.u32 %v1503, 2
    %v1521 = vmul.u32 %v1504, 2
    %v1522 = vmul.u32 %v1505, 2
    %v1523 = vmul.u32 %v1506, 2
    %v1524 = vmul.u32 %v1507, 2
    %v1525 = vmul.u32 %v1508, 2
    %v1526 = vmul.u32 %v1509, 2
    %v1527 = vmul.u32 %v1510, 2
    %v1528 = vmul.u32 %v1511, 2
    %v1529 = vsub.s32 %v41, %v1513
    %v1530 = vsub.s32 %v1512, %v1513
    %v1531 = vsub.s32 %v41, %v1514
    %v1532 = vsub.s32 %v1512, %v1514
    %v1533 = vsub.s32 %v41, %v1515
    %v1534 = vsub.s32 %v1512, %v1515
    %v1535 = vsub.s32 %v41, %v1516
    %v1536 = vsub.s32 %v1512, %v1516
    %v1537 = vsub.s32 %v41, %v1517
    %v1538 = vsub.s32 %v1512, %v1517
    %v1539 = vsub.s32 %v41, %v1518
    %v1540 = vsub.s32 %v1512, %v1518
    %v1541 = vsub.s32 %v41, %v1519
    %v1542 = vsub.s32 %v1512, %v1519
    %v1543 = vsub.s32 %v41, %v1520
    %v1544 = vsub.s32 %v1512, %v1520
    %v1545 = vsub.s32 %v41, %v1521
    %v1546 = vsub.s32 %v1512, %v1521
    %v1547 = vsub.s32 %v41, %v1522
    %v1548 = vsub.s32 %v1512, %v1522
    %v1549 = vsub.s32 %v41, %v1523
    %v1550 = vsub.s32 %v1512, %v1523
    %v1551 = vsub.s32 %v41, %v1524
    %v1552 = vsub.s32 %v1512, %v1524
    %v1553 = vsub.s32 %v41, %v1525
    %v1554 = vsub.s32 %v1512, %v1525
    %v1555 = vsub.s32 %v41, %v1526
    %v1556 = vsub.s32 %v1512, %v1526
    %v1557 = vsub.s32 %v41, %v1527
    %v1558 = vsub.s32 %v1512, %v1527
    %v1559 = vsub.s32 %v41, %v1528
    %v1560 = vsub.s32 %v1512, %v1528
    %vm1561 = vcmp.ge.s32.totalorder %v1529, 0
    %vm1562 = vcmp.ge.s32.totalorder %v1530, 0
    %vm1563 = vcmp.ge.s32.totalorder %v1531, 0
    %vm1564 = vcmp.ge.s32.totalorder %v1532, 0
    %vm1565 = vcmp.ge.s32.totalorder %v1533, 0
    %vm1566 = vcmp.ge.s32.totalorder %v1534, 0
    %vm1567 = vcmp.ge.s32.totalorder %v1535, 0
    %vm1568 = vcmp.ge.s32.totalorder %v1536, 0
    %vm1569 = vcmp.ge.s32.totalorder %v1537, 0
    %vm1570 = vcmp.ge.s32.totalorder %v1538, 0
    %vm1571 = vcmp.ge.s32.totalorder %v1539, 0
    %vm1572 = vcmp.ge.s32.totalorder %v1540, 0
    %vm1573 = vcmp.ge.s32.totalorder %v1541, 0
    %vm1574 = vcmp.ge.s32.totalorder %v1542, 0
    %vm1575 = vcmp.ge.s32.totalorder %v1543, 0
    %vm1576 = vcmp.ge.s32.totalorder %v1544, 0
    %vm1577 = vcmp.ge.s32.totalorder %v1545, 0
    %vm1578 = vcmp.ge.s32.totalorder %v1546, 0
    %vm1579 = vcmp.ge.s32.totalorder %v1547, 0
    %vm1580 = vcmp.ge.s32.totalorder %v1548, 0
    %vm1581 = vcmp.ge.s32.totalorder %v1549, 0
    %vm1582 = vcmp.ge.s32.totalorder %v1550, 0
    %vm1583 = vcmp.ge.s32.totalorder %v1551, 0
    %vm1584 = vcmp.ge.s32.totalorder %v1552, 0
    %vm1585 = vcmp.ge.s32.totalorder %v1553, 0
    %vm1586 = vcmp.ge.s32.totalorder %v1554, 0
    %vm1587 = vcmp.ge.s32.totalorder %v1555, 0
    %vm1588 = vcmp.ge.s32.totalorder %v1556, 0
    %vm1589 = vcmp.ge.s32.totalorder %v1557, 0
    %vm1590 = vcmp.ge.s32.totalorder %v1558, 0
    %vm1591 = vcmp.ge.s32.totalorder %v1559, 0
    %vm1592 = vcmp.ge.s32.totalorder %v1560, 0
    %vm1593 = vcmp.le.s32.totalorder %v1529, 1
    %vm1594 = vcmp.le.s32.totalorder %v1530, 1
    %vm1595 = vcmp.le.s32.totalorder %v1531, 1
    %vm1596 = vcmp.le.s32.totalorder %v1532, 1
    %vm1597 = vcmp.le.s32.totalorder %v1533, 1
    %vm1598 = vcmp.le.s32.totalorder %v1534, 1
    %vm1599 = vcmp.le.s32.totalorder %v1535, 1
    %vm1600 = vcmp.le.s32.totalorder %v1536, 1
    %vm1601 = vcmp.le.s32.totalorder %v1537, 1
    %vm1602 = vcmp.le.s32.totalorder %v1538, 1
    %vm1603 = vcmp.le.s32.totalorder %v1539, 1
    %vm1604 = vcmp.le.s32.totalorder %v1540, 1
    %vm1605 = vcmp.le.s32.totalorder %v1541, 1
    %vm1606 = vcmp.le.s32.totalorder %v1542, 1
    %vm1607 = vcmp.le.s32.totalorder %v1543, 1
    %vm1608 = vcmp.le.s32.totalorder %v1544, 1
    %vm1609 = vcmp.le.s32.totalorder %v1545, 1
    %vm1610 = vcmp.le.s32.totalorder %v1546, 1
    %vm1611 = vcmp.le.s32.totalorder %v1547, 1
    %vm1612 = vcmp.le.s32.totalorder %v1548, 1
    %vm1613 = vcmp.le.s32.totalorder %v1549, 1
    %vm1614 = vcmp.le.s32.totalorder %v1550, 1
    %vm1615 = vcmp.le.s32.totalorder %v1551, 1
    %vm1616 = vcmp.le.s32.totalorder %v1552, 1
    %vm1617 = vcmp.le.s32.totalorder %v1553, 1
    %vm1618 = vcmp.le.s32.totalorder %v1554, 1
    %vm1619 = vcmp.le.s32.totalorder %v1555, 1
    %vm1620 = vcmp.le.s32.totalorder %v1556, 1
    %vm1621 = vcmp.le.s32.totalorder %v1557, 1
    %vm1622 = vcmp.le.s32.totalorder %v1558, 1
    %vm1623 = vcmp.le.s32.totalorder %v1559, 1
    %vm1624 = vcmp.le.s32.totalorder %v1560, 1
    %vm1625 = vmand %vm1561, %vm1593
    %vm1626 = vmand %vm1562, %vm1594
    %vm1627 = vmand %vm1563, %vm1595
    %vm1628 = vmand %vm1564, %vm1596
    %vm1629 = vmand %vm1565, %vm1597
    %vm1630 = vmand %vm1566, %vm1598
    %vm1631 = vmand %vm1567, %vm1599
    %vm1632 = vmand %vm1568, %vm1600
    %vm1633 = vmand %vm1569, %vm1601
    %vm1634 = vmand %vm1570, %vm1602
    %vm1635 = vmand %vm1571, %vm1603
    %vm1636 = vmand %vm1572, %vm1604
    %vm1637 = vmand %vm1573, %vm1605
    %vm1638 = vmand %vm1574, %vm1606
    %vm1639 = vmand %vm1575, %vm1607
    %vm1640 = vmand %vm1576, %vm1608
    %vm1641 = vmand %vm1577, %vm1609
    %vm1642 = vmand %vm1578, %vm1610
    %vm1643 = vmand %vm1579, %vm1611
    %vm1644 = vmand %vm1580, %vm1612
    %vm1645 = vmand %vm1581, %vm1613
    %vm1646 = vmand %vm1582, %vm1614
    %vm1647 = vmand %vm1583, %vm1615
    %vm1648 = vmand %vm1584, %vm1616
    %vm1649 = vmand %vm1585, %vm1617
    %vm1650 = vmand %vm1586, %vm1618
    %vm1651 = vmand %vm1587, %vm1619
    %vm1652 = vmand %vm1588, %vm1620
    %vm1653 = vmand %vm1589, %vm1621
    %vm1654 = vmand %vm1590, %vm1622
    %vm1655 = vmand %vm1591, %vm1623
    %vm1656 = vmand %vm1592, %vm1624
    %v1657 = vsel %vm1625, 1, 0
    %v1658 = vsel %vm1626, 1, 0
    %v1659 = vsel %vm1627, 1, 0
    %v1660 = vsel %vm1628, 1, 0
    %v1661 = vsel %vm1629, 1, 0
    %v1662 = vsel %vm1630, 1, 0
    %v1663 = vsel %vm1631, 1, 0
    %v1664 = vsel %vm1632, 1, 0
    %v1665 = vsel %vm1633, 1, 0
    %v1666 = vsel %vm1634, 1, 0
    %v1667 = vsel %vm1635, 1, 0
    %v1668 = vsel %vm1636, 1, 0
    %v1669 = vsel %vm1637, 1, 0
    %v1670 = vsel %vm1638, 1, 0
    %v1671 = vsel %vm1639, 1, 0
    %v1672 = vsel %vm1640, 1, 0
    %v1673 = vsel %vm1641, 1, 0
    %v1674 = vsel %vm1642, 1, 0
    %v1675 = vsel %vm1643, 1, 0
    %v1676 = vsel %vm1644, 1, 0
    %v1677 = vsel %vm1645, 1, 0
    %v1678 = vsel %vm1646, 1, 0
    %v1679 = vsel %vm1647, 1, 0
    %v1680 = vsel %vm1648, 1, 0
    %v1681 = vsel %vm1649, 1, 0
    %v1682 = vsel %vm1650, 1, 0
    %v1683 = vsel %vm1651, 1, 0
    %v1684 = vsel %vm1652, 1, 0
    %v1685 = vsel %vm1653, 1, 0
    %v1686 = vsel %vm1654, 1, 0
    %v1687 = vsel %vm1655, 1, 0
    %v1688 = vsel %vm1656, 1, 0
    %v1689 = vcvt.s32.f32 %v1657
    %v1690 = vcvt.s32.f32 %v1658
    %v1691 = vcvt.s32.f32 %v1659
    %v1692 = vcvt.s32.f32 %v1660
    %v1693 = vcvt.s32.f32 %v1661
    %v1694 = vcvt.s32.f32 %v1662
    %v1695 = vcvt.s32.f32 %v1663
    %v1696 = vcvt.s32.f32 %v1664
    %v1697 = vcvt.s32.f32 %v1665
    %v1698 = vcvt.s32.f32 %v1666
    %v1699 = vcvt.s32.f32 %v1667
    %v1700 = vcvt.s32.f32 %v1668
    %v1701 = vcvt.s32.f32 %v1669
    %v1702 = vcvt.s32.f32 %v1670
    %v1703 = vcvt.s32.f32 %v1671
    %v1704 = vcvt.s32.f32 %v1672
    %v1705 = vcvt.s32.f32 %v1673
    %v1706 = vcvt.s32.f32 %v1674
    %v1707 = vcvt.s32.f32 %v1675
    %v1708 = vcvt.s32.f32 %v1676
    %v1709 = vcvt.s32.f32 %v1677
    %v1710 = vcvt.s32.f32 %v1678
    %v1711 = vcvt.s32.f32 %v1679
    %v1712 = vcvt.s32.f32 %v1680
    %v1713 = vcvt.s32.f32 %v1681
    %v1714 = vcvt.s32.f32 %v1682
    %v1715 = vcvt.s32.f32 %v1683
    %v1716 = vcvt.s32.f32 %v1684
    %v1717 = vcvt.s32.f32 %v1685
    %v1718 = vcvt.s32.f32 %v1686
    %v1719 = vcvt.s32.f32 %v1687
    %v1720 = vcvt.s32.f32 %v1688
    %1721 = vmatprep.subr.mxu0 %v1690
    %1722 = vmatpush1.msra.mxu0 %v1689
    %1723 = vmatprep.subr.mxu0 %v1692
    %1724 = vmatpush1.msra.mxu0 %v1691
    %1725 = vmatprep.subr.mxu0 %v1694
    %1726 = vmatpush1.msra.mxu0 %v1693
    %1727 = vmatprep.subr.mxu0 %v1696
    %1728 = vmatpush1.msra.mxu0 %v1695
    %1729 = vmatprep.subr.mxu0 %v1698
    %1730 = vmatpush1.msra.mxu0 %v1697
    %1731 = vmatprep.subr.mxu0 %v1700
    %1732 = vmatpush1.msra.mxu0 %v1699
    %1733 = vmatprep.subr.mxu0 %v1702
    %1734 = vmatpush1.msra.mxu0 %v1701
    %1735 = vmatprep.subr.mxu0 %v1704
    %1736 = vmatpush1.msra.mxu0 %v1703
    %1737 = vmatprep.subr.mxu0 %v1706
    %1738 = vmatpush1.msra.mxu0 %v1705
    %1739 = vmatprep.subr.mxu0 %v1708
    %1740 = vmatpush1.msra.mxu0 %v1707
    %1741 = vmatprep.subr.mxu0 %v1710
    %1742 = vmatpush1.msra.mxu0 %v1709
    %1743 = vmatprep.subr.mxu0 %v1712
    %1744 = vmatpush1.msra.mxu0 %v1711
    %1745 = vmatprep.subr.mxu0 %v1714
    %1746 = vmatpush1.msra.mxu0 %v1713
    %1747 = vmatprep.subr.mxu0 %v1716
    %1748 = vmatpush1.msra.mxu0 %v1715
    %1749 = vmatprep.subr.mxu0 %v1718
    %1750 = vmatpush1.msra.mxu0 %v1717
    %1751 = vmatprep.subr.mxu0 %v1720
    %1752 = vmatpush1.msra.mxu0 %v1719
    %1753 = vmatprep.subr.mxu0 0.0
    %1754 = vmatpush1.msra.mxu0 0.0
    %1755 = vmatprep.subr.mxu0 0.0
    %1756 = vmatpush1.msra.mxu0 0.0
    %1757 = vmatprep.subr.mxu0 0.0
    %1758 = vmatpush1.msra.mxu0 0.0
    %1759 = vmatprep.subr.mxu0 0.0
    %1760 = vmatpush1.msra.mxu0 0.0
    %1761 = vmatprep.subr.mxu0 0.0
    %1762 = vmatpush1.msra.mxu0 0.0
    %1763 = vmatprep.subr.mxu0 0.0
    %1764 = vmatpush1.msra.mxu0 0.0
    %1765 = vmatprep.subr.mxu0 0.0
    %1766 = vmatpush1.msra.mxu0 0.0
    %1767 = vmatprep.subr.mxu0 0.0
    %1768 = vmatpush1.msra.mxu0 0.0
    %1769 = vmatprep.subr.mxu0 0.0
    %1770 = vmatpush1.msra.mxu0 0.0
    %1771 = vmatprep.subr.mxu0 0.0
    %1772 = vmatpush1.msra.mxu0 0.0
    %1773 = vmatprep.subr.mxu0 0.0
    %1774 = vmatpush1.msra.mxu0 0.0
    %1775 = vmatprep.subr.mxu0 0.0
    %1776 = vmatpush1.msra.mxu0 0.0
    %1777 = vmatprep.subr.mxu0 0.0
    %1778 = vmatpush1.msra.mxu0 0.0
    %1779 = vmatprep.subr.mxu0 0.0
    %1780 = vmatpush1.msra.mxu0 0.0
    %1781 = vmatprep.subr.mxu0 0.0
    %1782 = vmatpush1.msra.mxu0 0.0
    %1783 = vmatprep.subr.mxu0 0.0
    %1784 = vmatpush1.msra.mxu0 0.0
    %1785 = vmatprep.mubr.f32.mxu0 0.0
    %1786 = vmatmul.mubr.f32.gmra.mrb[0].mxu0 %v1479
    %v1787 = vpop.f32.mrb[0].mxu0
    %v1788 = vadd.f32 0.0, %v1787
    %v1789 = vpop.f32.mrb[0].mxu0
    %v1790 = vadd.f32 0.0, %v1789
    %1791 = vmatprep.mubr.f32.mxu0 0.0
    %1792 = vmatmul.mubr.f32.gmra.mrb[0].mxu0 %v1484
    %v1793 = vpop.f32.mrb[0].mxu0
    %v1794 = vadd.f32 0.0, %v1793
    %v1795 = vpop.f32.mrb[0].mxu0
    %v1796 = vadd.f32 0.0, %v1795
    %1797 = vmatprep.mubr.f32.mxu0 0.0
    %1798 = vmatmul.mubr.f32.gmra.mrb[0].mxu0 %v1489
    %v1799 = vpop.f32.mrb[0].mxu0
    %v1800 = vadd.f32 0.0, %v1799
    %v1801 = vpop.f32.mrb[0].mxu0
    %v1802 = vadd.f32 0.0, %v1801
    %1803 = vmatprep.mubr.f32.mxu0 0.0
    %1804 = vmatmul.mubr.f32.gmra.mrb[0].mxu0 %v1494
    %v1805 = vpop.f32.mrb[0].mxu0
    %v1806 = vadd.f32 0.0, %v1805
    %v1807 = vpop.f32.mrb[0].mxu0
    %v1808 = vadd.f32 0.0, %v1807
    %1809 = vdwg.mxu0
    %v1810 = vld [vmem:[#allocation3 + $0x2f0] sm:$0xff]
    %v1811 = vld [vmem:[#allocation3 + $0x2f8] sm:$0xff]
    %v1812 = vld [vmem:[#allocation3 + $0x300] sm:$0xff]
    %v1813 = vld [vmem:[#allocation3 + $0x308] sm:$0xff]
    %v1814 = vld [vmem:[#allocation3 + $0x310] sm:$0xff]
    %v1815 = vld [vmem:[#allocation3 + $0x320] sm:$0xff]
    %1816 = vrot.lane.b32.xlu0 %v1788, 2
    %v1817 = vpop.permute.xlu0 %1816
    %1818 = vrot.lane.b32.xlu0 %v1794, 2
    %v1819 = vpop.permute.xlu0 %1818
    %1820 = vrot.lane.b32.xlu0 %v1800, 2
    %v1821 = vpop.permute.xlu0 %1820
    %1822 = vrot.lane.b32.xlu0 %v1806, 2
    %v1823 = vpop.permute.xlu0 %1822
    %1824 = vrot.lane.b32.xlu0 %v1790, 2
    %v1825 = vpop.permute.xlu0 %1824
    %1826 = vrot.lane.b32.xlu0 %v1796, 2
    %v1827 = vpop.permute.xlu0 %1826
    %1828 = vrot.lane.b32.xlu0 %v1802, 2
    %v1829 = vpop.permute.xlu0 %1828
    %1830 = vrot.lane.b32.xlu0 %v1808, 2
    %v1831 = vpop.permute.xlu0 %1830
    %vm1832 = vcmp.lt.s32.totalorder %v41, 2
    %v1833 = vsel %vm1832, %v1817, %v1825
    %v1834 = vsel %vm1832, %v1819, %v1827
    %v1835 = vsel %vm1832, %v1821, %v1829
    %v1836 = vsel %vm1832, %v1823, %v1831
    %v1837 = vsel %vm1832, %v1825, %v1817
    %v1838 = vsel %vm1832, %v1827, %v1819
    %v1839 = vsel %vm1832, %v1829, %v1821
    %v1840 = vsel %vm1832, %v1831, %v1823
    %vm1841 = vcmp.ge.s32.totalorder %v1512, 2
    %v1842 = vsel %vm1841, 1, 0
    %v1843 = vcvt.s32.f32 %v1842
    %v1844 = vmul.f32 %v1837, %v1340
    %v1845 = vmul.f32 %v1833, %v1843
    %v1846 = vmul.f32 %v1838, %v1340
    %v1847 = vmul.f32 %v1834, %v1843
    %v1848 = vmul.f32 %v1839, %v1340
    %v1849 = vmul.f32 %v1835, %v1843
    %v1850 = vmul.f32 %v1840, %v1340
    %v1851 = vmul.f32 %v1836, %v1843
    %1852 = vrot.lane.b32.xlu0 %v1788, 1
    %v1853 = vpop.permute.xlu0 %1852
    %1854 = vrot.lane.b32.xlu0 %v1794, 1
    %v1855 = vpop.permute.xlu0 %1854
    %1856 = vrot.lane.b32.xlu0 %v1800, 1
    %v1857 = vpop.permute.xlu0 %1856
    %1858 = vrot.lane.b32.xlu0 %v1806, 1
    %v1859 = vpop.permute.xlu0 %1858
    %1860 = vrot.lane.b32.xlu0 %v1790, 1
    %v1861 = vpop.permute.xlu0 %1860
    %1862 = vrot.lane.b32.xlu0 %v1796, 1
    %v1863 = vpop.permute.xlu0 %1862
    %1864 = vrot.lane.b32.xlu0 %v1802, 1
    %v1865 = vpop.permute.xlu0 %1864
    %1866 = vrot.lane.b32.xlu0 %v1808, 1
    %v1867 = vpop.permute.xlu0 %1866
    %vm1868 = vcmp.lt.s32.totalorder %v41, 1
    %v1869 = vsel %vm1868, %v1853, %v1861
    %v1870 = vsel %vm1868, %v1855, %v1863
    %v1871 = vsel %vm1868, %v1857, %v1865
    %v1872 = vsel %vm1868, %v1859, %v1867
    %v1873 = vsel %vm1868, %v1861, %v1853
    %v1874 = vsel %vm1868, %v1863, %v1855
    %v1875 = vsel %vm1868, %v1865, %v1857
    %v1876 = vsel %vm1868, %v1867, %v1859
    %vm1877 = vcmp.ge.s32.totalorder %v1512, 1
    %v1878 = vsel %vm1877, 1, 0
    %v1879 = vcvt.s32.f32 %v1878
    %v1880 = vmul.f32 %v1873, %v1349
    %v1881 = vmul.f32 %v1869, %v1879
    %v1882 = vmul.f32 %v1874, %v1349
    %v1883 = vmul.f32 %v1870, %v1879
    %v1884 = vmul.f32 %v1875, %v1349
    %v1885 = vmul.f32 %v1871, %v1879
    %v1886 = vmul.f32 %v1876, %v1349
    %v1887 = vmul.f32 %v1872, %v1879
    %1888 = vrot.lane.b32.xlu0 %v1788, 127
    %v1889 = vpop.permute.xlu0 %1888
    %1890 = vrot.lane.b32.xlu0 %v1794, 127
    %v1891 = vpop.permute.xlu0 %1890
    %1892 = vrot.lane.b32.xlu0 %v1800, 127
    %v1893 = vpop.permute.xlu0 %1892
    %1894 = vrot.lane.b32.xlu0 %v1806, 127
    %v1895 = vpop.permute.xlu0 %1894
    %1896 = vrot.lane.b32.xlu0 %v1790, 127
    %v1897 = vpop.permute.xlu0 %1896
    %1898 = vrot.lane.b32.xlu0 %v1796, 127
    %v1899 = vpop.permute.xlu0 %1898
    %1900 = vrot.lane.b32.xlu0 %v1802, 127
    %v1901 = vpop.permute.xlu0 %1900
    %1902 = vrot.lane.b32.xlu0 %v1808, 127
    %v1903 = vpop.permute.xlu0 %1902
    %v1904 = vsel %vm1356, %v1889, %v1897
    %v1905 = vsel %vm1356, %v1891, %v1899
    %v1906 = vsel %vm1356, %v1893, %v1901
    %v1907 = vsel %vm1356, %v1895, %v1903
    %v1908 = vsel %vm1356, %v1897, %v1889
    %v1909 = vsel %vm1356, %v1899, %v1891
    %v1910 = vsel %vm1356, %v1901, %v1893
    %v1911 = vsel %vm1356, %v1903, %v1895
    %vm1912 = vcmp.lt.s32.totalorder %v41, 255
    %vm1913 = vcmp.lt.s32.totalorder %v1512, 255
    %v1914 = vsel %vm1912, 1, 0
    %v1915 = vsel %vm1913, 1, 0
    %v1916 = vcvt.s32.f32 %v1914
    %v1917 = vcvt.s32.f32 %v1915
    %v1918 = vmul.f32 %v1904, %v1916
    %v1919 = vmul.f32 %v1908, %v1917
    %v1920 = vmul.f32 %v1905, %v1916
    %v1921 = vmul.f32 %v1909, %v1917
    %v1922 = vmul.f32 %v1906, %v1916
    %v1923 = vmul.f32 %v1910, %v1917
    %v1924 = vmul.f32 %v1907, %v1916
    %v1925 = vmul.f32 %v1911, %v1917
    %1926 = vrot.lane.b32.xlu0 %v1788, 126
    %v1927 = vpop.permute.xlu0 %1926
    %1928 = vrot.lane.b32.xlu0 %v1794, 126
    %v1929 = vpop.permute.xlu0 %1928
    %1930 = vrot.lane.b32.xlu0 %v1800, 126
    %v1931 = vpop.permute.xlu0 %1930
    %1932 = vrot.lane.b32.xlu0 %v1806, 126
    %v1933 = vpop.permute.xlu0 %1932
    %1934 = vrot.lane.b32.xlu0 %v1790, 126
    %v1935 = vpop.permute.xlu0 %1934
    %1936 = vrot.lane.b32.xlu0 %v1796, 126
    %v1937 = vpop.permute.xlu0 %1936
    %1938 = vrot.lane.b32.xlu0 %v1802, 126
    %v1939 = vpop.permute.xlu0 %1938
    %1940 = vrot.lane.b32.xlu0 %v1808, 126
    %v1941 = vpop.permute.xlu0 %1940
    %v1942 = vsel %vm1365, %v1927, %v1935
    %v1943 = vsel %vm1365, %v1929, %v1937
    %v1944 = vsel %vm1365, %v1931, %v1939
    %v1945 = vsel %vm1365, %v1933, %v1941
    %v1946 = vsel %vm1365, %v1935, %v1927
    %v1947 = vsel %vm1365, %v1937, %v1929
    %v1948 = vsel %vm1365, %v1939, %v1931
    %v1949 = vsel %vm1365, %v1941, %v1933
    %vm1950 = vcmp.lt.s32.totalorder %v41, 254
    %vm1951 = vcmp.lt.s32.totalorder %v1512, 254
    %v1952 = vsel %vm1950, 1, 0
    %v1953 = vsel %vm1951, 1, 0
    %v1954 = vcvt.s32.f32 %v1952
    %v1955 = vcvt.s32.f32 %v1953
    %v1956 = vmul.f32 %v1942, %v1954
    %v1957 = vmul.f32 %v1946, %v1955
    %v1958 = vmul.f32 %v1943, %v1954
    %v1959 = vmul.f32 %v1947, %v1955
    %v1960 = vmul.f32 %v1944, %v1954
    %v1961 = vmul.f32 %v1948, %v1955
    %v1962 = vmul.f32 %v1945, %v1954
    %v1963 = vmul.f32 %v1949, %v1955
    %1965 = vset.pattern.permute.xlu0 0
    %1966 = vperm.xlu0 %1965, %v1814
    %v1967 = vpop.permute.xlu0 %1966
    %1970 = vset.pattern.permute.xlu0 0
    %1971 = vperm.xlu0 %1970, %v1815
    %v1972 = vpop.permute.xlu0 %1971
    %v1975 = vsel %vm141, %v1811, 0
    %v1978 = vsel %vm141, %v1813, 0
    %1980 = vmatprep.subr.mxu0 %v1845
    %1981 = vmatpush1.msra.mxu0 %v1844
    %1982 = vmatprep.subr.mxu0 %v1847
    %1983 = vmatpush1.msra.mxu0 %v1846
    %1984 = vmatprep.subr.mxu0 %v1849
    %1985 = vmatpush1.msra.mxu0 %v1848
    %1986 = vmatprep.subr.mxu0 %v1851
    %1987 = vmatpush1.msra.mxu0 %v1850
    %1988 = vmatprep.subr.mxu0 %v1881
    %1989 = vmatpush1.msra.mxu0 %v1880
    %1990 = vmatprep.subr.mxu0 %v1883
    %1991 = vmatpush1.msra.mxu0 %v1882
    %1992 = vmatprep.subr.mxu0 %v1885
    %1993 = vmatpush1.msra.mxu0 %v1884
    %1994 = vmatprep.subr.mxu0 %v1887
    %1995 = vmatpush1.msra.mxu0 %v1886
    %1996 = vmatprep.subr.mxu0 %v1790
    %1997 = vmatpush1.msra.mxu0 %v1788
    %1998 = vmatprep.subr.mxu0 %v1796
    %1999 = vmatpush1.msra.mxu0 %v1794
    %2000 = vmatprep.subr.mxu0 %v1802
    %2001 = vmatpush1.msra.mxu0 %v1800
    %2002 = vmatprep.subr.mxu0 %v1808
    %2003 = vmatpush1.msra.mxu0 %v1806
    %2004 = vmatprep.subr.mxu0 %v1919
    %2005 = vmatpush1.msra.mxu0 %v1918
    %2006 = vmatprep.subr.mxu0 %v1921
    %2007 = vmatpush1.msra.mxu0 %v1920
    %2008 = vmatprep.subr.mxu0 %v1923
    %2009 = vmatpush1.msra.mxu0 %v1922
    %2010 = vmatprep.subr.mxu0 %v1925
    %2011 = vmatpush1.msra.mxu0 %v1924
    %2012 = vmatprep.subr.mxu0 %v1957
    %2013 = vmatpush1.msra.mxu0 %v1956
    %2014 = vmatprep.subr.mxu0 %v1959
    %2015 = vmatpush1.msra.mxu0 %v1958
    %2016 = vmatprep.subr.mxu0 %v1961
    %2017 = vmatpush1.msra.mxu0 %v1960
    %2018 = vmatprep.subr.mxu0 %v1963
    %2019 = vmatpush1.msra.mxu0 %v1962
    %2020 = vmatprep.subr.mxu0 0.0
    %2021 = vmatpush1.msra.mxu0 0.0
    %2022 = vmatprep.subr.mxu0 0.0
    %2023 = vmatpush1.msra.mxu0 0.0
    %2024 = vmatprep.subr.mxu0 0.0
    %2025 = vmatpush1.msra.mxu0 0.0
    %2026 = vmatprep.subr.mxu0 0.0
    %2027 = vmatpush1.msra.mxu0 0.0
    %2028 = vmatprep.subr.mxu0 0.0
    %2029 = vmatpush1.msra.mxu0 0.0
    %2030 = vmatprep.subr.mxu0 0.0
    %2031 = vmatpush1.msra.mxu0 0.0
    %2032 = vmatprep.subr.mxu0 0.0
    %2033 = vmatpush1.msra.mxu0 0.0
    %2034 = vmatprep.subr.mxu0 0.0
    %2035 = vmatpush1.msra.mxu0 0.0
    %2036 = vmatprep.subr.mxu0 0.0
    %2037 = vmatpush1.msra.mxu0 0.0
    %2038 = vmatprep.subr.mxu0 0.0
    %2039 = vmatpush1.msra.mxu0 0.0
    %2040 = vmatprep.subr.mxu0 0.0
    %2041 = vmatpush1.msra.mxu0 0.0
    %2042 = vmatprep.subr.mxu0 0.0
    %2043 = vmatpush1.msra.mxu0 0.0
    %2044 = vmatprep.mubr.f32.mxu0 %v1975
    %2045 = vmatmul.mubr.f32.gmra.mrb[0].mxu0 %v1810
    %v2046 = vpop.f32.mrb[0].mxu0
    %v2047 = vadd.f32 %v1967, %v2046
    %v2048 = vpop.f32.mrb[0].mxu0
    %v2049 = vadd.f32 %v1967, %v2048
    %2050 = vmatprep.mubr.f32.mxu0 %v1978
    %2051 = vmatmul.mubr.f32.gmra.mrb[0].mxu0 %v1812
    %v2052 = vpop.f32.mrb[0].mxu0
    %v2053 = vadd.f32 %v1972, %v2052
    %v2054 = vpop.f32.mrb[0].mxu0
    %v2055 = vadd.f32 %v1972, %v2054
    %2056 = vdwg.mxu0
    %vm2057 = vcmp.gt.f32.partialorder %v2047, 0.0
    %vm2058 = vcmp.gt.f32.partialorder %v2049, 0.0
    %vm2059 = vcmp.gt.f32.partialorder %v2053, 0.0
    %vm2060 = vcmp.gt.f32.partialorder %v2055, 0.0
    %v2061 = vmul.f32 %v2047, 0.1
    %v2062 = vmul.f32 %v2049, 0.1
    %v2063 = vmul.f32 %v2053, 0.1
    %v2064 = vmul.f32 %v2055, 0.1
    %v2065 = vsel %vm2057, %v2047, %v2061
    %v2066 = vsel %vm2058, %v2049, %v2062
    %v2067 = vsel %vm2059, %v2053, %v2063
    %v2068 = vsel %vm2060, %v2055, %v2064
    %v2069 = vadd.s32 %v35, 128
    %v2070 = vadd.s32 %v35, 136
    %v2071 = vadd.s32 %v35, 144
    %v2072 = vadd.s32 %v35, 152
    %v2073 = vadd.s32 %v35, 160
    %v2074 = vadd.s32 %v35, 168
    %v2075 = vadd.s32 %v35, 176
    %v2076 = vadd.s32 %v35, 184
    %v2077 = vadd.s32 %v35, 192
    %v2078 = vadd.s32 %v35, 200
    %v2079 = vadd.s32 %v35, 208
    %v2080 = vadd.s32 %v35, 216
    %v2081 = vadd.s32 %v35, 224
    %v2082 = vadd.s32 %v35, 232
    %v2083 = vadd.s32 %v35, 240
    %v2084 = vadd.s32 %v35, 248
    %v2085 = vadd.s32 %v41, 256
    %v2086 = vadd.s32 %v41, 384
    %v2087 = vmul.u32 %v2069, 2
    %v2088 = vmul.u32 %v2070, 2
    %v2089 = vmul.u32 %v2071, 2
    %v2090 = vmul.u32 %v2072, 2
    %v2091 = vmul.u32 %v2073, 2
    %v2092 = vmul.u32 %v2074, 2
    %v2093 = vmul.u32 %v2075, 2
    %v2094 = vmul.u32 %v2076, 2
    %v2095 = vmul.u32 %v2077, 2
    %v2096 = vmul.u32 %v2078, 2
    %v2097 = vmul.u32 %v2079, 2
    %v2098 = vmul.u32 %v2080, 2
    %v2099 = vmul.u32 %v2081, 2
    %v2100 = vmul.u32 %v2082, 2
    %v2101 = vmul.u32 %v2083, 2
    %v2102 = vmul.u32 %v2084, 2
    %v2103 = vsub.s32 %v2085, %v1513
    %v2104 = vsub.s32 %v2086, %v1513
    %v2105 = vsub.s32 %v2085, %v1514
    %v2106 = vsub.s32 %v2086, %v1514
    %v2107 = vsub.s32 %v2085, %v1515
    %v2108 = vsub.s32 %v2086, %v1515
    %v2109 = vsub.s32 %v2085, %v1516
    %v2110 = vsub.s32 %v2086, %v1516
    %v2111 = vsub.s32 %v2085, %v1517
    %v2112 = vsub.s32 %v2086, %v1517
    %v2113 = vsub.s32 %v2085, %v1518
    %v2114 = vsub.s32 %v2086, %v1518
    %v2115 = vsub.s32 %v2085, %v1519
    %v2116 = vsub.s32 %v2086, %v1519
    %v2117 = vsub.s32 %v2085, %v1520
    %v2118 = vsub.s32 %v2086, %v1520
    %v2119 = vsub.s32 %v2085, %v1521
    %v2120 = vsub.s32 %v2086, %v1521
    %v2121 = vsub.s32 %v2085, %v1522
    %v2122 = vsub.s32 %v2086, %v1522
    %v2123 = vsub.s32 %v2085, %v1523
    %v2124 = vsub.s32 %v2086, %v1523
    %v2125 = vsub.s32 %v2085, %v1524
    %v2126 = vsub.s32 %v2086, %v1524
    %v2127 = vsub.s32 %v2085, %v1525
    %v2128 = vsub.s32 %v2086, %v1525
    %v2129 = vsub.s32 %v2085, %v1526
    %v2130 = vsub.s32 %v2086, %v1526
    %v2131 = vsub.s32 %v2085, %v1527
    %v2132 = vsub.s32 %v2086, %v1527
    %v2133 = vsub.s32 %v2085, %v1528
    %v2134 = vsub.s32 %v2086, %v1528
    %v2135 = vsub.s32 %v41, %v2087
    %v2136 = vsub.s32 %v1512, %v2087
    %v2137 = vsub.s32 %v2085, %v2087
    %v2138 = vsub.s32 %v2086, %v2087
    %v2139 = vsub.s32 %v41, %v2088
    %v2140 = vsub.s32 %v1512, %v2088
    %v2141 = vsub.s32 %v2085, %v2088
    %v2142 = vsub.s32 %v2086, %v2088
    %v2143 = vsub.s32 %v41, %v2089
    %v2144 = vsub.s32 %v1512, %v2089
    %v2145 = vsub.s32 %v2085, %v2089
    %v2146 = vsub.s32 %v2086, %v2089
    %v2147 = vsub.s32 %v41, %v2090
    %v2148 = vsub.s32 %v1512, %v2090
    %v2149 = vsub.s32 %v2085, %v2090
    %v2150 = vsub.s32 %v2086, %v2090
    %v2151 = vsub.s32 %v41, %v2091
    %v2152 = vsub.s32 %v1512, %v2091
    %v2153 = vsub.s32 %v2085, %v2091
    %v2154 = vsub.s32 %v2086, %v2091
    %v2155 = vsub.s32 %v41, %v2092
    %v2156 = vsub.s32 %v1512, %v2092
    %v2157 = vsub.s32 %v2085, %v2092
    %v2158 = vsub.s32 %v2086, %v2092
    %v2159 = vsub.s32 %v41, %v2093
    %v2160 = vsub.s32 %v1512, %v2093
    %v2161 = vsub.s32 %v2085, %v2093
    %v2162 = vsub.s32 %v2086, %v2093
    %v2163 = vsub.s32 %v41, %v2094
    %v2164 = vsub.s32 %v1512, %v2094
    %v2165 = vsub.s32 %v2085, %v2094
    %v2166 = vsub.s32 %v2086, %v2094
    %v2167 = vsub.s32 %v41, %v2095
    %v2168 = vsub.s32 %v1512, %v2095
    %v2169 = vsub.s32 %v2085, %v2095
    %v2170 = vsub.s32 %v2086, %v2095
    %v2171 = vsub.s32 %v41, %v2096
    %v2172 = vsub.s32 %v1512, %v2096
    %v2173 = vsub.s32 %v2085, %v2096
    %v2174 = vsub.s32 %v2086, %v2096
    %v2175 = vsub.s32 %v41, %v2097
    %v2176 = vsub.s32 %v1512, %v2097
    %v2177 = vsub.s32 %v2085, %v2097
    %v2178 = vsub.s32 %v2086, %v2097
    %v2179 = vsub.s32 %v41, %v2098
    %v2180 = vsub.s32 %v1512, %v2098
    %v2181 = vsub.s32 %v2085, %v2098
    %v2182 = vsub.s32 %v2086, %v2098
    %v2183 = vsub.s32 %v41, %v2099
    %v2184 = vsub.s32 %v1512, %v2099
    %v2185 = vsub.s32 %v2085, %v2099
    %v2186 = vsub.s32 %v2086, %v2099
    %v2187 = vsub.s32 %v41, %v2100
    %v2188 = vsub.s32 %v1512, %v2100
    %v2189 = vsub.s32 %v2085, %v2100
    %v2190 = vsub.s32 %v2086, %v2100
    %v2191 = vsub.s32 %v41, %v2101
    %v2192 = vsub.s32 %v1512, %v2101
    %v2193 = vsub.s32 %v2085, %v2101
    %v2194 = vsub.s32 %v2086, %v2101
    %v2195 = vsub.s32 %v41, %v2102
    %v2196 = vsub.s32 %v1512, %v2102
    %v2197 = vsub.s32 %v2085, %v2102
    %v2198 = vsub.s32 %v2086, %v2102
    %vm2199 = vcmp.ge.s32.totalorder %v2103, 0
    %vm2200 = vcmp.ge.s32.totalorder %v2104, 0
    %vm2201 = vcmp.ge.s32.totalorder %v2105, 0
    %vm2202 = vcmp.ge.s32.totalorder %v2106, 0
    %vm2203 = vcmp.ge.s32.totalorder %v2107, 0
    %vm2204 = vcmp.ge.s32.totalorder %v2108, 0
    %vm2205 = vcmp.ge.s32.totalorder %v2109, 0
    %vm2206 = vcmp.ge.s32.totalorder %v2110, 0
    %vm2207 = vcmp.ge.s32.totalorder %v2111, 0
    %vm2208 = vcmp.ge.s32.totalorder %v2112, 0
    %vm2209 = vcmp.ge.s32.totalorder %v2113, 0
    %vm2210 = vcmp.ge.s32.totalorder %v2114, 0
    %vm2211 = vcmp.ge.s32.totalorder %v2115, 0
    %vm2212 = vcmp.ge.s32.totalorder %v2116, 0
    %vm2213 = vcmp.ge.s32.totalorder %v2117, 0
    %vm2214 = vcmp.ge.s32.totalorder %v2118, 0
    %vm2215 = vcmp.ge.s32.totalorder %v2119, 0
    %vm2216 = vcmp.ge.s32.totalorder %v2120, 0
    %vm2217 = vcmp.ge.s32.totalorder %v2121, 0
    %vm2218 = vcmp.ge.s32.totalorder %v2122, 0
    %vm2219 = vcmp.ge.s32.totalorder %v2123, 0
    %vm2220 = vcmp.ge.s32.totalorder %v2124, 0
    %vm2221 = vcmp.ge.s32.totalorder %v2125, 0
    %vm2222 = vcmp.ge.s32.totalorder %v2126, 0
    %vm2223 = vcmp.ge.s32.totalorder %v2127, 0
    %vm2224 = vcmp.ge.s32.totalorder %v2128, 0
    %vm2225 = vcmp.ge.s32.totalorder %v2129, 0
    %vm2226 = vcmp.ge.s32.totalorder %v2130, 0
    %vm2227 = vcmp.ge.s32.totalorder %v2131, 0
    %vm2228 = vcmp.ge.s32.totalorder %v2132, 0
    %vm2229 = vcmp.ge.s32.totalorder %v2133, 0
    %vm2230 = vcmp.ge.s32.totalorder %v2134, 0
    %vm2231 = vcmp.ge.s32.totalorder %v2135, 0
    %vm2232 = vcmp.ge.s32.totalorder %v2136, 0
    %vm2233 = vcmp.ge.s32.totalorder %v2137, 0
    %vm2234 = vcmp.ge.s32.totalorder %v2138, 0
    %vm2235 = vcmp.ge.s32.totalorder %v2139, 0
    %vm2236 = vcmp.ge.s32.totalorder %v2140, 0
    %vm2237 = vcmp.ge.s32.totalorder %v2141, 0
    %vm2238 = vcmp.ge.s32.totalorder %v2142, 0
    %vm2239 = vcmp.ge.s32.totalorder %v2143, 0
    %vm2240 = vcmp.ge.s32.totalorder %v2144, 0
    %vm2241 = vcmp.ge.s32.totalorder %v2145, 0
    %vm2242 = vcmp.ge.s32.totalorder %v2146, 0
    %vm2243 = vcmp.ge.s32.totalorder %v2147, 0
    %vm2244 = vcmp.ge.s32.totalorder %v2148, 0
    %vm2245 = vcmp.ge.s32.totalorder %v2149, 0
    %vm2246 = vcmp.ge.s32.totalorder %v2150, 0
    %vm2247 = vcmp.ge.s32.totalorder %v2151, 0
    %vm2248 = vcmp.ge.s32.totalorder %v2152, 0
    %vm2249 = vcmp.ge.s32.totalorder %v2153, 0
    %vm2250 = vcmp.ge.s32.totalorder %v2154, 0
    %vm2251 = vcmp.ge.s32.totalorder %v2155, 0
    %vm2252 = vcmp.ge.s32.totalorder %v2156, 0
    %vm2253 = vcmp.ge.s32.totalorder %v2157, 0
    %vm2254 = vcmp.ge.s32.totalorder %v2158, 0
    %vm2255 = vcmp.ge.s32.totalorder %v2159, 0
    %vm2256 = vcmp.ge.s32.totalorder %v2160, 0
    %vm2257 = vcmp.ge.s32.totalorder %v2161, 0
    %vm2258 = vcmp.ge.s32.totalorder %v2162, 0
    %vm2259 = vcmp.ge.s32.totalorder %v2163, 0
    %vm2260 = vcmp.ge.s32.totalorder %v2164, 0
    %vm2261 = vcmp.ge.s32.totalorder %v2165, 0
    %vm2262 = vcmp.ge.s32.totalorder %v2166, 0
    %vm2263 = vcmp.ge.s32.totalorder %v2167, 0
    %vm2264 = vcmp.ge.s32.totalorder %v2168, 0
    %vm2265 = vcmp.ge.s32.totalorder %v2169, 0
    %vm2266 = vcmp.ge.s32.totalorder %v2170, 0
    %vm2267 = vcmp.ge.s32.totalorder %v2171, 0
    %vm2268 = vcmp.ge.s32.totalorder %v2172, 0
    %vm2269 = vcmp.ge.s32.totalorder %v2173, 0
    %vm2270 = vcmp.ge.s32.totalorder %v2174, 0
    %vm2271 = vcmp.ge.s32.totalorder %v2175, 0
    %vm2272 = vcmp.ge.s32.totalorder %v2176, 0
    %vm2273 = vcmp.ge.s32.totalorder %v2177, 0
    %vm2274 = vcmp.ge.s32.totalorder %v2178, 0
    %vm2275 = vcmp.ge.s32.totalorder %v2179, 0
    %vm2276 = vcmp.ge.s32.totalorder %v2180, 0
    %vm2277 = vcmp.ge.s32.totalorder %v2181, 0
    %vm2278 = vcmp.ge.s32.totalorder %v2182, 0
    %vm2279 = vcmp.ge.s32.totalorder %v2183, 0
    %vm2280 = vcmp.ge.s32.totalorder %v2184, 0
    %vm2281 = vcmp.ge.s32.totalorder %v2185, 0
    %vm2282 = vcmp.ge.s32.totalorder %v2186, 0
    %vm2283 = vcmp.ge.s32.totalorder %v2187, 0
    %vm2284 = vcmp.ge.s32.totalorder %v2188, 0
    %vm2285 = vcmp.ge.s32.totalorder %v2189, 0
    %vm2286 = vcmp.ge.s32.totalorder %v2190, 0
    %vm2287 = vcmp.ge.s32.totalorder %v2191, 0
    %vm2288 = vcmp.ge.s32.totalorder %v2192, 0
    %vm2289 = vcmp.ge.s32.totalorder %v2193, 0
    %vm2290 = vcmp.ge.s32.totalorder %v2194, 0
    %vm2291 = vcmp.ge.s32.totalorder %v2195, 0
    %vm2292 = vcmp.ge.s32.totalorder %v2196, 0
    %vm2293 = vcmp.ge.s32.totalorder %v2197, 0
    %vm2294 = vcmp.ge.s32.totalorder %v2198, 0
    %vm2295 = vcmp.le.s32.totalorder %v2103, 1
    %vm2296 = vcmp.le.s32.totalorder %v2104, 1
    %vm2297 = vcmp.le.s32.totalorder %v2105, 1
    %vm2298 = vcmp.le.s32.totalorder %v2106, 1
    %vm2299 = vcmp.le.s32.totalorder %v2107, 1
    %vm2300 = vcmp.le.s32.totalorder %v2108, 1
    %vm2301 = vcmp.le.s32.totalorder %v2109, 1
    %vm2302 = vcmp.le.s32.totalorder %v2110, 1
    %vm2303 = vcmp.le.s32.totalorder %v2111, 1
    %vm2304 = vcmp.le.s32.totalorder %v2112, 1
    %vm2305 = vcmp.le.s32.totalorder %v2113, 1
    %vm2306 = vcmp.le.s32.totalorder %v2114, 1
    %vm2307 = vcmp.le.s32.totalorder %v2115, 1
    %vm2308 = vcmp.le.s32.totalorder %v2116, 1
    %vm2309 = vcmp.le.s32.totalorder %v2117, 1
    %vm2310 = vcmp.le.s32.totalorder %v2118, 1
    %vm2311 = vcmp.le.s32.totalorder %v2119, 1
    %vm2312 = vcmp.le.s32.totalorder %v2120, 1
    %vm2313 = vcmp.le.s32.totalorder %v2121, 1
    %vm2314 = vcmp.le.s32.totalorder %v2122, 1
    %vm2315 = vcmp.le.s32.totalorder %v2123, 1
    %vm2316 = vcmp.le.s32.totalorder %v2124, 1
    %vm2317 = vcmp.le.s32.totalorder %v2125, 1
    %vm2318 = vcmp.le.s32.totalorder %v2126, 1
    %vm2319 = vcmp.le.s32.totalorder %v2127, 1
    %vm2320 = vcmp.le.s32.totalorder %v2128, 1
    %vm2321 = vcmp.le.s32.totalorder %v2129, 1
    %vm2322 = vcmp.le.s32.totalorder %v2130, 1
    %vm2323 = vcmp.le.s32.totalorder %v2131, 1
    %vm2324 = vcmp.le.s32.totalorder %v2132, 1
    %vm2325 = vcmp.le.s32.totalorder %v2133, 1
    %vm2326 = vcmp.le.s32.totalorder %v2134, 1
    %vm2327 = vcmp.le.s32.totalorder %v2135, 1
    %vm2328 = vcmp.le.s32.totalorder %v2136, 1
    %vm2329 = vcmp.le.s32.totalorder %v2137, 1
    %vm2330 = vcmp.le.s32.totalorder %v2138, 1
    %vm2331 = vcmp.le.s32.totalorder %v2139, 1
    %vm2332 = vcmp.le.s32.totalorder %v2140, 1
    %vm2333 = vcmp.le.s32.totalorder %v2141, 1
    %vm2334 = vcmp.le.s32.totalorder %v2142, 1
    %vm2335 = vcmp.le.s32.totalorder %v2143, 1
    %vm2336 = vcmp.le.s32.totalorder %v2144, 1
    %vm2337 = vcmp.le.s32.totalorder %v2145, 1
    %vm2338 = vcmp.le.s32.totalorder %v2146, 1
    %vm2339 = vcmp.le.s32.totalorder %v2147, 1
    %vm2340 = vcmp.le.s32.totalorder %v2148, 1
    %vm2341 = vcmp.le.s32.totalorder %v2149, 1
    %vm2342 = vcmp.le.s32.totalorder %v2150, 1
    %vm2343 = vcmp.le.s32.totalorder %v2151, 1
    %vm2344 = vcmp.le.s32.totalorder %v2152, 1
    %vm2345 = vcmp.le.s32.totalorder %v2153, 1
    %vm2346 = vcmp.le.s32.totalorder %v2154, 1
    %vm2347 = vcmp.le.s32.totalorder %v2155, 1
    %vm2348 = vcmp.le.s32.totalorder %v2156, 1
    %vm2349 = vcmp.le.s32.totalorder %v2157, 1
    %vm2350 = vcmp.le.s32.totalorder %v2158, 1
    %vm2351 = vcmp.le.s32.totalorder %v2159, 1
    %vm2352 = vcmp.le.s32.totalorder %v2160, 1
    %vm2353 = vcmp.le.s32.totalorder %v2161, 1
    %vm2354 = vcmp.le.s32.totalorder %v2162, 1
    %vm2355 = vcmp.le.s32.totalorder %v2163, 1
    %vm2356 = vcmp.le.s32.totalorder %v2164, 1
    %vm2357 = vcmp.le.s32.totalorder %v2165, 1
    %vm2358 = vcmp.le.s32.totalorder %v2166, 1
    %vm2359 = vcmp.le.s32.totalorder %v2167, 1
    %vm2360 = vcmp.le.s32.totalorder %v2168, 1
    %vm2361 = vcmp.le.s32.totalorder %v2169, 1
    %vm2362 = vcmp.le.s32.totalorder %v2170, 1
    %vm2363 = vcmp.le.s32.totalorder %v2171, 1
    %vm2364 = vcmp.le.s32.totalorder %v2172, 1
    %vm2365 = vcmp.le.s32.totalorder %v2173, 1
    %vm2366 = vcmp.le.s32.totalorder %v2174, 1
    %vm2367 = vcmp.le.s32.totalorder %v2175, 1
    %vm2368 = vcmp.le.s32.totalorder %v2176, 1
    %vm2369 = vcmp.le.s32.totalorder %v2177, 1
    %vm2370 = vcmp.le.s32.totalorder %v2178, 1
    %vm2371 = vcmp.le.s32.totalorder %v2179, 1
    %vm2372 = vcmp.le.s32.totalorder %v2180, 1
    %vm2373 = vcmp.le.s32.totalorder %v2181, 1
    %vm2374 = vcmp.le.s32.totalorder %v2182, 1
    %vm2375 = vcmp.le.s32.totalorder %v2183, 1
    %vm2376 = vcmp.le.s32.totalorder %v2184, 1
    %vm2377 = vcmp.le.s32.totalorder %v2185, 1
    %vm2378 = vcmp.le.s32.totalorder %v2186, 1
    %vm2379 = vcmp.le.s32.totalorder %v2187, 1
    %vm2380 = vcmp.le.s32.totalorder %v2188, 1
    %vm2381 = vcmp.le.s32.totalorder %v2189, 1
    %vm2382 = vcmp.le.s32.totalorder %v2190, 1
    %vm2383 = vcmp.le.s32.totalorder %v2191, 1
    %vm2384 = vcmp.le.s32.totalorder %v2192, 1
    %vm2385 = vcmp.le.s32.totalorder %v2193, 1
    %vm2386 = vcmp.le.s32.totalorder %v2194, 1
    %vm2387 = vcmp.le.s32.totalorder %v2195, 1
    %vm2388 = vcmp.le.s32.totalorder %v2196, 1
    %vm2389 = vcmp.le.s32.totalorder %v2197, 1
    %vm2390 = vcmp.le.s32.totalorder %v2198, 1
    %vm2391 = vmand %vm2199, %vm2295
    %vm2392 = vmand %vm2200, %vm2296
    %vm2393 = vmand %vm2201, %vm2297
    %vm2394 = vmand %vm2202, %vm2298
    %vm2395 = vmand %vm2203, %vm2299
    %vm2396 = vmand %vm2204, %vm2300
    %vm2397 = vmand %vm2205, %vm2301
    %vm2398 = vmand %vm2206, %vm2302
    %vm2399 = vmand %vm2207, %vm2303
    %vm2400 = vmand %vm2208, %vm2304
    %vm2401 = vmand %vm2209, %vm2305
    %vm2402 = vmand %vm2210, %vm2306
    %vm2403 = vmand %vm2211, %vm2307
    %vm2404 = vmand %vm2212, %vm2308
    %vm2405 = vmand %vm2213, %vm2309
    %vm2406 = vmand %vm2214, %vm2310
    %vm2407 = vmand %vm2215, %vm2311
    %vm2408 = vmand %vm2216, %vm2312
    %vm2409 = vmand %vm2217, %vm2313
    %vm2410 = vmand %vm2218, %vm2314
    %vm2411 = vmand %vm2219, %vm2315
    %vm2412 = vmand %vm2220, %vm2316
    %vm2413 = vmand %vm2221, %vm2317
    %vm2414 = vmand %vm2222, %vm2318
    %vm2415 = vmand %vm2223, %vm2319
    %vm2416 = vmand %vm2224, %vm2320
    %vm2417 = vmand %vm2225, %vm2321
    %vm2418 = vmand %vm2226, %vm2322
    %vm2419 = vmand %vm2227, %vm2323
    %vm2420 = vmand %vm2228, %vm2324
    %vm2421 = vmand %vm2229, %vm2325
    %vm2422 = vmand %vm2230, %vm2326
    %vm2423 = vmand %vm2231, %vm2327
    %vm2424 = vmand %vm2232, %vm2328
    %vm2425 = vmand %vm2233, %vm2329
    %vm2426 = vmand %vm2234, %vm2330
    %vm2427 = vmand %vm2235, %vm2331
    %vm2428 = vmand %vm2236, %vm2332
    %vm2429 = vmand %vm2237, %vm2333
    %vm2430 = vmand %vm2238, %vm2334
    %vm2431 = vmand %vm2239, %vm2335
    %vm2432 = vmand %vm2240, %vm2336
    %vm2433 = vmand %vm2241, %vm2337
    %vm2434 = vmand %vm2242, %vm2338
    %vm2435 = vmand %vm2243, %vm2339
    %vm2436 = vmand %vm2244, %vm2340
    %vm2437 = vmand %vm2245, %vm2341
    %vm2438 = vmand %vm2246, %vm2342
    %vm2439 = vmand %vm2247, %vm2343
    %vm2440 = vmand %vm2248, %vm2344
    %vm2441 = vmand %vm2249, %vm2345
    %vm2442 = vmand %vm2250, %vm2346
    %vm2443 = vmand %vm2251, %vm2347
    %vm2444 = vmand %vm2252, %vm2348
    %vm2445 = vmand %vm2253, %vm2349
    %vm2446 = vmand %vm2254, %vm2350
    %vm2447 = vmand %vm2255, %vm2351
    %vm2448 = vmand %vm2256, %vm2352
    %vm2449 = vmand %vm2257, %vm2353
    %vm2450 = vmand %vm2258, %vm2354
    %vm2451 = vmand %vm2259, %vm2355
    %vm2452 = vmand %vm2260, %vm2356
    %vm2453 = vmand %vm2261, %vm2357
    %vm2454 = vmand %vm2262, %vm2358
    %vm2455 = vmand %vm2263, %vm2359
    %vm2456 = vmand %vm2264, %vm2360
    %vm2457 = vmand %vm2265, %vm2361
    %vm2458 = vmand %vm2266, %vm2362
    %vm2459 = vmand %vm2267, %vm2363
    %vm2460 = vmand %vm2268, %vm2364
    %vm2461 = vmand %vm2269, %vm2365
    %vm2462 = vmand %vm2270, %vm2366
    %vm2463 = vmand %vm2271, %vm2367
    %vm2464 = vmand %vm2272, %vm2368
    %vm2465 = vmand %vm2273, %vm2369
    %vm2466 = vmand %vm2274, %vm2370
    %vm2467 = vmand %vm2275, %vm2371
    %vm2468 = vmand %vm2276, %vm2372
    %vm2469 = vmand %vm2277, %vm2373
    %vm2470 = vmand %vm2278, %vm2374
    %vm2471 = vmand %vm2279, %vm2375
    %vm2472 = vmand %vm2280, %vm2376
    %vm2473 = vmand %vm2281, %vm2377
    %vm2474 = vmand %vm2282, %vm2378
    %vm2475 = vmand %vm2283, %vm2379
    %vm2476 = vmand %vm2284, %vm2380
    %vm2477 = vmand %vm2285, %vm2381
    %vm2478 = vmand %vm2286, %vm2382
    %vm2479 = vmand %vm2287, %vm2383
    %vm2480 = vmand %vm2288, %vm2384
    %vm2481 = vmand %vm2289, %vm2385
    %vm2482 = vmand %vm2290, %vm2386
    %vm2483 = vmand %vm2291, %vm2387
    %vm2484 = vmand %vm2292, %vm2388
    %vm2485 = vmand %vm2293, %vm2389
    %vm2486 = vmand %vm2294, %vm2390
    %v2487 = vsel %vm2391, 1, 0
    %v2488 = vsel %vm2392, 1, 0
    %v2489 = vsel %vm2393, 1, 0
    %v2490 = vsel %vm2394, 1, 0
    %v2491 = vsel %vm2395, 1, 0
    %v2492 = vsel %vm2396, 1, 0
    %v2493 = vsel %vm2397, 1, 0
    %v2494 = vsel %vm2398, 1, 0
    %v2495 = vsel %vm2399, 1, 0
    %v2496 = vsel %vm2400, 1, 0
    %v2497 = vsel %vm2401, 1, 0
    %v2498 = vsel %vm2402, 1, 0
    %v2499 = vsel %vm2403, 1, 0
    %v2500 = vsel %vm2404, 1, 0
    %v2501 = vsel %vm2405, 1, 0
    %v2502 = vsel %vm2406, 1, 0
    %v2503 = vsel %vm2407, 1, 0
    %v2504 = vsel %vm2408, 1, 0
    %v2505 = vsel %vm2409, 1, 0
    %v2506 = vsel %vm2410, 1, 0
    %v2507 = vsel %vm2411, 1, 0
    %v2508 = vsel %vm2412, 1, 0
    %v2509 = vsel %vm2413, 1, 0
    %v2510 = vsel %vm2414, 1, 0
    %v2511 = vsel %vm2415, 1, 0
    %v2512 = vsel %vm2416, 1, 0
    %v2513 = vsel %vm2417, 1, 0
    %v2514 = vsel %vm2418, 1, 0
    %v2515 = vsel %vm2419, 1, 0
    %v2516 = vsel %vm2420, 1, 0
    %v2517 = vsel %vm2421, 1, 0
    %v2518 = vsel %vm2422, 1, 0
    %v2519 = vsel %vm2423, 1, 0
    %v2520 = vsel %vm2424, 1, 0
    %v2521 = vsel %vm2425, 1, 0
    %v2522 = vsel %vm2426, 1, 0
    %v2523 = vsel %vm2427, 1, 0
    %v2524 = vsel %vm2428, 1, 0
    %v2525 = vsel %vm2429, 1, 0
    %v2526 = vsel %vm2430, 1, 0
    %v2527 = vsel %vm2431, 1, 0
    %v2528 = vsel %vm2432, 1, 0
    %v2529 = vsel %vm2433, 1, 0
    %v2530 = vsel %vm2434, 1, 0
    %v2531 = vsel %vm2435, 1, 0
    %v2532 = vsel %vm2436, 1, 0
    %v2533 = vsel %vm2437, 1, 0
    %v2534 = vsel %vm2438, 1, 0
    %v2535 = vsel %vm2439, 1, 0
    %v2536 = vsel %vm2440, 1, 0
    %v2537 = vsel %vm2441, 1, 0
    %v2538 = vsel %vm2442, 1, 0
    %v2539 = vsel %vm2443, 1, 0
    %v2540 = vsel %vm2444, 1, 0
    %v2541 = vsel %vm2445, 1, 0
    %v2542 = vsel %vm2446, 1, 0
    %v2543 = vsel %vm2447, 1, 0
    %v2544 = vsel %vm2448, 1, 0
    %v2545 = vsel %vm2449, 1, 0
    %v2546 = vsel %vm2450, 1, 0
    %v2547 = vsel %vm2451, 1, 0
    %v2548 = vsel %vm2452, 1, 0
    %v2549 = vsel %vm2453, 1, 0
    %v2550 = vsel %vm2454, 1, 0
    %v2551 = vsel %vm2455, 1, 0
    %v2552 = vsel %vm2456, 1, 0
    %v2553 = vsel %vm2457, 1, 0
    %v2554 = vsel %vm2458, 1, 0
    %v2555 = vsel %vm2459, 1, 0
    %v2556 = vsel %vm2460, 1, 0
    %v2557 = vsel %vm2461, 1, 0
    %v2558 = vsel %vm2462, 1, 0
    %v2559 = vsel %vm2463, 1, 0
    %v2560 = vsel %vm2464, 1, 0
    %v2561 = vsel %vm2465, 1, 0
    %v2562 = vsel %vm2466, 1, 0
    %v2563 = vsel %vm2467, 1, 0
    %v2564 = vsel %vm2468, 1, 0
    %v2565 = vsel %vm2469, 1, 0
    %v2566 = vsel %vm2470, 1, 0
    %v2567 = vsel %vm2471, 1, 0
    %v2568 = vsel %vm2472, 1, 0
    %v2569 = vsel %vm2473, 1, 0
    %v2570 = vsel %vm2474, 1, 0
    %v2571 = vsel %vm2475, 1, 0
    %v2572 = vsel %vm2476, 1, 0
    %v2573 = vsel %vm2477, 1, 0
    %v2574 = vsel %vm2478, 1, 0
    %v2575 = vsel %vm2479, 1, 0
    %v2576 = vsel %vm2480, 1, 0
    %v2577 = vsel %vm2481, 1, 0
    %v2578 = vsel %vm2482, 1, 0
    %v2579 = vsel %vm2483, 1, 0
    %v2580 = vsel %vm2484, 1, 0
    %v2581 = vsel %vm2485, 1, 0
    %v2582 = vsel %vm2486, 1, 0
    %v2583 = vcvt.s32.f32 %v2487
    %v2584 = vcvt.s32.f32 %v2488
    %v2585 = vcvt.s32.f32 %v2489
    %v2586 = vcvt.s32.f32 %v2490
    %v2587 = vcvt.s32.f32 %v2491
    %v2588 = vcvt.s32.f32 %v2492
    %v2589 = vcvt.s32.f32 %v2493
    %v2590 = vcvt.s32.f32 %v2494
    %v2591 = vcvt.s32.f32 %v2495
    %v2592 = vcvt.s32.f32 %v2496
    %v2593 = vcvt.s32.f32 %v2497
    %v2594 = vcvt.s32.f32 %v2498
    %v2595 = vcvt.s32.f32 %v2499
    %v2596 = vcvt.s32.f32 %v2500
    %v2597 = vcvt.s32.f32 %v2501
    %v2598 = vcvt.s32.f32 %v2502
    %v2599 = vcvt.s32.f32 %v2503
    %v2600 = vcvt.s32.f32 %v2504
    %v2601 = vcvt.s32.f32 %v2505
    %v2602 = vcvt.s32.f32 %v2506
    %v2603 = vcvt.s32.f32 %v2507
    %v2604 = vcvt.s32.f32 %v2508
    %v2605 = vcvt.s32.f32 %v2509
    %v2606 = vcvt.s32.f32 %v2510
    %v2607 = vcvt.s32.f32 %v2511
    %v2608 = vcvt.s32.f32 %v2512
    %v2609 = vcvt.s32.f32 %v2513
    %v2610 = vcvt.s32.f32 %v2514
    %v2611 = vcvt.s32.f32 %v2515
    %v2612 = vcvt.s32.f32 %v2516
    %v2613 = vcvt.s32.f32 %v2517
    %v2614 = vcvt.s32.f32 %v2518
    %v2615 = vcvt.s32.f32 %v2519
    %v2616 = vcvt.s32.f32 %v2520
    %v2617 = vcvt.s32.f32 %v2521
    %v2618 = vcvt.s32.f32 %v2522
    %v2619 = vcvt.s32.f32 %v2523
    %v2620 = vcvt.s32.f32 %v2524
    %v2621 = vcvt.s32.f32 %v2525
    %v2622 = vcvt.s32.f32 %v2526
    %v2623 = vcvt.s32.f32 %v2527
    %v2624 = vcvt.s32.f32 %v2528
    %v2625 = vcvt.s32.f32 %v2529
    %v2626 = vcvt.s32.f32 %v2530
    %v2627 = vcvt.s32.f32 %v2531
    %v2628 = vcvt.s32.f32 %v2532
    %v2629 = vcvt.s32.f32 %v2533
    %v2630 = vcvt.s32.f32 %v2534
    %v2631 = vcvt.s32.f32 %v2535
    %v2632 = vcvt.s32.f32 %v2536
    %v2633 = vcvt.s32.f32 %v2537
    %v2634 = vcvt.s32.f32 %v2538
    %v2635 = vcvt.s32.f32 %v2539
    %v2636 = vcvt.s32.f32 %v2540
    %v2637 = vcvt.s32.f32 %v2541
    %v2638 = vcvt.s32.f32 %v2542
    %v2639 = vcvt.s32.f32 %v2543
    %v2640 = vcvt.s32.f32 %v2544
    %v2641 = vcvt.s32.f32 %v2545
    %v2642 = vcvt.s32.f32 %v2546
    %v2643 = vcvt.s32.f32 %v2547
    %v2644 = vcvt.s32.f32 %v2548
    %v2645 = vcvt.s32.f32 %v2549
    %v2646 = vcvt.s32.f32 %v2550
    %v2647 = vcvt.s32.f32 %v2551
    %v2648 = vcvt.s32.f32 %v2552
    %v2649 = vcvt.s32.f32 %v2553
    %v2650 = vcvt.s32.f32 %v2554
    %v2651 = vcvt.s32.f32 %v2555
    %v2652 = vcvt.s32.f32 %v2556
    %v2653 = vcvt.s32.f32 %v2557
    %v2654 = vcvt.s32.f32 %v2558
    %v2655 = vcvt.s32.f32 %v2559
    %v2656 = vcvt.s32.f32 %v2560
    %v2657 = vcvt.s32.f32 %v2561
    %v2658 = vcvt.s32.f32 %v2562
    %v2659 = vcvt.s32.f32 %v2563
    %v2660 = vcvt.s32.f32 %v2564
    %v2661 = vcvt.s32.f32 %v2565
    %v2662 = vcvt.s32.f32 %v2566
    %v2663 = vcvt.s32.f32 %v2567
    %v2664 = vcvt.s32.f32 %v2568
    %v2665 = vcvt.s32.f32 %v2569
    %v2666 = vcvt.s32.f32 %v2570
    %v2667 = vcvt.s32.f32 %v2571
    %v2668 = vcvt.s32.f32 %v2572
    %v2669 = vcvt.s32.f32 %v2573
    %v2670 = vcvt.s32.f32 %v2574
    %v2671 = vcvt.s32.f32 %v2575
    %v2672 = vcvt.s32.f32 %v2576
    %v2673 = vcvt.s32.f32 %v2577
    %v2674 = vcvt.s32.f32 %v2578
    %v2675 = vcvt.s32.f32 %v2579
    %v2676 = vcvt.s32.f32 %v2580
    %v2677 = vcvt.s32.f32 %v2581
    %v2678 = vcvt.s32.f32 %v2582
    %2679 = vmatprep.subr.mxu0 %v1690
    %2680 = vmatpush1.msra.mxu0 %v1689
    %2681 = vmatprep.subr.mxu0 %v1692
    %2682 = vmatpush1.msra.mxu0 %v1691
    %2683 = vmatprep.subr.mxu0 %v1694
    %2684 = vmatpush1.msra.mxu0 %v1693
    %2685 = vmatprep.subr.mxu0 %v1696
    %2686 = vmatpush1.msra.mxu0 %v1695
    %2687 = vmatprep.subr.mxu0 %v1698
    %2688 = vmatpush1.msra.mxu0 %v1697
    %2689 = vmatprep.subr.mxu0 %v1700
    %2690 = vmatpush1.msra.mxu0 %v1699
    %2691 = vmatprep.subr.mxu0 %v1702
    %2692 = vmatpush1.msra.mxu0 %v1701
    %2693 = vmatprep.subr.mxu0 %v1704
    %2694 = vmatpush1.msra.mxu0 %v1703
    %2695 = vmatprep.subr.mxu0 %v1706
    %2696 = vmatpush1.msra.mxu0 %v1705
    %2697 = vmatprep.subr.mxu0 %v1708
    %2698 = vmatpush1.msra.mxu0 %v1707
    %2699 = vmatprep.subr.mxu0 %v1710
    %2700 = vmatpush1.msra.mxu0 %v1709
    %2701 = vmatprep.subr.mxu0 %v1712
    %2702 = vmatpush1.msra.mxu0 %v1711
    %2703 = vmatprep.subr.mxu0 %v1714
    %2704 = vmatpush1.msra.mxu0 %v1713
    %2705 = vmatprep.subr.mxu0 %v1716
    %2706 = vmatpush1.msra.mxu0 %v1715
    %2707 = vmatprep.subr.mxu0 %v1718
    %2708 = vmatpush1.msra.mxu0 %v1717
    %2709 = vmatprep.subr.mxu0 %v1720
    %2710 = vmatpush1.msra.mxu0 %v1719
    %2711 = vmatprep.subr.mxu0 %v2616
    %2712 = vmatpush1.msra.mxu0 %v2615
    %2713 = vmatprep.subr.mxu0 %v2620
    %2714 = vmatpush1.msra.mxu0 %v2619
    %2715 = vmatprep.subr.mxu0 %v2624
    %2716 = vmatpush1.msra.mxu0 %v2623
    %2717 = vmatprep.subr.mxu0 %v2628
    %2718 = vmatpush1.msra.mxu0 %v2627
    %2719 = vmatprep.subr.mxu0 %v2632
    %2720 = vmatpush1.msra.mxu0 %v2631
    %2721 = vmatprep.subr.mxu0 %v2636
    %2722 = vmatpush1.msra.mxu0 %v2635
    %2723 = vmatprep.subr.mxu0 %v2640
    %2724 = vmatpush1.msra.mxu0 %v2639
    %2725 = vmatprep.subr.mxu0 %v2644
    %2726 = vmatpush1.msra.mxu0 %v2643
    %2727 = vmatprep.subr.mxu0 %v2648
    %2728 = vmatpush1.msra.mxu0 %v2647
    %2729 = vmatprep.subr.mxu0 %v2652
    %2730 = vmatpush1.msra.mxu0 %v2651
    %2731 = vmatprep.subr.mxu0 %v2656
    %2732 = vmatpush1.msra.mxu0 %v2655
    %2733 = vmatprep.subr.mxu0 %v2660
    %2734 = vmatpush1.msra.mxu0 %v2659
    %2735 = vmatprep.subr.mxu0 %v2664
    %2736 = vmatpush1.msra.mxu0 %v2663
    %2737 = vmatprep.subr.mxu0 %v2668
    %2738 = vmatpush1.msra.mxu0 %v2667
    %2739 = vmatprep.subr.mxu0 %v2672
    %2740 = vmatpush1.msra.mxu0 %v2671
    %2741 = vmatprep.subr.mxu0 %v2676
    %2742 = vmatpush1.msra.mxu0 %v2675
    %2743 = vmatprep.mubr.f32.mxu0 %v2066
    %2744 = vmatmul.mubr.f32.gmra.mrb[0].mxu0 %v2065
    %v2745 = vpop.f32.mrb[0].mxu0
    %v2746 = vadd.f32 0.0, %v2745
    %v2747 = vpop.f32.mrb[0].mxu0
    %v2748 = vadd.f32 0.0, %v2747
    %2749 = vmatprep.mubr.f32.mxu0 %v2068
    %2750 = vmatmul.mubr.f32.gmra.mrb[0].mxu0 %v2067
    %v2751 = vpop.f32.mrb[0].mxu0
    %v2752 = vadd.f32 0.0, %v2751
    %v2753 = vpop.f32.mrb[0].mxu0
    %v2754 = vadd.f32 0.0, %v2753
    %2755 = vdwg.mxu0
    %2756 = vmatprep.subr.mxu0 %v2584
    %2757 = vmatpush1.msra.mxu0 %v2583
    %2758 = vmatprep.subr.mxu0 %v2586
    %2759 = vmatpush1.msra.mxu0 %v2585
    %2760 = vmatprep.subr.mxu0 %v2588
    %2761 = vmatpush1.msra.mxu0 %v2587
    %2762 = vmatprep.subr.mxu0 %v2590
    %2763 = vmatpush1.msra.mxu0 %v2589
    %2764 = vmatprep.subr.mxu0 %v2592
    %2765 = vmatpush1.msra.mxu0 %v2591
    %2766 = vmatprep.subr.mxu0 %v2594
    %2767 = vmatpush1.msra.mxu0 %v2593
    %2768 = vmatprep.subr.mxu0 %v2596
    %2769 = vmatpush1.msra.mxu0 %v2595
    %2770 = vmatprep.subr.mxu0 %v2598
    %2771 = vmatpush1.msra.mxu0 %v2597
    %2772 = vmatprep.subr.mxu0 %v2600
    %2773 = vmatpush1.msra.mxu0 %v2599
    %2774 = vmatprep.subr.mxu0 %v2602
    %2775 = vmatpush1.msra.mxu0 %v2601
    %2776 = vmatprep.subr.mxu0 %v2604
    %2777 = vmatpush1.msra.mxu0 %v2603
    %2778 = vmatprep.subr.mxu0 %v2606
    %2779 = vmatpush1.msra.mxu0 %v2605
    %2780 = vmatprep.subr.mxu0 %v2608
    %2781 = vmatpush1.msra.mxu0 %v2607
    %2782 = vmatprep.subr.mxu0 %v2610
    %2783 = vmatpush1.msra.mxu0 %v2609
    %2784 = vmatprep.subr.mxu0 %v2612
    %2785 = vmatpush1.msra.mxu0 %v2611
    %2786 = vmatprep.subr.mxu0 %v2614
    %2787 = vmatpush1.msra.mxu0 %v2613
    %2788 = vmatprep.subr.mxu0 %v2618
    %2789 = vmatpush1.msra.mxu0 %v2617
    %2790 = vmatprep.subr.mxu0 %v2622
    %2791 = vmatpush1.msra.mxu0 %v2621
    %2792 = vmatprep.subr.mxu0 %v2626
    %2793 = vmatpush1.msra.mxu0 %v2625
    %2794 = vmatprep.subr.mxu0 %v2630
    %2795 = vmatpush1.msra.mxu0 %v2629
    %2796 = vmatprep.subr.mxu0 %v2634
    %2797 = vmatpush1.msra.mxu0 %v2633
    %2798 = vmatprep.subr.mxu0 %v2638
    %2799 = vmatpush1.msra.mxu0 %v2637
    %2800 = vmatprep.subr.mxu0 %v2642
    %2801 = vmatpush1.msra.mxu0 %v2641
    %2802 = vmatprep.subr.mxu0 %v2646
    %2803 = vmatpush1.msra.mxu0 %v2645
    %2804 = vmatprep.subr.mxu0 %v2650
    %2805 = vmatpush1.msra.mxu0 %v2649
    %2806 = vmatprep.subr.mxu0 %v2654
    %2807 = vmatpush1.msra.mxu0 %v2653
    %2808 = vmatprep.subr.mxu0 %v2658
    %2809 = vmatpush1.msra.mxu0 %v2657
    %2810 = vmatprep.subr.mxu0 %v2662
    %2811 = vmatpush1.msra.mxu0 %v2661
    %2812 = vmatprep.subr.mxu0 %v2666
    %2813 = vmatpush1.msra.mxu0 %v2665
    %2814 = vmatprep.subr.mxu0 %v2670
    %2815 = vmatpush1.msra.mxu0 %v2669
    %2816 = vmatprep.subr.mxu0 %v2674
    %2817 = vmatpush1.msra.mxu0 %v2673
    %2818 = vmatprep.subr.mxu0 %v2678
    %2819 = vmatpush1.msra.mxu0 %v2677
    %2820 = vmatprep.mubr.f32.mxu0 %v2066
    %2821 = vmatmul.mubr.f32.gmra.mrb[0].mxu0 %v2065
    %v2822 = vpop.f32.mrb[0].mxu0
    %v2823 = vadd.f32 0.0, %v2822
    %v2824 = vpop.f32.mrb[0].mxu0
    %v2825 = vadd.f32 0.0, %v2824
    %2826 = vmatprep.mubr.f32.mxu0 %v2068
    %2827 = vmatmul.mubr.f32.gmra.mrb[0].mxu0 %v2067
    %v2828 = vpop.f32.mrb[0].mxu0
    %v2829 = vadd.f32 0.0, %v2828
    %v2830 = vpop.f32.mrb[0].mxu0
    %v2831 = vadd.f32 0.0, %v2830
    %2832 = vdwg.mxu0
    %v2833 = vld [vmem:[#allocation3 + $0x330] sm:$0xff]
    %v2834 = vld [vmem:[#allocation3 + $0x340] sm:$0xff]
    %2835 = vrot.lane.b32.xlu0 %v2746, 2
    %v2836 = vpop.permute.xlu0 %2835
    %2837 = vrot.lane.b32.xlu0 %v2752, 2
    %v2838 = vpop.permute.xlu0 %2837
    %2839 = vrot.lane.b32.xlu0 %v2748, 2
    %v2840 = vpop.permute.xlu0 %2839
    %2841 = vrot.lane.b32.xlu0 %v2754, 2
    %v2842 = vpop.permute.xlu0 %2841
    %2843 = vrot.lane.b32.xlu0 %v2823, 2
    %v2844 = vpop.permute.xlu0 %2843
    %2845 = vrot.lane.b32.xlu0 %v2829, 2
    %v2846 = vpop.permute.xlu0 %2845
    %2847 = vrot.lane.b32.xlu0 %v2825, 2
    %v2848 = vpop.permute.xlu0 %2847
    %2849 = vrot.lane.b32.xlu0 %v2831, 2
    %v2850 = vpop.permute.xlu0 %2849
    %v2851 = vsel %vm1832, %v2844, %v2848
    %v2852 = vsel %vm1832, %v2846, %v2850
    %v2853 = vsel %vm1832, %v2840, %v2844
    %v2854 = vsel %vm1832, %v2842, %v2846
    %v2855 = vsel %vm1832, %v2836, %v2840
    %v2856 = vsel %vm1832, %v2838, %v2842
    %v2857 = vsel %vm1832, %v2848, %v2836
    %v2858 = vsel %vm1832, %v2850, %v2838
    %vm2859 = vcmp.ge.s32.totalorder %v2085, 2
    %vm2860 = vcmp.ge.s32.totalorder %v2086, 2
    %v2861 = vsel %vm2859, 1, 0
    %v2862 = vsel %vm2860, 1, 0
    %v2863 = vcvt.s32.f32 %v2861
    %v2864 = vcvt.s32.f32 %v2862
    %v2865 = vmul.f32 %v2857, %v1340
    %v2866 = vmul.f32 %v2855, %v1843
    %v2867 = vmul.f32 %v2853, %v2863
    %v2868 = vmul.f32 %v2851, %v2864
    %v2869 = vmul.f32 %v2858, %v1340
    %v2870 = vmul.f32 %v2856, %v1843
    %v2871 = vmul.f32 %v2854, %v2863
    %v2872 = vmul.f32 %v2852, %v2864
    %2873 = vrot.lane.b32.xlu0 %v2746, 1
    %v2874 = vpop.permute.xlu0 %2873
    %2875 = vrot.lane.b32.xlu0 %v2752, 1
    %v2876 = vpop.permute.xlu0 %2875
    %2877 = vrot.lane.b32.xlu0 %v2748, 1
    %v2878 = vpop.permute.xlu0 %2877
    %2879 = vrot.lane.b32.xlu0 %v2754, 1
    %v2880 = vpop.permute.xlu0 %2879
    %2881 = vrot.lane.b32.xlu0 %v2823, 1
    %v2882 = vpop.permute.xlu0 %2881
    %2883 = vrot.lane.b32.xlu0 %v2829, 1
    %v2884 = vpop.permute.xlu0 %2883
    %2885 = vrot.lane.b32.xlu0 %v2825, 1
    %v2886 = vpop.permute.xlu0 %2885
    %2887 = vrot.lane.b32.xlu0 %v2831, 1
    %v2888 = vpop.permute.xlu0 %2887
    %v2889 = vsel %vm1868, %v2882, %v2886
    %v2890 = vsel %vm1868, %v2884, %v2888
    %v2891 = vsel %vm1868, %v2878, %v2882
    %v2892 = vsel %vm1868, %v2880, %v2884
    %v2893 = vsel %vm1868, %v2874, %v2878
    %v2894 = vsel %vm1868, %v2876, %v2880
    %v2895 = vsel %vm1868, %v2886, %v2874
    %v2896 = vsel %vm1868, %v2888, %v2876
    %vm2897 = vcmp.ge.s32.totalorder %v2085, 1
    %vm2898 = vcmp.ge.s32.totalorder %v2086, 1
    %v2899 = vsel %vm2897, 1, 0
    %v2900 = vsel %vm2898, 1, 0
    %v2901 = vcvt.s32.f32 %v2899
    %v2902 = vcvt.s32.f32 %v2900
    %v2903 = vmul.f32 %v2895, %v1349
    %v2904 = vmul.f32 %v2893, %v1879
    %v2905 = vmul.f32 %v2891, %v2901
    %v2906 = vmul.f32 %v2889, %v2902
    %v2907 = vmul.f32 %v2896, %v1349
    %v2908 = vmul.f32 %v2894, %v1879
    %v2909 = vmul.f32 %v2892, %v2901
    %v2910 = vmul.f32 %v2890, %v2902
    %2911 = vrot.lane.b32.xlu0 %v2746, 127
    %v2912 = vpop.permute.xlu0 %2911
    %2913 = vrot.lane.b32.xlu0 %v2752, 127
    %v2914 = vpop.permute.xlu0 %2913
    %2915 = vrot.lane.b32.xlu0 %v2748, 127
    %v2916 = vpop.permute.xlu0 %2915
    %2917 = vrot.lane.b32.xlu0 %v2754, 127
    %v2918 = vpop.permute.xlu0 %2917
    %2919 = vrot.lane.b32.xlu0 %v2823, 127
    %v2920 = vpop.permute.xlu0 %2919
    %2921 = vrot.lane.b32.xlu0 %v2829, 127
    %v2922 = vpop.permute.xlu0 %2921
    %2923 = vrot.lane.b32.xlu0 %v2825, 127
    %v2924 = vpop.permute.xlu0 %2923
    %2925 = vrot.lane.b32.xlu0 %v2831, 127
    %v2926 = vpop.permute.xlu0 %2925
    %v2927 = vsel %vm1356, %v2920, %v2924
    %v2928 = vsel %vm1356, %v2922, %v2926
    %v2929 = vsel %vm1356, %v2916, %v2920
    %v2930 = vsel %vm1356, %v2918, %v2922
    %v2931 = vsel %vm1356, %v2912, %v2916
    %v2932 = vsel %vm1356, %v2914, %v2918
    %v2933 = vsel %vm1356, %v2924, %v2912
    %v2934 = vsel %vm1356, %v2926, %v2914
    %vm2935 = vcmp.lt.s32.totalorder %v41, 511
    %vm2936 = vcmp.lt.s32.totalorder %v1512, 511
    %vm2937 = vcmp.lt.s32.totalorder %v2085, 511
    %vm2938 = vcmp.lt.s32.totalorder %v2086, 511
    %v2939 = vsel %vm2935, 1, 0
    %v2940 = vsel %vm2936, 1, 0
    %v2941 = vsel %vm2937, 1, 0
    %v2942 = vsel %vm2938, 1, 0
    %v2943 = vcvt.s32.f32 %v2939
    %v2944 = vcvt.s32.f32 %v2940
    %v2945 = vcvt.s32.f32 %v2941
    %v2946 = vcvt.s32.f32 %v2942
    %v2947 = vmul.f32 %v2931, %v2943
    %v2948 = vmul.f32 %v2929, %v2944
    %v2949 = vmul.f32 %v2927, %v2945
    %v2950 = vmul.f32 %v2933, %v2946
    %v2951 = vmul.f32 %v2932, %v2943
    %v2952 = vmul.f32 %v2930, %v2944
    %v2953 = vmul.f32 %v2928, %v2945
    %v2954 = vmul.f32 %v2934, %v2946
    %2955 = vrot.lane.b32.xlu0 %v2746, 126
    %v2956 = vpop.permute.xlu0 %2955
    %2957 = vrot.lane.b32.xlu0 %v2752, 126
    %v2958 = vpop.permute.xlu0 %2957
    %2959 = vrot.lane.b32.xlu0 %v2748, 126
    %v2960 = vpop.permute.xlu0 %2959
    %2961 = vrot.lane.b32.xlu0 %v2754, 126
    %v2962 = vpop.permute.xlu0 %2961
    %2963 = vrot.lane.b32.xlu0 %v2823, 126
    %v2964 = vpop.permute.xlu0 %2963
    %2965 = vrot.lane.b32.xlu0 %v2829, 126
    %v2966 = vpop.permute.xlu0 %2965
    %2967 = vrot.lane.b32.xlu0 %v2825, 126
    %v2968 = vpop.permute.xlu0 %2967
    %2969 = vrot.lane.b32.xlu0 %v2831, 126
    %v2970 = vpop.permute.xlu0 %2969
    %v2971 = vsel %vm1365, %v2964, %v2968
    %v2972 = vsel %vm1365, %v2966, %v2970
    %v2973 = vsel %vm1365, %v2960, %v2964
    %v2974 = vsel %vm1365, %v2962, %v2966
    %v2975 = vsel %vm1365, %v2956, %v2960
    %v2976 = vsel %vm1365, %v2958, %v2962
    %v2977 = vsel %vm1365, %v2968, %v2956
    %v2978 = vsel %vm1365, %v2970, %v2958
    %vm2979 = vcmp.lt.s32.totalorder %v41, 510
    %vm2980 = vcmp.lt.s32.totalorder %v1512, 510
    %vm2981 = vcmp.lt.s32.totalorder %v2085, 510
    %vm2982 = vcmp.lt.s32.totalorder %v2086, 510
    %v2983 = vsel %vm2979, 1, 0
    %v2984 = vsel %vm2980, 1, 0
    %v2985 = vsel %vm2981, 1, 0
    %v2986 = vsel %vm2982, 1, 0
    %v2987 = vcvt.s32.f32 %v2983
    %v2988 = vcvt.s32.f32 %v2984
    %v2989 = vcvt.s32.f32 %v2985
    %v2990 = vcvt.s32.f32 %v2986
    %v2991 = vmul.f32 %v2975, %v2987
    %v2992 = vmul.f32 %v2973, %v2988
    %v2993 = vmul.f32 %v2971, %v2989
    %v2994 = vmul.f32 %v2977, %v2990
    %v2995 = vmul.f32 %v2976, %v2987
    %v2996 = vmul.f32 %v2974, %v2988
    %v2997 = vmul.f32 %v2972, %v2989
    %v2998 = vmul.f32 %v2978, %v2990
    %3000 = vset.pattern.permute.xlu0 0
    %3001 = vperm.xlu0 %3000, %v2834
    %v3002 = vpop.permute.xlu0 %3001
    %vm3004 = vcmask 654336
    %v3006 = vsel %vm3004, %v2833, 0
    %3008 = vmatprep.subr.mxu0 %v2866
    %3009 = vmatpush1.msra.mxu0 %v2865
    %3010 = vmatprep.subr.mxu0 %v2870
    %3011 = vmatpush1.msra.mxu0 %v2869
    %3012 = vmatprep.subr.mxu0 %v2904
    %3013 = vmatpush1.msra.mxu0 %v2903
    %3014 = vmatprep.subr.mxu0 %v2908
    %3015 = vmatpush1.msra.mxu0 %v2907
    %3016 = vmatprep.subr.mxu0 %v2748
    %3017 = vmatpush1.msra.mxu0 %v2746
    %3018 = vmatprep.subr.mxu0 %v2754
    %3019 = vmatpush1.msra.mxu0 %v2752
    %3020 = vmatprep.subr.mxu0 %v2948
    %3021 = vmatpush1.msra.mxu0 %v2947
    %3022 = vmatprep.subr.mxu0 %v2952
    %3023 = vmatpush1.msra.mxu0 %v2951
    %3024 = vmatprep.subr.mxu0 %v2992
    %3025 = vmatpush1.msra.mxu0 %v2991
    %3026 = vmatprep.subr.mxu0 %v2996
    %3027 = vmatpush1.msra.mxu0 %v2995
    %3028 = vmatprep.subr.mxu0 0.0
    %3029 = vmatpush1.msra.mxu0 0.0
    %3030 = vmatprep.subr.mxu0 0.0
    %3031 = vmatpush1.msra.mxu0 0.0
    %3032 = vmatprep.subr.mxu0 0.0
    %3033 = vmatpush1.msra.mxu0 0.0
    %3034 = vmatprep.subr.mxu0 0.0
    %3035 = vmatpush1.msra.mxu0 0.0
    %3036 = vmatprep.subr.mxu0 0.0
    %3037 = vmatpush1.msra.mxu0 0.0
    %3038 = vmatprep.subr.mxu0 0.0
    %3039 = vmatpush1.msra.mxu0 0.0
    %3040 = vmatprep.subr.mxu0 0.0
    %3041 = vmatpush1.msra.mxu0 0.0
    %3042 = vmatprep.subr.mxu0 0.0
    %3043 = vmatpush1.msra.mxu0 0.0
    %3044 = vmatprep.subr.mxu0 0.0
    %3045 = vmatpush1.msra.mxu0 0.0
    %3046 = vmatprep.subr.mxu0 0.0
    %3047 = vmatpush1.msra.mxu0 0.0
    %3048 = vmatprep.subr.mxu0 0.0
    %3049 = vmatpush1.msra.mxu0 0.0
    %3050 = vmatprep.subr.mxu0 0.0
    %3051 = vmatpush1.msra.mxu0 0.0
    %3052 = vmatprep.subr.mxu0 0.0
    %3053 = vmatpush1.msra.mxu0 0.0
    %3054 = vmatprep.subr.mxu0 0.0
    %3055 = vmatpush1.msra.mxu0 0.0
    %3056 = vmatprep.subr.mxu0 0.0
    %3057 = vmatpush1.msra.mxu0 0.0
    %3058 = vmatprep.subr.mxu0 0.0
    %3059 = vmatpush1.msra.mxu0 0.0
    %3060 = vmatprep.subr.mxu0 0.0
    %3061 = vmatpush1.msra.mxu0 0.0
    %3062 = vmatprep.subr.mxu0 0.0
    %3063 = vmatpush1.msra.mxu0 0.0
    %3064 = vmatprep.subr.mxu0 0.0
    %3065 = vmatpush1.msra.mxu0 0.0
    %3066 = vmatprep.subr.mxu0 0.0
    %3067 = vmatpush1.msra.mxu0 0.0
    %3068 = vmatprep.subr.mxu0 0.0
    %3069 = vmatpush1.msra.mxu0 0.0
    %3070 = vmatprep.subr.mxu0 0.0
    %3071 = vmatpush1.msra.mxu0 0.0
    %3072 = vmatprep.mubr.f32.mxu0 0.0
    %3073 = vmatmul.mubr.f32.gmra.mrb[0].mxu0 %v3006
    %v3074 = vpop.f32.mrb[0].mxu0
    %v3075 = vadd.f32 %v3002, %v3074
    %v3076 = vpop.f32.mrb[0].mxu0
    %v3077 = vadd.f32 %v3002, %v3076
    %3078 = vdwg.mxu0
    %3079 = vmatprep.subr.mxu0 %v2868
    %3080 = vmatpush1.msra.mxu0 %v2867
    %3081 = vmatprep.subr.mxu0 %v2872
    %3082 = vmatpush1.msra.mxu0 %v2871
    %3083 = vmatprep.subr.mxu0 %v2906
    %3084 = vmatpush1.msra.mxu0 %v2905
    %3085 = vmatprep.subr.mxu0 %v2910
    %3086 = vmatpush1.msra.mxu0 %v2909
    %3087 = vmatprep.subr.mxu0 %v2825
    %3088 = vmatpush1.msra.mxu0 %v2823
    %3089 = vmatprep.subr.mxu0 %v2831
    %3090 = vmatpush1.msra.mxu0 %v2829
    %3091 = vmatprep.subr.mxu0 %v2950
    %3092 = vmatpush1.msra.mxu0 %v2949
    %3093 = vmatprep.subr.mxu0 %v2954
    %3094 = vmatpush1.msra.mxu0 %v2953
    %3095 = vmatprep.subr.mxu0 %v2994
    %3096 = vmatpush1.msra.mxu0 %v2993
    %3097 = vmatprep.subr.mxu0 %v2998
    %3098 = vmatpush1.msra.mxu0 %v2997
    %3099 = vmatprep.subr.mxu0 0.0
    %3100 = vmatpush1.msra.mxu0 0.0
    %3101 = vmatprep.subr.mxu0 0.0
    %3102 = vmatpush1.msra.mxu0 0.0
    %3103 = vmatprep.subr.mxu0 0.0
    %3104 = vmatpush1.msra.mxu0 0.0
    %3105 = vmatprep.subr.mxu0 0.0
    %3106 = vmatpush1.msra.mxu0 0.0
    %3107 = vmatprep.subr.mxu0 0.0
    %3108 = vmatpush1.msra.mxu0 0.0
    %3109 = vmatprep.subr.mxu0 0.0
    %3110 = vmatpush1.msra.mxu0 0.0
    %3111 = vmatprep.subr.mxu0 0.0
    %3112 = vmatpush1.msra.mxu0 0.0
    %3113 = vmatprep.subr.mxu0 0.0
    %3114 = vmatpush1.msra.mxu0 0.0
    %3115 = vmatprep.subr.mxu0 0.0
    %3116 = vmatpush1.msra.mxu0 0.0
    %3117 = vmatprep.subr.mxu0 0.0
    %3118 = vmatpush1.msra.mxu0 0.0
    %3119 = vmatprep.subr.mxu0 0.0
    %3120 = vmatpush1.msra.mxu0 0.0
    %3121 = vmatprep.subr.mxu0 0.0
    %3122 = vmatpush1.msra.mxu0 0.0
    %3123 = vmatprep.subr.mxu0 0.0
    %3124 = vmatpush1.msra.mxu0 0.0
    %3125 = vmatprep.subr.mxu0 0.0
    %3126 = vmatpush1.msra.mxu0 0.0
    %3127 = vmatprep.subr.mxu0 0.0
    %3128 = vmatpush1.msra.mxu0 0.0
    %3129 = vmatprep.subr.mxu0 0.0
    %3130 = vmatpush1.msra.mxu0 0.0
    %3131 = vmatprep.subr.mxu0 0.0
    %3132 = vmatpush1.msra.mxu0 0.0
    %3133 = vmatprep.subr.mxu0 0.0
    %3134 = vmatpush1.msra.mxu0 0.0
    %3135 = vmatprep.subr.mxu0 0.0
    %3136 = vmatpush1.msra.mxu0 0.0
    %3137 = vmatprep.subr.mxu0 0.0
    %3138 = vmatpush1.msra.mxu0 0.0
    %3139 = vmatprep.subr.mxu0 0.0
    %3140 = vmatpush1.msra.mxu0 0.0
    %3141 = vmatprep.subr.mxu0 0.0
    %3142 = vmatpush1.msra.mxu0 0.0
    %3143 = vmatprep.mubr.f32.mxu0 0.0
    %3144 = vmatmul.mubr.f32.gmra.mrb[0].mxu0 %v3006
    %v3145 = vpop.f32.mrb[0].mxu0
    %v3146 = vadd.f32 %v3002, %v3145
    %v3147 = vpop.f32.mrb[0].mxu0
    %v3148 = vadd.f32 %v3002, %v3147
    %3149 = vdwg.mxu0
    %vm3150 = vcmp.gt.f32.partialorder %v3075, 0.0
    %vm3151 = vcmp.gt.f32.partialorder %v3077, 0.0
    %vm3152 = vcmp.gt.f32.partialorder %v3146, 0.0
    %vm3153 = vcmp.gt.f32.partialorder %v3148, 0.0
    %v3154 = vmul.f32 %v3075, 0.1
    %v3155 = vmul.f32 %v3077, 0.1
    %v3156 = vmul.f32 %v3146, 0.1
    %v3157 = vmul.f32 %v3148, 0.1
    %v3158 = vsel %vm3150, %v3075, %v3154
    %v3159 = vsel %vm3151, %v3077, %v3155
    %v3160 = vsel %vm3152, %v3146, %v3156
    %v3161 = vsel %vm3153, %v3148, %v3157
    %3162 = vrot.lane.b32.xlu0 %v3158, 3
    %v3163 = vpop.permute.xlu0 %3162
    %3164 = vrot.lane.b32.xlu0 %v3159, 3
    %v3165 = vpop.permute.xlu0 %3164
    %3166 = vrot.lane.b32.xlu0 %v3160, 3
    %v3167 = vpop.permute.xlu0 %3166
    %3168 = vrot.lane.b32.xlu0 %v3161, 3
    %v3169 = vpop.permute.xlu0 %3168
    %vm3170 = vcmp.lt.s32.totalorder %v41, 3
    %v3171 = vsel %vm3170, %v3167, %v3169
    %v3172 = vsel %vm3170, %v3165, %v3167
    %v3173 = vsel %vm3170, %v3163, %v3165
    %v3174 = vsel %vm3170, %v3169, %v3163
    %vm3175 = vcmp.ge.s32.totalorder %v1512, 3
    %vm3176 = vcmp.ge.s32.totalorder %v2085, 3
    %vm3177 = vcmp.ge.s32.totalorder %v2086, 3
    %v3178 = vsel %vm3175, 1, 0
    %v3179 = vsel %vm3176, 1, 0
    %v3180 = vsel %vm3177, 1, 0
    %v3181 = vcvt.s32.f32 %v3178
    %v3182 = vcvt.s32.f32 %v3179
    %v3183 = vcvt.s32.f32 %v3180
    %v3184 = vmul.f32 %v3174, %v1331
    %v3185 = vmul.f32 %v3173, %v3181
    %v3186 = vmul.f32 %v3172, %v3182
    %v3187 = vmul.f32 %v3171, %v3183
    %3188 = vrot.lane.b32.xlu0 %v3158, 2
    %v3189 = vpop.permute.xlu0 %3188
    %3190 = vrot.lane.b32.xlu0 %v3159, 2
    %v3191 = vpop.permute.xlu0 %3190
    %3192 = vrot.lane.b32.xlu0 %v3160, 2
    %v3193 = vpop.permute.xlu0 %3192
    %3194 = vrot.lane.b32.xlu0 %v3161, 2
    %v3195 = vpop.permute.xlu0 %3194
    %v3196 = vsel %vm1832, %v3193, %v3195
    %v3197 = vsel %vm1832, %v3191, %v3193
    %v3198 = vsel %vm1832, %v3189, %v3191
    %v3199 = vsel %vm1832, %v3195, %v3189
    %v3200 = vmul.f32 %v3199, %v1340
    %v3201 = vmul.f32 %v3198, %v1843
    %v3202 = vmul.f32 %v3197, %v2863
    %v3203 = vmul.f32 %v3196, %v2864
    %3204 = vrot.lane.b32.xlu0 %v3158, 1
    %v3205 = vpop.permute.xlu0 %3204
    %3206 = vrot.lane.b32.xlu0 %v3159, 1
    %v3207 = vpop.permute.xlu0 %3206
    %3208 = vrot.lane.b32.xlu0 %v3160, 1
    %v3209 = vpop.permute.xlu0 %3208
    %3210 = vrot.lane.b32.xlu0 %v3161, 1
    %v3211 = vpop.permute.xlu0 %3210
    %v3212 = vsel %vm1868, %v3209, %v3211
    %v3213 = vsel %vm1868, %v3207, %v3209
    %v3214 = vsel %vm1868, %v3205, %v3207
    %v3215 = vsel %vm1868, %v3211, %v3205
    %v3216 = vmul.f32 %v3215, %v1349
    %v3217 = vmul.f32 %v3214, %v1879
    %v3218 = vmul.f32 %v3213, %v2901
    %v3219 = vmul.f32 %v3212, %v2902
    %3220 = vrot.lane.b32.xlu0 %v3158, 127
    %v3221 = vpop.permute.xlu0 %3220
    %3222 = vrot.lane.b32.xlu0 %v3159, 127
    %v3223 = vpop.permute.xlu0 %3222
    %3224 = vrot.lane.b32.xlu0 %v3160, 127
    %v3225 = vpop.permute.xlu0 %3224
    %3226 = vrot.lane.b32.xlu0 %v3161, 127
    %v3227 = vpop.permute.xlu0 %3226
    %v3228 = vsel %vm1356, %v3225, %v3227
    %v3229 = vsel %vm1356, %v3223, %v3225
    %v3230 = vsel %vm1356, %v3221, %v3223
    %v3231 = vsel %vm1356, %v3227, %v3221
    %v3232 = vmul.f32 %v3230, %v2943
    %v3233 = vmul.f32 %v3229, %v2944
    %v3234 = vmul.f32 %v3228, %v2945
    %v3235 = vmul.f32 %v3231, %v2946
    %3236 = vrot.lane.b32.xlu0 %v3158, 126
    %v3237 = vpop.permute.xlu0 %3236
    %3238 = vrot.lane.b32.xlu0 %v3159, 126
    %v3239 = vpop.permute.xlu0 %3238
    %3240 = vrot.lane.b32.xlu0 %v3160, 126
    %v3241 = vpop.permute.xlu0 %3240
    %3242 = vrot.lane.b32.xlu0 %v3161, 126
    %v3243 = vpop.permute.xlu0 %3242
    %v3244 = vsel %vm1365, %v3241, %v3243
    %v3245 = vsel %vm1365, %v3239, %v3241
    %v3246 = vsel %vm1365, %v3237, %v3239
    %v3247 = vsel %vm1365, %v3243, %v3237
    %v3248 = vmul.f32 %v3246, %v2987
    %v3249 = vmul.f32 %v3245, %v2988
    %v3250 = vmul.f32 %v3244, %v2989
    %v3251 = vmul.f32 %v3247, %v2990
    %3252 = vrot.lane.b32.xlu0 %v3158, 125
    %v3253 = vpop.permute.xlu0 %3252
    %3254 = vrot.lane.b32.xlu0 %v3159, 125
    %v3255 = vpop.permute.xlu0 %3254
    %3256 = vrot.lane.b32.xlu0 %v3160, 125
    %v3257 = vpop.permute.xlu0 %3256
    %3258 = vrot.lane.b32.xlu0 %v3161, 125
    %v3259 = vpop.permute.xlu0 %3258
    %v3260 = vsel %vm1374, %v3257, %v3259
    %v3261 = vsel %vm1374, %v3255, %v3257
    %v3262 = vsel %vm1374, %v3253, %v3255
    %v3263 = vsel %vm1374, %v3259, %v3253
    %vm3264 = vcmp.lt.s32.totalorder %v41, 509
    %vm3265 = vcmp.lt.s32.totalorder %v1512, 509
    %vm3266 = vcmp.lt.s32.totalorder %v2085, 509
    %vm3267 = vcmp.lt.s32.totalorder %v2086, 509
    %v3268 = vsel %vm3264, 1, 0
    %v3269 = vsel %vm3265, 1, 0
    %v3270 = vsel %vm3266, 1, 0
    %v3271 = vsel %vm3267, 1, 0
    %v3272 = vcvt.s32.f32 %v3268
    %v3273 = vcvt.s32.f32 %v3269
    %v3274 = vcvt.s32.f32 %v3270
    %v3275 = vcvt.s32.f32 %v3271
    %v3276 = vmul.f32 %v3262, %v3272
    %v3277 = vmul.f32 %v3261, %v3273
    %v3278 = vmul.f32 %v3260, %v3274
    %v3279 = vmul.f32 %v3263, %v3275
    %v3280 = vld [vmem:[#allocation3 + $0x350] sm:$0xff]
    %v3281 = vld [vmem:[#allocation3 + $0x360] sm:$0xff]
    %v3282 = vld [vmem:[#allocation3 + $0x370] sm:$0xff]
    %v3283 = vld [vmem:[#allocation3 + $0x380] sm:$0xff]
    %v3284 = vld [vmem:[#allocation3 + $0x390] sm:$0xff]
    %v3285 = vld [vmem:[#allocation3 + $0x3a0] sm:$0xff]
    %v3286 = vld [vmem:[#allocation3 + $0x3b0] sm:$0xff]
    %3288 = vset.pattern.permute.xlu0 0
    %3289 = vperm.xlu0 %3288, %v3280
    %v3290 = vpop.permute.xlu0 %3289
    %3293 = vset.pattern.permute.xlu0 0
    %3294 = vperm.xlu0 %3293, %v3281
    %v3295 = vpop.permute.xlu0 %3294
    %3298 = vset.pattern.permute.xlu0 0
    %3299 = vperm.xlu0 %3298, %v3282
    %v3300 = vpop.permute.xlu0 %3299
    %3303 = vset.pattern.permute.xlu0 0
    %3304 = vperm.xlu0 %3303, %v3283
    %v3305 = vpop.permute.xlu0 %3304
    %3308 = vset.pattern.permute.xlu0 0
    %3309 = vperm.xlu0 %3308, %v3284
    %v3310 = vpop.permute.xlu0 %3309
    %3313 = vset.pattern.permute.xlu0 0
    %3314 = vperm.xlu0 %3313, %v3285
    %v3315 = vpop.permute.xlu0 %3314
    %3318 = vset.pattern.permute.xlu0 0
    %3319 = vperm.xlu0 %3318, %v3286
    %v3320 = vpop.permute.xlu0 %3319
    %v3322 = vmul.f32 %v3184, %v3290
    %v3323 = vmul.f32 %v3185, %v3290
    %v3324 = vmul.f32 %v3186, %v3290
    %v3325 = vmul.f32 %v3187, %v3290
    %v3326 = vmul.f32 %v3200, %v3295
    %v3327 = vmul.f32 %v3201, %v3295
    %v3328 = vmul.f32 %v3202, %v3295
    %v3329 = vmul.f32 %v3203, %v3295
    %v3330 = vmul.f32 %v3216, %v3300
    %v3331 = vmul.f32 %v3217, %v3300
    %v3332 = vmul.f32 %v3218, %v3300
    %v3333 = vmul.f32 %v3219, %v3300
    %v3334 = vmul.f32 %v3158, %v3305
    %v3335 = vmul.f32 %v3159, %v3305
    %v3336 = vmul.f32 %v3160, %v3305
    %v3337 = vmul.f32 %v3161, %v3305
    %v3338 = vmul.f32 %v3232, %v3310
    %v3339 = vmul.f32 %v3233, %v3310
    %v3340 = vmul.f32 %v3234, %v3310
    %v3341 = vmul.f32 %v3235, %v3310
    %v3342 = vmul.f32 %v3248, %v3315
    %v3343 = vmul.f32 %v3249, %v3315
    %v3344 = vmul.f32 %v3250, %v3315
    %v3345 = vmul.f32 %v3251, %v3315
    %v3346 = vmul.f32 %v3276, %v3320
    %v3347 = vmul.f32 %v3277, %v3320
    %v3348 = vmul.f32 %v3278, %v3320
    %v3349 = vmul.f32 %v3279, %v3320
    %v3350 = vadd.f32 %v3322, %v3326
    %v3351 = vadd.f32 %v3350, %v3330
    %v3352 = vadd.f32 %v3351, %v3334
    %v3353 = vadd.f32 %v3352, %v3338
    %v3354 = vadd.f32 %v3353, %v3342
    %v3355 = vadd.f32 %v3354, %v3346
    %v3356 = vrot.slane %v3355, 4
    %v3357 = vadd.f32 %v3355, %v3356
    %v3358 = vrot.slane %v3357, 2
    %v3359 = vadd.f32 %v3357, %v3358
    %v3360 = vrot.slane %v3359, 1
    %v3361 = vadd.f32 %v3359, %v3360
    %v3362 = vadd.f32 %v3323, %v3327
    %v3363 = vadd.f32 %v3362, %v3331
    %v3364 = vadd.f32 %v3363, %v3335
    %v3365 = vadd.f32 %v3364, %v3339
    %v3366 = vadd.f32 %v3365, %v3343
    %v3367 = vadd.f32 %v3366, %v3347
    %v3368 = vrot.slane %v3367, 4
    %v3369 = vadd.f32 %v3367, %v3368
    %v3370 = vrot.slane %v3369, 2
    %v3371 = vadd.f32 %v3369, %v3370
    %v3372 = vrot.slane %v3371, 1
    %v3373 = vadd.f32 %v3371, %v3372
    %v3374 = vadd.f32 %v3324, %v3328
    %v3375 = vadd.f32 %v3374, %v3332
    %v3376 = vadd.f32 %v3375, %v3336
    %v3377 = vadd.f32 %v3376, %v3340
    %v3378 = vadd.f32 %v3377, %v3344
    %v3379 = vadd.f32 %v3378, %v3348
    %v3380 = vrot.slane %v3379, 4
    %v3381 = vadd.f32 %v3379, %v3380
    %v3382 = vrot.slane %v3381, 2
    %v3383 = vadd.f32 %v3381, %v3382
    %v3384 = vrot.slane %v3383, 1
    %v3385 = vadd.f32 %v3383, %v3384
    %v3386 = vadd.f32 %v3325, %v3329
    %v3387 = vadd.f32 %v3386, %v3333
    %v3388 = vadd.f32 %v3387, %v3337
    %v3389 = vadd.f32 %v3388, %v3341
    %v3390 = vadd.f32 %v3389, %v3345
    %v3391 = vadd.f32 %v3390, %v3349
    %v3392 = vrot.slane %v3391, 4
    %v3393 = vadd.f32 %v3391, %v3392
    %v3394 = vrot.slane %v3393, 2
    %v3395 = vadd.f32 %v3393, %v3394
    %v3396 = vrot.slane %v3395, 1
    %v3397 = vadd.f32 %v3395, %v3396
    %v3398 = vld [vmem:[#allocation3 + $0x3c0] ss:$0 sm:$0xff]
    %3400 = vset.pattern.permute.xlu0 0
    %3401 = vperm.xlu0 %3400, %v3398
    %v3402 = vpop.permute.xlu0 %3401
    %v3404 = vadd.f32 %v3361, %v3402
    %v3405 = vadd.f32 %v3373, %v3402
    %v3406 = vadd.f32 %v3385, %v3402
    %v3407 = vadd.f32 %v3397, %v3402
    %v3408 = vtanh.pop %v3404
    %v3409 = vtanh.pop %v3405
    %v3410 = vtanh.pop %v3406
    %v3411 = vtanh.pop %v3407
    %v3416 = vcombine.low %v3408, %v3409
    %v3417 = vcombine.low %v3410, %v3411
    %v3419 = vunpack.c.l.s4 1966171168
    %v3420 = vunpack.c.0.s8 %v3419
    %v3421 = vlaneseq
    %v3422 = vshrl.u32 %v3421, 7
    %v3423 = vsub.s32 %v3420, %v3422
    %v3424 = vrot.slane %v3416, %v3423
    %v3426 = vunpack.c.l.s4 1966171168
    %v3427 = vunpack.c.0.s8 %v3426
    %v3428 = vlaneseq
    %v3429 = vshrl.u32 %v3428, 7
    %v3430 = vsub.s32 %v3427, %v3429
    %v3431 = vrot.slane %v3417, %v3430
    %v3432 = vcombine.low %v3424, %v3431
    %v3434 = vunpack.c.l.s4 1966171168
    %v3435 = vunpack.c.0.s8 %v3434
    %v3436 = vlaneseq
    %v3437 = vshrl.u32 %v3436, 7
    %v3438 = vsub.s32 %v3435, %v3437
    %v3439 = vrot.slane %v3432, %v3438
    %v3441 = vlaneseq
    %vm3442 = vcmp.ge.s32.totalorder %v3441, 0
    %vm3443 = vcmp.lt.s32.totalorder %v3441, 512
    %vm3444 = vmand %vm3442, %vm3443
    %3445 = vst.msk [vmem:[#allocation6] sm:$0xf] %vm3444, %v3439
    // Predicated region
    $region22: #{vits_forward.1} parent=1 // pred_check
      _
    $region23: #{vits_forward.1} parent=1 // pred_check_branch
      %3447 = sbr.rel (0) target = $region25
    $region24: #{vits_forward.1} parent=1 // pred_region
      %s3449 = ssub.s32 64, 64
      %3450 = vsyncadd [#allocation5], %s3449
      %s3452 = sshll.u32 [#allocation6], 4
      %s3453 = int_to_ptr.vmem [resolvable:$true] %s3452
      %3455 = dma.vmem_to_hbm [thread:$0]  %s3453, 64, %s4, [#allocation5]
    $region25: #{vits_forward.1} parent=1 // pred_fallthru
      _
    // Predicated region
    $region26: #{vits_forward.1} parent=1 // pred_check
      _
    $region27: #{vits_forward.1} parent=1 // pred_check_branch
      %3457 = sbr.rel (0) target = $region29
    $region28: #{vits_forward.1} parent=1 // pred_region
      %3458 = dma.done [#allocation5], 64
    $region29: #{vits_forward.1} parent=1 // pred_fallthru
      _
    %3459 = vsyncpa [#allocation4], 1
    %3460 = vsyncpa [#allocation5], 1

</llo_original>
